<compile_context>
chip_gen: v7x
topology: tpu7x:2x2x1
jax: 0.10.0
libtpu: 0.0.40
codegen_flags: <defaults>
</compile_context>

<pallas_src>
import jax
import jax.numpy as jnp
from jax.experimental import pallas as pl
from jax.experimental.pallas import tpu as pltpu


def _fold_off(d, half):
    """Offset of padded-coordinate delta `d` along a phase-major folded axis."""
    return (d % 2) * half + d // 2


def _make_initial_block_kernel(hp, wp, p, q, cin, cmid, cout):
    """Fused pad->conv1->BN->ReLU->pad->conv2(s2)->BN->ReLU for one batch image.

    Both padded spatial axes are phase-major folded (even coords first, then odd),
    so every 3x3 tap -- stride 1 and stride 2 -- is a unit-stride (p, q, C) slice.
    """
    hh, wh = hp // 2, wp // 2
    kh = kw = 3

    def kernel(x_ref, w1_ref, b1_ref, w2_ref, b2_ref, o_ref, act_ref):
        # act_ref: (hp, wp, cmid) f32 VMEM scratch holding the *padded* conv1
        # activation in folded coordinates. Zero it so the halo is the zero pad.
        act_ref[...] = jnp.zeros_like(act_ref)

        bias1 = b1_ref[...]                      # (1, cmid) f32, loaded once
        bias2 = b2_ref[...]                      # (1, cout) f32, loaded once
        w1 = w1_ref[...]                         # (9*cin,  cmid) bf16
        w2 = w2_ref[...]                         # (9*cmid, cout) bf16

        # ---- conv1 + BN1 + ReLU: one K-fused matmul per output-parity class ----
        for pa in range(2):                      # output-row parity
            for pb in range(2):                  # output-col parity
                taps = []
                for ki in range(kh):
                    for kj in range(kw):
                        ro = _fold_off(pa + ki, hh)
                        co = _fold_off(pb + kj, wh)
                        taps.append(x_ref[0, pl.ds(ro, p), pl.ds(co, q), :])
                patch = jnp.concatenate(taps, axis=-1)           # (p, q, 9*cin) bf16
                patch = patch.reshape(p * q, kh * kw * cin)      # tile-local im2col
                y = jnp.dot(patch, w1, preferred_element_type=jnp.float32)
                y = jnp.maximum(y + bias1, 0.0)                  # (p*q, cmid) f32
                # conv1 pixel (2i+pa, 2j+pb) -> padded act coord (2i+pa+1, 2j+pb+1)
                act_ref[pl.ds(_fold_off(pa + 1, hh), p),
                        pl.ds(_fold_off(pb + 1, wh), q), :] = (
                            y.reshape(p, q, cmid).astype(act_ref.dtype))

        # ---- conv2 (stride 2) + BN2 + ReLU: one K-fused matmul ------------------
        taps = []
        for ki in range(kh):
            for kj in range(kw):
                taps.append(act_ref[pl.ds(_fold_off(ki, hh), p),
                                    pl.ds(_fold_off(kj, wh), q), :])
        patch = jnp.concatenate(taps, axis=-1)                   # (p, q, 9*cmid)
        patch = patch.reshape(p * q, kh * kw * cmid).astype(jnp.bfloat16)
        y = jnp.dot(patch, w2, preferred_element_type=jnp.float32)
        y = jnp.maximum(y + bias2, 0.0)                          # (p*q, cout) f32
        o_ref[0, :, :, :] = y.reshape(p, q, cout).astype(o_ref.dtype)

    return kernel


@jax.jit
def initial_block_forward(x_nchw, w1, g1, b1, m1, v1, w2, g2, b2, m2, v2):
    eps = 1e-5
    n, cin, h, w = x_nchw.shape
    cout = w1.shape[0]
    assert h % 2 == 0 and w % 2 == 0, "even spatial size required"

    # NCHW -> NHWC (fused into the jitted graph, not a standalone dispatch)
    x = jnp.transpose(x_nchw, (0, 2, 3, 1))

    # TODO(synk): SphereSeg's padding.get_padding(x, level) fills the 1-pixel halo from
    # spherical cube-face neighbours selected by `level`; those neighbour tables are not
    # part of the provided snippet, so a zero halo (same H,W -> H+2,W+2 contract) is used.
    x = jnp.pad(x, ((0, 0), (1, 1), (1, 1), (0, 0)))
    hp, wp = h + 2, w + 2

    # Phase-major fold of both padded spatial axes (even coords first, then odd):
    # makes every stride-1 and stride-2 tap in the kernel a unit-stride slice.
    x = jnp.concatenate([x[:, 0::2], x[:, 1::2]], axis=1)
    x = jnp.concatenate([x[:, :, 0::2], x[:, :, 1::2]], axis=2)
    x = x.astype(jnp.bfloat16)

    def fold_bn(wt, g, bta, mu, var):
        # inference BN folded into the conv: y = conv(x, wt*s) + (bta - mu*s)
        s = g / jnp.sqrt(var + eps)
        bias = (bta - mu * s).reshape(1, -1).astype(jnp.float32)
        wm = (wt * s[:, None, None, None]).transpose(2, 3, 1, 0)      # (3,3,Cin,Cout)
        wm = wm.reshape(-1, wt.shape[0]).astype(jnp.bfloat16)         # (9*Cin, Cout)
        return wm, bias

    w1m, b1v = fold_bn(w1, g1, b1, m1, v1)
    w2m, b2v = fold_bn(w2, g2, b2, m2, v2)

    p, q = h // 2, w // 2            # per-parity-class size == conv2 output size
    kernel = _make_initial_block_kernel(hp, wp, p, q, cin, cout, cout)

    out = pl.pallas_call(
        kernel,
        out_shape=jax.ShapeDtypeStruct((n, p, q, cout), jnp.float32),
        grid=(n,),
        in_specs=[
            # whole folded image per batch (~2.6 KB at 18x18x4 bf16); band the rows here
            # if face sizes grow to >=512^2 (v7x 64 MiB VMEM budget).
            pl.BlockSpec((1, hp, wp, cin), lambda bi: (bi, 0, 0, 0)),
            pl.BlockSpec((9 * cin, cout), lambda bi: (0, 0)),
            pl.BlockSpec((1, cout), lambda bi: (0, 0)),
            pl.BlockSpec((9 * cout, cout), lambda bi: (0, 0)),
            pl.BlockSpec((1, cout), lambda bi: (0, 0)),
        ],
        out_specs=pl.BlockSpec((1, p, q, cout), lambda bi: (bi, 0, 0, 0)),
        scratch_shapes=[pltpu.VMEM((hp, wp, cout), jnp.float32)],
        compiler_params=pltpu.CompilerParams(dimension_semantics=("parallel",)),
    )(x, w1m, b1v, w2m, b2v)

    return jnp.transpose(out, (0, 3, 1, 2))      # NHWC -> NCHW


def _reference_forward(x_nchw, w1, g1, b1, m1, v1, w2, g2, b2, m2, v2, eps=1e-5):
    """Pure-JAX reference mirroring the kernel numerics (bf16 operands, f32 accumulation)."""
    def conv_bn_relu(x_nhwc, wt, g, bta, mu, var, stride):
        s = g / jnp.sqrt(var + eps)
        bias = bta - mu * s
        wf = (wt * s[:, None, None, None]).astype(jnp.bfloat16)       # (O,I,3,3)
        xp = jnp.pad(x_nhwc, ((0, 0), (1, 1), (1, 1), (0, 0))).astype(jnp.bfloat16)
        y = jax.lax.conv_general_dilated(
            xp, jnp.transpose(wf, (2, 3, 1, 0)),                      # HWIO
            window_strides=(stride, stride), padding="VALID",
            dimension_numbers=("NHWC", "HWIO", "NHWC"),
            preferred_element_type=jnp.float32)
        return jnp.maximum(y + bias, 0.0)

    x = jnp.transpose(x_nchw, (0, 2, 3, 1))
    a1 = conv_bn_relu(x, w1, g1, b1, m1, v1, 1)
    a2 = conv_bn_relu(a1, w2, g2, b2, m2, v2, 2)
    return jnp.transpose(a2, (0, 3, 1, 2))


class InitialBlockPallas:
    """PHDConv2d(3x3) -> BN -> ReLU, then PHDConv2d(3x3, stride 2) -> BN -> ReLU."""

    def __init__(self, in_channels, out_channels, key):
        k1, k2 = jax.random.split(key)
        # deterministic synthetic conv weights (PyTorch layout (Cout, Cin, 3, 3))
        self.w1 = jax.random.normal(
            k1, (out_channels, in_channels, 3, 3), jnp.float32
        ) * (1.0 / jnp.sqrt(in_channels * 9.0))
        self.w2 = jax.random.normal(
            k2, (out_channels, out_channels, 3, 3), jnp.float32
        ) * (1.0 / jnp.sqrt(out_channels * 9.0))
        # nn.BatchNorm2d default init: weight=1, bias=0, running_mean=0, running_var=1
        C = out_channels
        self.g1 = jnp.ones((C,), jnp.float32)
        self.b1 = jnp.zeros((C,), jnp.float32)
        self.m1 = jnp.zeros((C,), jnp.float32)
        self.v1 = jnp.ones((C,), jnp.float32)
        self.g2 = jnp.ones((C,), jnp.float32)
        self.b2 = jnp.zeros((C,), jnp.float32)
        self.m2 = jnp.zeros((C,), jnp.float32)
        self.v2 = jnp.ones((C,), jnp.float32)

    def __call__(self, x_nchw, level):
        del level   # TODO(synk): spherical-padding `level` (zero halo used instead)
        return initial_block_forward(
            x_nchw, self.w1, self.g1, self.b1, self.m1, self.v1,
            self.w2, self.g2, self.b2, self.m2, self.v2)


if __name__ == "__main__":
    key = jax.random.PRNGKey(0)
    k_param, k_x = jax.random.split(key)

    batch, in_channels, out_channels, spatial = 2, 4, 8, 16
    x = jax.random.normal(k_x, (batch, in_channels, spatial, spatial), jnp.float32)
    level = 0

    block = InitialBlockPallas(in_channels, out_channels, k_param)
    y = jax.block_until_ready(block(x, level))

    # conv1 keeps 16x16; conv2 (stride 2 on padded 18x18) gives 8x8
    assert y.shape == (batch, out_channels, spatial // 2, spatial // 2), y.shape
    assert y.dtype == jnp.float32
    assert bool(jnp.all(y >= 0.0))                        # ReLU output

    y_ref = _reference_forward(x, block.w1, block.g1, block.b1, block.m1, block.v1,
                               block.w2, block.g2, block.b2, block.m2, block.v2)
    err = float(jnp.max(jnp.abs(y - y_ref)))
    assert err < 1e-2, f"max |pallas - reference| = {err}"

    print("KERNEL_OK")
</pallas_src>

<mosaic_0001>
module attributes {stable_mosaic.version = 11 : i64} {
  func.func @kernel(%arg0: i32, %arg1: memref<1x18x18x4xbf16, #tpu.memory_space<vmem>>, %arg2: memref<36x8xbf16, #tpu.memory_space<vmem>>, %arg3: memref<1x8xf32, #tpu.memory_space<vmem>>, %arg4: memref<72x8xbf16, #tpu.memory_space<vmem>>, %arg5: memref<1x8xf32, #tpu.memory_space<vmem>>, %arg6: memref<1x8x8x8xf32, #tpu.memory_space<vmem>>, %arg7: memref<18x18x8xf32, #tpu.memory_space<vmem>>) attributes {dimension_semantics = [#tpu.dimension_semantics<parallel>], iteration_bounds = array<i64: 2>, scalar_prefetch = 0 : i64, scratch_operands = 1 : i64, tpu.core_type = #tpu.core_type<tc>, window_params = [{transform_indices = @transform_0, window_bounds = array<i64: 1, 18, 18, 4>}, {pipeline_mode = #tpu.pipeline_mode<synchronous>, transform_indices = @transform_1, window_bounds = array<i64: 36, 8>}, {pipeline_mode = #tpu.pipeline_mode<synchronous>, transform_indices = @transform_2, window_bounds = array<i64: 1, 8>}, {pipeline_mode = #tpu.pipeline_mode<synchronous>, transform_indices = @transform_3, window_bounds = array<i64: 72, 8>}, {pipeline_mode = #tpu.pipeline_mode<synchronous>, transform_indices = @transform_4, window_bounds = array<i64: 1, 8>}, {transform_indices = @transform_5, window_bounds = array<i64: 1, 8, 8, 8>}]} {
    %cst = arith.constant 0.000000e+00 : f32
    %0 = vector.broadcast %cst : f32 to vector<18x18x8xf32>
    %c0 = arith.constant 0 : index
    %c0_0 = arith.constant 0 : index
    %c0_1 = arith.constant 0 : index
    %1 = vector.load %arg7[%c0, %c0_0, %c0_1] : memref<18x18x8xf32, #tpu.memory_space<vmem>>, vector<18x18x8xf32>
    tpu.vector_store %arg7[%c0, %c0_0, %c0_1], %0 {strides = array<i32>} : memref<18x18x8xf32, #tpu.memory_space<vmem>>, vector<18x18x8xf32>,
    %c0_2 = arith.constant 0 : index
    %c0_3 = arith.constant 0 : index
    %2 = vector.load %arg3[%c0_2, %c0_3] : memref<1x8xf32, #tpu.memory_space<vmem>>, vector<1x8xf32>
    %c0_4 = arith.constant 0 : index
    %c0_5 = arith.constant 0 : index
    %3 = vector.load %arg5[%c0_4, %c0_5] : memref<1x8xf32, #tpu.memory_space<vmem>>, vector<1x8xf32>
    %c0_6 = arith.constant 0 : index
    %c0_7 = arith.constant 0 : index
    %4 = vector.load %arg2[%c0_6, %c0_7] : memref<36x8xbf16, #tpu.memory_space<vmem>>, vector<36x8xbf16>
    %c0_8 = arith.constant 0 : index
    %c0_9 = arith.constant 0 : index
    %5 = vector.load %arg4[%c0_8, %c0_9] : memref<72x8xbf16, #tpu.memory_space<vmem>>, vector<72x8xbf16>
    %c0_10 = arith.constant 0 : index
    %c0_11 = arith.constant 0 : index
    %c0_12 = arith.constant 0 : index
    %c0_13 = arith.constant 0 : index
    %6 = vector.load %arg1[%c0_10, %c0_11, %c0_12, %c0_13] : memref<1x18x18x4xbf16, #tpu.memory_space<vmem>>, vector<1x8x8x4xbf16>
    %7 = vector.shape_cast %6 : vector<1x8x8x4xbf16> to vector<8x8x4xbf16>
    %c0_14 = arith.constant 0 : index
    %c0_15 = arith.constant 0 : index
    %c9 = arith.constant 9 : index
    %c0_16 = arith.constant 0 : index
    %8 = vector.load %arg1[%c0_14, %c0_15, %c9, %c0_16] : memref<1x18x18x4xbf16, #tpu.memory_space<vmem>>, vector<1x8x8x4xbf16>
    %9 = vector.shape_cast %8 : vector<1x8x8x4xbf16> to vector<8x8x4xbf16>
    %c0_17 = arith.constant 0 : index
    %c0_18 = arith.constant 0 : index
    %c1 = arith.constant 1 : index
    %c0_19 = arith.constant 0 : index
    %10 = vector.load %arg1[%c0_17, %c0_18, %c1, %c0_19] : memref<1x18x18x4xbf16, #tpu.memory_space<vmem>>, vector<1x8x8x4xbf16>
    %11 = vector.shape_cast %10 : vector<1x8x8x4xbf16> to vector<8x8x4xbf16>
    %c0_20 = arith.constant 0 : index
    %c9_21 = arith.constant 9 : index
    %c0_22 = arith.constant 0 : index
    %c0_23 = arith.constant 0 : index
    %12 = vector.load %arg1[%c0_20, %c9_21, %c0_22, %c0_23] : memref<1x18x18x4xbf16, #tpu.memory_space<vmem>>, vector<1x8x8x4xbf16>
    %13 = vector.shape_cast %12 : vector<1x8x8x4xbf16> to vector<8x8x4xbf16>
    %c0_24 = arith.constant 0 : index
    %c9_25 = arith.constant 9 : index
    %c9_26 = arith.constant 9 : index
    %c0_27 = arith.constant 0 : index
    %14 = vector.load %arg1[%c0_24, %c9_25, %c9_26, %c0_27] : memref<1x18x18x4xbf16, #tpu.memory_space<vmem>>, vector<1x8x8x4xbf16>
    %15 = vector.shape_cast %14 : vector<1x8x8x4xbf16> to vector<8x8x4xbf16>
    %c0_28 = arith.constant 0 : index
    %c9_29 = arith.constant 9 : index
    %c1_30 = arith.constant 1 : index
    %c0_31 = arith.constant 0 : index
    %16 = vector.load %arg1[%c0_28, %c9_29, %c1_30, %c0_31] : memref<1x18x18x4xbf16, #tpu.memory_space<vmem>>, vector<1x8x8x4xbf16>
    %17 = vector.shape_cast %16 : vector<1x8x8x4xbf16> to vector<8x8x4xbf16>
    %c0_32 = arith.constant 0 : index
    %c1_33 = arith.constant 1 : index
    %c0_34 = arith.constant 0 : index
    %c0_35 = arith.constant 0 : index
    %18 = vector.load %arg1[%c0_32, %c1_33, %c0_34, %c0_35] : memref<1x18x18x4xbf16, #tpu.memory_space<vmem>>, vector<1x8x8x4xbf16>
    %19 = vector.shape_cast %18 : vector<1x8x8x4xbf16> to vector<8x8x4xbf16>
    %c0_36 = arith.constant 0 : index
    %c1_37 = arith.constant 1 : index
    %c9_38 = arith.constant 9 : index
    %c0_39 = arith.constant 0 : index
    %20 = vector.load %arg1[%c0_36, %c1_37, %c9_38, %c0_39] : memref<1x18x18x4xbf16, #tpu.memory_space<vmem>>, vector<1x8x8x4xbf16>
    %21 = vector.shape_cast %20 : vector<1x8x8x4xbf16> to vector<8x8x4xbf16>
    %c0_40 = arith.constant 0 : index
    %c1_41 = arith.constant 1 : index
    %c1_42 = arith.constant 1 : index
    %c0_43 = arith.constant 0 : index
    %22 = vector.load %arg1[%c0_40, %c1_41, %c1_42, %c0_43] : memref<1x18x18x4xbf16, #tpu.memory_space<vmem>>, vector<1x8x8x4xbf16>
    %23 = vector.shape_cast %22 : vector<1x8x8x4xbf16> to vector<8x8x4xbf16>
    %24 = tpu.concatenate %7, %9, %11, %13, %15, %17, %19, %21, %23 in 2 : vector<8x8x4xbf16>, vector<8x8x4xbf16>, vector<8x8x4xbf16>, vector<8x8x4xbf16>, vector<8x8x4xbf16>, vector<8x8x4xbf16>, vector<8x8x4xbf16>, vector<8x8x4xbf16>, vector<8x8x4xbf16> -> vector<8x8x36xbf16>
    %25 = vector.shape_cast %24 : vector<8x8x36xbf16> to vector<64x36xbf16>
    %cst_44 = arith.constant dense<0.000000e+00> : vector<64x8xf32>
    %26 = tpu.matmul %25, %4, %cst_44 {dimension_numbers = #tpu.dot_dimension_numbers<[1], [0], [0], [1], [0, 0, 1, 1], [], []>} : vector<64x36xbf16>, vector<36x8xbf16>, vector<64x8xf32> -> vector<64x8xf32>
    %27 = vector.broadcast %2 : vector<1x8xf32> to vector<64x8xf32>
    %28 = arith.addf %26, %27 : vector<64x8xf32>
    %cst_45 = arith.constant 0.000000e+00 : f32
    %29 = vector.broadcast %cst_45 : f32 to vector<64x8xf32>
    %30 = arith.maximumf %28, %29 : vector<64x8xf32>
    %31 = vector.shape_cast %30 : vector<64x8xf32> to vector<8x8x8xf32>
    %c9_46 = arith.constant 9 : index
    %c9_47 = arith.constant 9 : index
    %c0_48 = arith.constant 0 : index
    %32 = vector.load %arg7[%c9_46, %c9_47, %c0_48] : memref<18x18x8xf32, #tpu.memory_space<vmem>>, vector<8x8x8xf32>
    tpu.vector_store %arg7[%c9_46, %c9_47, %c0_48], %31 {strides = array<i32>} : memref<18x18x8xf32, #tpu.memory_space<vmem>>, vector<8x8x8xf32>,
    %c0_49 = arith.constant 0 : index
    %c0_50 = arith.constant 0 : index
    %c9_51 = arith.constant 9 : index
    %c0_52 = arith.constant 0 : index
    %33 = vector.load %arg1[%c0_49, %c0_50, %c9_51, %c0_52] : memref<1x18x18x4xbf16, #tpu.memory_space<vmem>>, vector<1x8x8x4xbf16>
    %34 = vector.shape_cast %33 : vector<1x8x8x4xbf16> to vector<8x8x4xbf16>
    %c0_53 = arith.constant 0 : index
    %c0_54 = arith.constant 0 : index
    %c1_55 = arith.constant 1 : index
    %c0_56 = arith.constant 0 : index
    %35 = vector.load %arg1[%c0_53, %c0_54, %c1_55, %c0_56] : memref<1x18x18x4xbf16, #tpu.memory_space<vmem>>, vector<1x8x8x4xbf16>
    %36 = vector.shape_cast %35 : vector<1x8x8x4xbf16> to vector<8x8x4xbf16>
    %c0_57 = arith.constant 0 : index
    %c0_58 = arith.constant 0 : index
    %c10 = arith.constant 10 : index
    %c0_59 = arith.constant 0 : index
    %37 = vector.load %arg1[%c0_57, %c0_58, %c10, %c0_59] : memref<1x18x18x4xbf16, #tpu.memory_space<vmem>>, vector<1x8x8x4xbf16>
    %38 = vector.shape_cast %37 : vector<1x8x8x4xbf16> to vector<8x8x4xbf16>
    %c0_60 = arith.constant 0 : index
    %c9_61 = arith.constant 9 : index
    %c9_62 = arith.constant 9 : index
    %c0_63 = arith.constant 0 : index
    %39 = vector.load %arg1[%c0_60, %c9_61, %c9_62, %c0_63] : memref<1x18x18x4xbf16, #tpu.memory_space<vmem>>, vector<1x8x8x4xbf16>
    %40 = vector.shape_cast %39 : vector<1x8x8x4xbf16> to vector<8x8x4xbf16>
    %c0_64 = arith.constant 0 : index
    %c9_65 = arith.constant 9 : index
    %c1_66 = arith.constant 1 : index
    %c0_67 = arith.constant 0 : index
    %41 = vector.load %arg1[%c0_64, %c9_65, %c1_66, %c0_67] : memref<1x18x18x4xbf16, #tpu.memory_space<vmem>>, vector<1x8x8x4xbf16>
    %42 = vector.shape_cast %41 : vector<1x8x8x4xbf16> to vector<8x8x4xbf16>
    %c0_68 = arith.constant 0 : index
    %c9_69 = arith.constant 9 : index
    %c10_70 = arith.constant 10 : index
    %c0_71 = arith.constant 0 : index
    %43 = vector.load %arg1[%c0_68, %c9_69, %c10_70, %c0_71] : memref<1x18x18x4xbf16, #tpu.memory_space<vmem>>, vector<1x8x8x4xbf16>
    %44 = vector.shape_cast %43 : vector<1x8x8x4xbf16> to vector<8x8x4xbf16>
    %c0_72 = arith.constant 0 : index
    %c1_73 = arith.constant 1 : index
    %c9_74 = arith.constant 9 : index
    %c0_75 = arith.constant 0 : index
    %45 = vector.load %arg1[%c0_72, %c1_73, %c9_74, %c0_75] : memref<1x18x18x4xbf16, #tpu.memory_space<vmem>>, vector<1x8x8x4xbf16>
    %46 = vector.shape_cast %45 : vector<1x8x8x4xbf16> to vector<8x8x4xbf16>
    %c0_76 = arith.constant 0 : index
    %c1_77 = arith.constant 1 : index
    %c1_78 = arith.constant 1 : index
    %c0_79 = arith.constant 0 : index
    %47 = vector.load %arg1[%c0_76, %c1_77, %c1_78, %c0_79] : memref<1x18x18x4xbf16, #tpu.memory_space<vmem>>, vector<1x8x8x4xbf16>
    %48 = vector.shape_cast %47 : vector<1x8x8x4xbf16> to vector<8x8x4xbf16>
    %c0_80 = arith.constant 0 : index
    %c1_81 = arith.constant 1 : index
    %c10_82 = arith.constant 10 : index
    %c0_83 = arith.constant 0 : index
    %49 = vector.load %arg1[%c0_80, %c1_81, %c10_82, %c0_83] : memref<1x18x18x4xbf16, #tpu.memory_space<vmem>>, vector<1x8x8x4xbf16>
    %50 = vector.shape_cast %49 : vector<1x8x8x4xbf16> to vector<8x8x4xbf16>
    %51 = tpu.concatenate %34, %36, %38, %40, %42, %44, %46, %48, %50 in 2 : vector<8x8x4xbf16>, vector<8x8x4xbf16>, vector<8x8x4xbf16>, vector<8x8x4xbf16>, vector<8x8x4xbf16>, vector<8x8x4xbf16>, vector<8x8x4xbf16>, vector<8x8x4xbf16>, vector<8x8x4xbf16> -> vector<8x8x36xbf16>
    %52 = vector.shape_cast %51 : vector<8x8x36xbf16> to vector<64x36xbf16>
    %cst_84 = arith.constant dense<0.000000e+00> : vector<64x8xf32>
    %53 = tpu.matmul %52, %4, %cst_84 {dimension_numbers = #tpu.dot_dimension_numbers<[1], [0], [0], [1], [0, 0, 1, 1], [], []>} : vector<64x36xbf16>, vector<36x8xbf16>, vector<64x8xf32> -> vector<64x8xf32>
    %54 = vector.broadcast %2 : vector<1x8xf32> to vector<64x8xf32>
    %55 = arith.addf %53, %54 : vector<64x8xf32>
    %cst_85 = arith.constant 0.000000e+00 : f32
    %56 = vector.broadcast %cst_85 : f32 to vector<64x8xf32>
    %57 = arith.maximumf %55, %56 : vector<64x8xf32>
    %58 = vector.shape_cast %57 : vector<64x8xf32> to vector<8x8x8xf32>
    %c9_86 = arith.constant 9 : index
    %c1_87 = arith.constant 1 : index
    %c0_88 = arith.constant 0 : index
    %59 = vector.load %arg7[%c9_86, %c1_87, %c0_88] : memref<18x18x8xf32, #tpu.memory_space<vmem>>, vector<8x8x8xf32>
    tpu.vector_store %arg7[%c9_86, %c1_87, %c0_88], %58 {strides = array<i32>} : memref<18x18x8xf32, #tpu.memory_space<vmem>>, vector<8x8x8xf32>,
    %c0_89 = arith.constant 0 : index
    %c9_90 = arith.constant 9 : index
    %c0_91 = arith.constant 0 : index
    %c0_92 = arith.constant 0 : index
    %60 = vector.load %arg1[%c0_89, %c9_90, %c0_91, %c0_92] : memref<1x18x18x4xbf16, #tpu.memory_space<vmem>>, vector<1x8x8x4xbf16>
    %61 = vector.shape_cast %60 : vector<1x8x8x4xbf16> to vector<8x8x4xbf16>
    %c0_93 = arith.constant 0 : index
    %c9_94 = arith.constant 9 : index
    %c9_95 = arith.constant 9 : index
    %c0_96 = arith.constant 0 : index
    %62 = vector.load %arg1[%c0_93, %c9_94, %c9_95, %c0_96] : memref<1x18x18x4xbf16, #tpu.memory_space<vmem>>, vector<1x8x8x4xbf16>
    %63 = vector.shape_cast %62 : vector<1x8x8x4xbf16> to vector<8x8x4xbf16>
    %c0_97 = arith.constant 0 : index
    %c9_98 = arith.constant 9 : index
    %c1_99 = arith.constant 1 : index
    %c0_100 = arith.constant 0 : index
    %64 = vector.load %arg1[%c0_97, %c9_98, %c1_99, %c0_100] : memref<1x18x18x4xbf16, #tpu.memory_space<vmem>>, vector<1x8x8x4xbf16>
    %65 = vector.shape_cast %64 : vector<1x8x8x4xbf16> to vector<8x8x4xbf16>
    %c0_101 = arith.constant 0 : index
    %c1_102 = arith.constant 1 : index
    %c0_103 = arith.constant 0 : index
    %c0_104 = arith.constant 0 : index
    %66 = vector.load %arg1[%c0_101, %c1_102, %c0_103, %c0_104] : memref<1x18x18x4xbf16, #tpu.memory_space<vmem>>, vector<1x8x8x4xbf16>
    %67 = vector.shape_cast %66 : vector<1x8x8x4xbf16> to vector<8x8x4xbf16>
    %c0_105 = arith.constant 0 : index
    %c1_106 = arith.constant 1 : index
    %c9_107 = arith.constant 9 : index
    %c0_108 = arith.constant 0 : index
    %68 = vector.load %arg1[%c0_105, %c1_106, %c9_107, %c0_108] : memref<1x18x18x4xbf16, #tpu.memory_space<vmem>>, vector<1x8x8x4xbf16>
    %69 = vector.shape_cast %68 : vector<1x8x8x4xbf16> to vector<8x8x4xbf16>
    %c0_109 = arith.constant 0 : index
    %c1_110 = arith.constant 1 : index
    %c1_111 = arith.constant 1 : index
    %c0_112 = arith.constant 0 : index
    %70 = vector.load %arg1[%c0_109, %c1_110, %c1_111, %c0_112] : memref<1x18x18x4xbf16, #tpu.memory_space<vmem>>, vector<1x8x8x4xbf16>
    %71 = vector.shape_cast %70 : vector<1x8x8x4xbf16> to vector<8x8x4xbf16>
    %c0_113 = arith.constant 0 : index
    %c10_114 = arith.constant 10 : index
    %c0_115 = arith.constant 0 : index
    %c0_116 = arith.constant 0 : index
    %72 = vector.load %arg1[%c0_113, %c10_114, %c0_115, %c0_116] : memref<1x18x18x4xbf16, #tpu.memory_space<vmem>>, vector<1x8x8x4xbf16>
    %73 = vector.shape_cast %72 : vector<1x8x8x4xbf16> to vector<8x8x4xbf16>
    %c0_117 = arith.constant 0 : index
    %c10_118 = arith.constant 10 : index
    %c9_119 = arith.constant 9 : index
    %c0_120 = arith.constant 0 : index
    %74 = vector.load %arg1[%c0_117, %c10_118, %c9_119, %c0_120] : memref<1x18x18x4xbf16, #tpu.memory_space<vmem>>, vector<1x8x8x4xbf16>
    %75 = vector.shape_cast %74 : vector<1x8x8x4xbf16> to vector<8x8x4xbf16>
    %c0_121 = arith.constant 0 : index
    %c10_122 = arith.constant 10 : index
    %c1_123 = arith.constant 1 : index
    %c0_124 = arith.constant 0 : index
    %76 = vector.load %arg1[%c0_121, %c10_122, %c1_123, %c0_124] : memref<1x18x18x4xbf16, #tpu.memory_space<vmem>>, vector<1x8x8x4xbf16>
    %77 = vector.shape_cast %76 : vector<1x8x8x4xbf16> to vector<8x8x4xbf16>
    %78 = tpu.concatenate %61, %63, %65, %67, %69, %71, %73, %75, %77 in 2 : vector<8x8x4xbf16>, vector<8x8x4xbf16>, vector<8x8x4xbf16>, vector<8x8x4xbf16>, vector<8x8x4xbf16>, vector<8x8x4xbf16>, vector<8x8x4xbf16>, vector<8x8x4xbf16>, vector<8x8x4xbf16> -> vector<8x8x36xbf16>
    %79 = vector.shape_cast %78 : vector<8x8x36xbf16> to vector<64x36xbf16>
    %cst_125 = arith.constant dense<0.000000e+00> : vector<64x8xf32>
    %80 = tpu.matmul %79, %4, %cst_125 {dimension_numbers = #tpu.dot_dimension_numbers<[1], [0], [0], [1], [0, 0, 1, 1], [], []>} : vector<64x36xbf16>, vector<36x8xbf16>, vector<64x8xf32> -> vector<64x8xf32>
    %81 = vector.broadcast %2 : vector<1x8xf32> to vector<64x8xf32>
    %82 = arith.addf %80, %81 : vector<64x8xf32>
    %cst_126 = arith.constant 0.000000e+00 : f32
    %83 = vector.broadcast %cst_126 : f32 to vector<64x8xf32>
    %84 = arith.maximumf %82, %83 : vector<64x8xf32>
    %85 = vector.shape_cast %84 : vector<64x8xf32> to vector<8x8x8xf32>
    %c1_127 = arith.constant 1 : index
    %c9_128 = arith.constant 9 : index
    %c0_129 = arith.constant 0 : index
    %86 = vector.load %arg7[%c1_127, %c9_128, %c0_129] : memref<18x18x8xf32, #tpu.memory_space<vmem>>, vector<8x8x8xf32>
    tpu.vector_store %arg7[%c1_127, %c9_128, %c0_129], %85 {strides = array<i32>} : memref<18x18x8xf32, #tpu.memory_space<vmem>>, vector<8x8x8xf32>,
    %c0_130 = arith.constant 0 : index
    %c9_131 = arith.constant 9 : index
    %c9_132 = arith.constant 9 : index
    %c0_133 = arith.constant 0 : index
    %87 = vector.load %arg1[%c0_130, %c9_131, %c9_132, %c0_133] : memref<1x18x18x4xbf16, #tpu.memory_space<vmem>>, vector<1x8x8x4xbf16>
    %88 = vector.shape_cast %87 : vector<1x8x8x4xbf16> to vector<8x8x4xbf16>
    %c0_134 = arith.constant 0 : index
    %c9_135 = arith.constant 9 : index
    %c1_136 = arith.constant 1 : index
    %c0_137 = arith.constant 0 : index
    %89 = vector.load %arg1[%c0_134, %c9_135, %c1_136, %c0_137] : memref<1x18x18x4xbf16, #tpu.memory_space<vmem>>, vector<1x8x8x4xbf16>
    %90 = vector.shape_cast %89 : vector<1x8x8x4xbf16> to vector<8x8x4xbf16>
    %c0_138 = arith.constant 0 : index
    %c9_139 = arith.constant 9 : index
    %c10_140 = arith.constant 10 : index
    %c0_141 = arith.constant 0 : index
    %91 = vector.load %arg1[%c0_138, %c9_139, %c10_140, %c0_141] : memref<1x18x18x4xbf16, #tpu.memory_space<vmem>>, vector<1x8x8x4xbf16>
    %92 = vector.shape_cast %91 : vector<1x8x8x4xbf16> to vector<8x8x4xbf16>
    %c0_142 = arith.constant 0 : index
    %c1_143 = arith.constant 1 : index
    %c9_144 = arith.constant 9 : index
    %c0_145 = arith.constant 0 : index
    %93 = vector.load %arg1[%c0_142, %c1_143, %c9_144, %c0_145] : memref<1x18x18x4xbf16, #tpu.memory_space<vmem>>, vector<1x8x8x4xbf16>
    %94 = vector.shape_cast %93 : vector<1x8x8x4xbf16> to vector<8x8x4xbf16>
    %c0_146 = arith.constant 0 : index
    %c1_147 = arith.constant 1 : index
    %c1_148 = arith.constant 1 : index
    %c0_149 = arith.constant 0 : index
    %95 = vector.load %arg1[%c0_146, %c1_147, %c1_148, %c0_149] : memref<1x18x18x4xbf16, #tpu.memory_space<vmem>>, vector<1x8x8x4xbf16>
    %96 = vector.shape_cast %95 : vector<1x8x8x4xbf16> to vector<8x8x4xbf16>
    %c0_150 = arith.constant 0 : index
    %c1_151 = arith.constant 1 : index
    %c10_152 = arith.constant 10 : index
    %c0_153 = arith.constant 0 : index
    %97 = vector.load %arg1[%c0_150, %c1_151, %c10_152, %c0_153] : memref<1x18x18x4xbf16, #tpu.memory_space<vmem>>, vector<1x8x8x4xbf16>
    %98 = vector.shape_cast %97 : vector<1x8x8x4xbf16> to vector<8x8x4xbf16>
    %c0_154 = arith.constant 0 : index
    %c10_155 = arith.constant 10 : index
    %c9_156 = arith.constant 9 : index
    %c0_157 = arith.constant 0 : index
    %99 = vector.load %arg1[%c0_154, %c10_155, %c9_156, %c0_157] : memref<1x18x18x4xbf16, #tpu.memory_space<vmem>>, vector<1x8x8x4xbf16>
    %100 = vector.shape_cast %99 : vector<1x8x8x4xbf16> to vector<8x8x4xbf16>
    %c0_158 = arith.constant 0 : index
    %c10_159 = arith.constant 10 : index
    %c1_160 = arith.constant 1 : index
    %c0_161 = arith.constant 0 : index
    %101 = vector.load %arg1[%c0_158, %c10_159, %c1_160, %c0_161] : memref<1x18x18x4xbf16, #tpu.memory_space<vmem>>, vector<1x8x8x4xbf16>
    %102 = vector.shape_cast %101 : vector<1x8x8x4xbf16> to vector<8x8x4xbf16>
    %c0_162 = arith.constant 0 : index
    %c10_163 = arith.constant 10 : index
    %c10_164 = arith.constant 10 : index
    %c0_165 = arith.constant 0 : index
    %103 = vector.load %arg1[%c0_162, %c10_163, %c10_164, %c0_165] : memref<1x18x18x4xbf16, #tpu.memory_space<vmem>>, vector<1x8x8x4xbf16>
    %104 = vector.shape_cast %103 : vector<1x8x8x4xbf16> to vector<8x8x4xbf16>
    %105 = tpu.concatenate %88, %90, %92, %94, %96, %98, %100, %102, %104 in 2 : vector<8x8x4xbf16>, vector<8x8x4xbf16>, vector<8x8x4xbf16>, vector<8x8x4xbf16>, vector<8x8x4xbf16>, vector<8x8x4xbf16>, vector<8x8x4xbf16>, vector<8x8x4xbf16>, vector<8x8x4xbf16> -> vector<8x8x36xbf16>
    %106 = vector.shape_cast %105 : vector<8x8x36xbf16> to vector<64x36xbf16>
    %cst_166 = arith.constant dense<0.000000e+00> : vector<64x8xf32>
    %107 = tpu.matmul %106, %4, %cst_166 {dimension_numbers = #tpu.dot_dimension_numbers<[1], [0], [0], [1], [0, 0, 1, 1], [], []>} : vector<64x36xbf16>, vector<36x8xbf16>, vector<64x8xf32> -> vector<64x8xf32>
    %108 = vector.broadcast %2 : vector<1x8xf32> to vector<64x8xf32>
    %109 = arith.addf %107, %108 : vector<64x8xf32>
    %cst_167 = arith.constant 0.000000e+00 : f32
    %110 = vector.broadcast %cst_167 : f32 to vector<64x8xf32>
    %111 = arith.maximumf %109, %110 : vector<64x8xf32>
    %112 = vector.shape_cast %111 : vector<64x8xf32> to vector<8x8x8xf32>
    %c1_168 = arith.constant 1 : index
    %c1_169 = arith.constant 1 : index
    %c0_170 = arith.constant 0 : index
    %113 = vector.load %arg7[%c1_168, %c1_169, %c0_170] : memref<18x18x8xf32, #tpu.memory_space<vmem>>, vector<8x8x8xf32>
    tpu.vector_store %arg7[%c1_168, %c1_169, %c0_170], %112 {strides = array<i32>} : memref<18x18x8xf32, #tpu.memory_space<vmem>>, vector<8x8x8xf32>,
    %c0_171 = arith.constant 0 : index
    %c0_172 = arith.constant 0 : index
    %c0_173 = arith.constant 0 : index
    %114 = vector.load %arg7[%c0_171, %c0_172, %c0_173] : memref<18x18x8xf32, #tpu.memory_space<vmem>>, vector<8x8x8xf32>
    %c0_174 = arith.constant 0 : index
    %c9_175 = arith.constant 9 : index
    %c0_176 = arith.constant 0 : index
    %115 = vector.load %arg7[%c0_174, %c9_175, %c0_176] : memref<18x18x8xf32, #tpu.memory_space<vmem>>, vector<8x8x8xf32>
    %c0_177 = arith.constant 0 : index
    %c1_178 = arith.constant 1 : index
    %c0_179 = arith.constant 0 : index
    %116 = vector.load %arg7[%c0_177, %c1_178, %c0_179] : memref<18x18x8xf32, #tpu.memory_space<vmem>>, vector<8x8x8xf32>
    %c9_180 = arith.constant 9 : index
    %c0_181 = arith.constant 0 : index
    %c0_182 = arith.constant 0 : index
    %117 = vector.load %arg7[%c9_180, %c0_181, %c0_182] : memref<18x18x8xf32, #tpu.memory_space<vmem>>, vector<8x8x8xf32>
    %c9_183 = arith.constant 9 : index
    %c9_184 = arith.constant 9 : index
    %c0_185 = arith.constant 0 : index
    %118 = vector.load %arg7[%c9_183, %c9_184, %c0_185] : memref<18x18x8xf32, #tpu.memory_space<vmem>>, vector<8x8x8xf32>
    %c9_186 = arith.constant 9 : index
    %c1_187 = arith.constant 1 : index
    %c0_188 = arith.constant 0 : index
    %119 = vector.load %arg7[%c9_186, %c1_187, %c0_188] : memref<18x18x8xf32, #tpu.memory_space<vmem>>, vector<8x8x8xf32>
    %c1_189 = arith.constant 1 : index
    %c0_190 = arith.constant 0 : index
    %c0_191 = arith.constant 0 : index
    %120 = vector.load %arg7[%c1_189, %c0_190, %c0_191] : memref<18x18x8xf32, #tpu.memory_space<vmem>>, vector<8x8x8xf32>
    %c1_192 = arith.constant 1 : index
    %c9_193 = arith.constant 9 : index
    %c0_194 = arith.constant 0 : index
    %121 = vector.load %arg7[%c1_192, %c9_193, %c0_194] : memref<18x18x8xf32, #tpu.memory_space<vmem>>, vector<8x8x8xf32>
    %c1_195 = arith.constant 1 : index
    %c1_196 = arith.constant 1 : index
    %c0_197 = arith.constant 0 : index
    %122 = vector.load %arg7[%c1_195, %c1_196, %c0_197] : memref<18x18x8xf32, #tpu.memory_space<vmem>>, vector<8x8x8xf32>
    %123 = tpu.concatenate %114, %115, %116, %117, %118, %119, %120, %121, %122 in 2 : vector<8x8x8xf32>, vector<8x8x8xf32>, vector<8x8x8xf32>, vector<8x8x8xf32>, vector<8x8x8xf32>, vector<8x8x8xf32>, vector<8x8x8xf32>, vector<8x8x8xf32>, vector<8x8x8xf32> -> vector<8x8x72xf32>
    %124 = vector.shape_cast %123 : vector<8x8x72xf32> to vector<64x72xf32>
    %125 = arith.truncf %124 : vector<64x72xf32> to vector<64x72xbf16>
    %cst_198 = arith.constant dense<0.000000e+00> : vector<64x8xf32>
    %126 = tpu.matmul %125, %5, %cst_198 {dimension_numbers = #tpu.dot_dimension_numbers<[1], [0], [0], [1], [0, 0, 1, 1], [], []>} : vector<64x72xbf16>, vector<72x8xbf16>, vector<64x8xf32> -> vector<64x8xf32>
    %127 = vector.broadcast %3 : vector<1x8xf32> to vector<64x8xf32>
    %128 = arith.addf %126, %127 : vector<64x8xf32>
    %cst_199 = arith.constant 0.000000e+00 : f32
    %129 = vector.broadcast %cst_199 : f32 to vector<64x8xf32>
    %130 = arith.maximumf %128, %129 : vector<64x8xf32>
    %131 = vector.shape_cast %130 : vector<64x8xf32> to vector<8x8x8xf32>
    %c0_200 = arith.constant 0 : index
    %c0_201 = arith.constant 0 : index
    %c0_202 = arith.constant 0 : index
    %c0_203 = arith.constant 0 : index
    %132 = vector.load %arg6[%c0_200, %c0_201, %c0_202, %c0_203] : memref<1x8x8x8xf32, #tpu.memory_space<vmem>>, vector<1x8x8x8xf32>
    %133 = vector.shape_cast %132 : vector<1x8x8x8xf32> to vector<8x8x8xf32>
    %134 = vector.shape_cast %131 : vector<8x8x8xf32> to vector<1x8x8x8xf32>
    tpu.vector_store %arg6[%c0_200, %c0_201, %c0_202, %c0_203], %134 {strides = array<i32>} : memref<1x8x8x8xf32, #tpu.memory_space<vmem>>, vector<1x8x8x8xf32>,
    return
  }
  func.func @transform_0(%arg0: i32) -> (i32, i32, i32, i32) {
    %c0_i32 = arith.constant 0 : i32
    %c0_i32_0 = arith.constant 0 : i32
    %c0_i32_1 = arith.constant 0 : i32
    %c0_i32_2 = arith.constant 0 : i32
    return %arg0, %c0_i32, %c0_i32_0, %c0_i32_1 : i32, i32, i32, i32
  }
  func.func @transform_1(%arg0: i32) -> (i32, i32) {
    %c0_i32 = arith.constant 0 : i32
    %c0_i32_0 = arith.constant 0 : i32
    %c0_i32_1 = arith.constant 0 : i32
    return %c0_i32, %c0_i32_0 : i32, i32
  }
  func.func @transform_2(%arg0: i32) -> (i32, i32) {
    %c0_i32 = arith.constant 0 : i32
    %c0_i32_0 = arith.constant 0 : i32
    %c0_i32_1 = arith.constant 0 : i32
    return %c0_i32, %c0_i32_0 : i32, i32
  }
  func.func @transform_3(%arg0: i32) -> (i32, i32) {
    %c0_i32 = arith.constant 0 : i32
    %c0_i32_0 = arith.constant 0 : i32
    %c0_i32_1 = arith.constant 0 : i32
    return %c0_i32, %c0_i32_0 : i32, i32
  }
  func.func @transform_4(%arg0: i32) -> (i32, i32) {
    %c0_i32 = arith.constant 0 : i32
    %c0_i32_0 = arith.constant 0 : i32
    %c0_i32_1 = arith.constant 0 : i32
    return %c0_i32, %c0_i32_0 : i32, i32
  }
  func.func @transform_5(%arg0: i32) -> (i32, i32, i32, i32) {
    %c0_i32 = arith.constant 0 : i32
    %c0_i32_0 = arith.constant 0 : i32
    %c0_i32_1 = arith.constant 0 : i32
    %c0_i32_2 = arith.constant 0 : i32
    return %arg0, %c0_i32, %c0_i32_0, %c0_i32_1 : i32, i32, i32, i32
  }
}

</mosaic_0001>

<llo_original>
// kernel: initial_block_forward.1
$region0: #{initial_block_forward.1}
  #allocation0 [shape = 'u32[]', space=smem, size = 0x4, offset = 0x4, fixed_abs, tag = 'smem constant byte address 0x4 - core index']
  #allocation1 [shape = 'u32[144,128]{1,0:T(1,128)}', space=vmem, size = 0x12000, scoped, tag = 'internal scratch']
  #allocation2 [shape = 'f32[18,18,8]{2,1,0:T(8,128)}', space=vmem, size = 0x36000, scoped, tag = 'scratch operand']
  %s0 = inlined_call_operand.vmem [shape: bf16[2,18,18,4], index: 0, kind: input, shape index: {}]
  %s1 = inlined_call_operand.vmem [shape: bf16[36,8], index: 1, kind: input, shape index: {}]
  %s2 = inlined_call_operand.vmem [shape: f32[1,8], index: 2, kind: input, shape index: {}]
  %s3 = inlined_call_operand.vmem [shape: bf16[72,8], index: 3, kind: input, shape index: {}]
  %s4 = inlined_call_operand.vmem [shape: f32[1,8], index: 4, kind: input, shape index: {}]
  %s5 = inlined_call_operand.vmem [shape: f32[2,8,8,8], index: 5, kind: output, shape index: {}]
  %s6 = sld [smem:[#allocation0]]
  $region53: #{initial_block_forward.1} parent=0
    _
  %s8 = ssub.s32 1, %s6
  %s9 = scalar_select 0, %s8, %s6
  loop: start=0, step=1, limit=4
  $region2: #{initial_block_forward.1} parent=0 // loop_pre_header
    _
  $region3: #{initial_block_forward.1} parent=0 // loop_header
    %s11 = sphi 0, %s15
    %p12 = scmp.ge.s32.totalorder %s11, 4
    %s21 = sphi 0, %s23
    %s24 = sphi 0, %s21
    %s25 = sphi 0, %s24
    %s41 = sphi 0, %s25
    %s45 = sphi 0, %s45
    %s47 = sphi 0, %s45
    %s48 = sphi 0, %s47
    %s62 = sphi 0, %s48
    %s66 = sphi 0, %s66
    %s68 = sphi 0, %s66
    %s69 = sphi 0, %s68
    %s83 = sphi 0, %s69
    %s87 = sphi 0, %s87
    %s89 = sphi 0, %s87
    %s90 = sphi 0, %s89
    %s104 = sphi 0, %s90
    %s108 = sphi 0, %s108
    %s110 = sphi 0, %s108
    %s111 = sphi 0, %s110
    %s125 = sphi 0, %s111
    %s131 = sphi 0, %s133
    %s134 = sphi 0, %s131
    %s135 = sphi 0, %s134
    %s151 = sphi 0, %s135
  $region4: #{initial_block_forward.1} parent=0 // loop_header_branch
    %14 = sbr.rel (%p12) target = $region8
  $region5: #{initial_block_forward.1} parent=0 // loop_body
    %s16 = ssub.s32 %s11, 1
    %s17 = ssub.s32 %s11, 2
    %s18 = sadd.s32 %s11, 1
    %s19 = ssub.s32 %s11, %s18
    %p20 = scmp.eq.s32.totalorder %s19, 0
    %s22 = sadd.s32 %s21, 1
    %s23 = scalar_select %p20, %s21, %s22
    %p26 = pneg %p20
    %p27 = scmp.eq.s32.totalorder %s11, 1
    %p28 = por %p26, %p27
    %p29 = scmp.ne.s32.totalorder %s21, %s24
    %p30 = scmp.eq.s32.totalorder %s11, 0
    %p31 = por %p29, %p30
    %p32 = scmp.ne.s32.totalorder %s21, %s24
    %p33 = scmp.eq.s32.totalorder %s16, 1
    %p34 = por %p32, %p33
    %p35 = scmp.ne.s32.totalorder %s24, %s25
    %p36 = scmp.eq.s32.totalorder %s16, 0
    %p37 = por %p35, %p36
    %p38 = scmp.ne.s32.totalorder %s24, %s25
    %p39 = scmp.eq.s32.totalorder %s17, 1
    %p40 = por %p38, %p39
    %p42 = scmp.ne.s32.totalorder %s25, %s41
    %p43 = scmp.eq.s32.totalorder %s17, 0
    %p44 = por %p42, %p43
    %s46 = sadd.s32 %s45, 1
    %p49 = scmp.eq.s32.totalorder %s11, 1
    %p50 = scmp.ne.s32.totalorder %s45, %s47
    %p51 = scmp.eq.s32.totalorder %s11, 0
    %p52 = por %p50, %p51
    %p53 = scmp.ne.s32.totalorder %s45, %s47
    %p54 = scmp.eq.s32.totalorder %s16, 1
    %p55 = por %p53, %p54
    %p56 = scmp.ne.s32.totalorder %s47, %s48
    %p57 = scmp.eq.s32.totalorder %s16, 0
    %p58 = por %p56, %p57
    %p59 = scmp.ne.s32.totalorder %s47, %s48
    %p60 = scmp.eq.s32.totalorder %s17, 1
    %p61 = por %p59, %p60
    %p63 = scmp.ne.s32.totalorder %s48, %s62
    %p64 = scmp.eq.s32.totalorder %s17, 0
    %p65 = por %p63, %p64
    %s67 = sadd.s32 %s66, 1
    %p70 = scmp.eq.s32.totalorder %s11, 1
    %p71 = scmp.ne.s32.totalorder %s66, %s68
    %p72 = scmp.eq.s32.totalorder %s11, 0
    %p73 = por %p71, %p72
    %p74 = scmp.ne.s32.totalorder %s66, %s68
    %p75 = scmp.eq.s32.totalorder %s16, 1
    %p76 = por %p74, %p75
    %p77 = scmp.ne.s32.totalorder %s68, %s69
    %p78 = scmp.eq.s32.totalorder %s16, 0
    %p79 = por %p77, %p78
    %p80 = scmp.ne.s32.totalorder %s68, %s69
    %p81 = scmp.eq.s32.totalorder %s17, 1
    %p82 = por %p80, %p81
    %p84 = scmp.ne.s32.totalorder %s69, %s83
    %p85 = scmp.eq.s32.totalorder %s17, 0
    %p86 = por %p84, %p85
    %s88 = sadd.s32 %s87, 1
    %p91 = scmp.eq.s32.totalorder %s11, 1
    %p92 = scmp.ne.s32.totalorder %s87, %s89
    %p93 = scmp.eq.s32.totalorder %s11, 0
    %p94 = por %p92, %p93
    %p95 = scmp.ne.s32.totalorder %s87, %s89
    %p96 = scmp.eq.s32.totalorder %s16, 1
    %p97 = por %p95, %p96
    %p98 = scmp.ne.s32.totalorder %s89, %s90
    %p99 = scmp.eq.s32.totalorder %s16, 0
    %p100 = por %p98, %p99
    %p101 = scmp.ne.s32.totalorder %s89, %s90
    %p102 = scmp.eq.s32.totalorder %s17, 1
    %p103 = por %p101, %p102
    %p105 = scmp.ne.s32.totalorder %s90, %s104
    %p106 = scmp.eq.s32.totalorder %s17, 0
    %p107 = por %p105, %p106
    %s109 = sadd.s32 %s108, 1
    %p112 = scmp.eq.s32.totalorder %s11, 1
    %p113 = scmp.ne.s32.totalorder %s108, %s110
    %p114 = scmp.eq.s32.totalorder %s11, 0
    %p115 = por %p113, %p114
    %p116 = scmp.ne.s32.totalorder %s108, %s110
    %p117 = scmp.eq.s32.totalorder %s16, 1
    %p118 = por %p116, %p117
    %p119 = scmp.ne.s32.totalorder %s110, %s111
    %p120 = scmp.eq.s32.totalorder %s16, 0
    %p121 = por %p119, %p120
    %p122 = scmp.ne.s32.totalorder %s110, %s111
    %p123 = scmp.eq.s32.totalorder %s17, 1
    %p124 = por %p122, %p123
    %p126 = scmp.ne.s32.totalorder %s111, %s125
    %p127 = scmp.eq.s32.totalorder %s17, 0
    %p128 = por %p126, %p127
    %s129 = ssub.s32 %s11, %s18
    %p130 = scmp.eq.s32.totalorder %s129, 0
    %s132 = sadd.s32 %s131, 1
    %s133 = scalar_select %p130, %s131, %s132
    %p136 = pneg %p130
    %p137 = scmp.eq.s32.totalorder %s11, 1
    %p138 = por %p136, %p137
    %p139 = scmp.ne.s32.totalorder %s131, %s134
    %p140 = scmp.eq.s32.totalorder %s11, 0
    %p141 = por %p139, %p140
    %p142 = scmp.ne.s32.totalorder %s131, %s134
    %p143 = scmp.eq.s32.totalorder %s16, 1
    %p144 = por %p142, %p143
    %p145 = scmp.ne.s32.totalorder %s134, %s135
    %p146 = scmp.eq.s32.totalorder %s16, 0
    %p147 = por %p145, %p146
    %p148 = scmp.ne.s32.totalorder %s134, %s135
    %p149 = scmp.eq.s32.totalorder %s17, 1
    %p150 = por %p148, %p149
    %p152 = scmp.ne.s32.totalorder %s135, %s151
    %p153 = scmp.eq.s32.totalorder %s17, 0
    %p154 = por %p152, %p153
    %p155 = scmp.le.s32.totalorder 1, %s11
    %p156 = scmp.lt.s32.totalorder %s11, 3
    %p157 = pnand %p155, %p156
    %p158 = pneg %p157
    // Predicated region
    $region9: #{initial_block_forward.1} parent=5 // pred_check
      _
    $region10: #{initial_block_forward.1} parent=5 // pred_check_branch
      %160 = sbr.rel (%p157) target = $region12
    $region11: #{initial_block_forward.1} parent=5 // pred_region
      %s161 = ssub.s32 %s11, 1
      // Predicated region
      $region13: #{initial_block_forward.1} parent=11 // pred_check
        %p162 = pneg %p58
      $region14: #{initial_block_forward.1} parent=11 // pred_check_branch
        %164 = sbr.rel (%p162) target = $region16
      $region15: #{initial_block_forward.1} parent=11 // pred_region
        _
      $region16: #{initial_block_forward.1} parent=11 // pred_fallthru
        _
      // Predicated region
      $region17: #{initial_block_forward.1} parent=11 // pred_check
        %p165 = pneg %p79
      $region18: #{initial_block_forward.1} parent=11 // pred_check_branch
        %167 = sbr.rel (%p165) target = $region20
      $region19: #{initial_block_forward.1} parent=11 // pred_region
        _
      $region20: #{initial_block_forward.1} parent=11 // pred_fallthru
        _
      // Predicated region
      $region21: #{initial_block_forward.1} parent=11 // pred_check
        %p168 = pneg %p100
      $region22: #{initial_block_forward.1} parent=11 // pred_check_branch
        %170 = sbr.rel (%p168) target = $region24
      $region23: #{initial_block_forward.1} parent=11 // pred_region
        _
      $region24: #{initial_block_forward.1} parent=11 // pred_fallthru
        _
      // Predicated region
      $region25: #{initial_block_forward.1} parent=11 // pred_check
        %p171 = pneg %p121
      $region26: #{initial_block_forward.1} parent=11 // pred_check_branch
        %173 = sbr.rel (%p171) target = $region28
      $region27: #{initial_block_forward.1} parent=11 // pred_region
        _
      $region28: #{initial_block_forward.1} parent=11 // pred_fallthru
        _
    $region12: #{initial_block_forward.1} parent=5 // pred_fallthru
      _
    %p174 = scmp.lt.s32.totalorder %s11, 2
    // Predicated region
    $region29: #{initial_block_forward.1} parent=5 // pred_check
      %p175 = pneg %p174
    $region30: #{initial_block_forward.1} parent=5 // pred_check_branch
      %177 = sbr.rel (%p175) target = $region32
    $region31: #{initial_block_forward.1} parent=5 // pred_region
      // Predicated region
      $region33: #{initial_block_forward.1} parent=31 // pred_check
        %p178 = pneg %p31
      $region34: #{initial_block_forward.1} parent=31 // pred_check_branch
        %180 = sbr.rel (%p178) target = $region36
      $region35: #{initial_block_forward.1} parent=31 // pred_region
        %p181 = scmp.lt.s32.totalorder %s11, 1
        %s182 = scalar_select %p181, %s11, 1
        %s183 = smul.addr %s182, 54
        %s184 = smul.addr %s183, 4
        %s185 = scalar_lea.vmem %s0, %s184
      $region36: #{initial_block_forward.1} parent=31 // pred_fallthru
        _
    $region32: #{initial_block_forward.1} parent=5 // pred_fallthru
      _
    %p186 = scmp.le.s32.totalorder 1, %s11
    %p187 = scmp.lt.s32.totalorder %s11, 3
    %p188 = pnand %p186, %p187
    %p189 = pneg %p188
    // Predicated region
    $region37: #{initial_block_forward.1} parent=5 // pred_check
      _
    $region38: #{initial_block_forward.1} parent=5 // pred_check_branch
      %191 = sbr.rel (%p188) target = $region40
    $region39: #{initial_block_forward.1} parent=5 // pred_region
      %s192 = ssub.s32 %s11, 1
      %p193 = scmp.lt.s32.totalorder %s16, 1
      %s194 = scalar_select %p193, %s16, 1
      %s195 = smul.addr %s194, 54
      %s196 = smul.addr %s195, 4
      %s197 = scalar_lea.vmem %s0, %s196
      %p198 = pneg %p37
      %p199 = pneg %p34
      %p200 = pneg %p58
      %p201 = pneg %p55
      %p202 = pneg %p79
      %p203 = pneg %p76
      %p204 = pneg %p100
      %p205 = pneg %p97
      %p206 = pneg %p121
      %p207 = pneg %p118
      %p208 = pneg %p147
      %p209 = pneg %p144
      %p210 = scmp.lt.s32.totalorder %s16, 1
      %s211 = scalar_select %p210, %s16, 1
      %s212 = smul.addr %s211, 8
      %s213 = smul.addr %s212, 8
      %s214 = scalar_lea.vmem %s5, %s213
      %p215 = scmp.lt.s32.totalorder %s16, 1
      %s216 = scalar_select %p215, %s16, 1
      %s217 = smul.addr %s216, 54
      %s218 = smul.addr %s217, 4
      %s219 = scalar_lea.vmem %s0, %s218
      %p220 = scmp.lt.s32.totalorder %s16, 1
      %s221 = scalar_select %p220, %s16, 1
      %s222 = smul.addr %s221, 8
      %s223 = smul.addr %s222, 8
      %s224 = scalar_lea.vmem %s5, %s223
      %vm226 = vcmask 64512
      %227 = vst.msk [vmem:[#allocation2] sm:$0xff] %vm226, 0.0
      %228 = vst.msk [vmem:[#allocation2 + $0x8] sm:$0xff] %vm226, 0.0
      %vm229 = vcmask 58368
      %230 = vst.msk [vmem:[#allocation2 + $0x10] sm:$0x3] %vm229, 0.0
      %231 = vst.msk [vmem:[#allocation2 + $0x18] sm:$0xff] %vm226, 0.0
      %232 = vst.msk [vmem:[#allocation2 + $0x20] sm:$0xff] %vm226, 0.0
      %233 = vst.msk [vmem:[#allocation2 + $0x28] sm:$0x3] %vm229, 0.0
      %234 = vst.msk [vmem:[#allocation2 + $0x30] sm:$0xff] %vm226, 0.0
      %235 = vst.msk [vmem:[#allocation2 + $0x38] sm:$0xff] %vm226, 0.0
      %236 = vst.msk [vmem:[#allocation2 + $0x40] sm:$0x3] %vm229, 0.0
      %237 = vst.msk [vmem:[#allocation2 + $0x48] sm:$0xff] %vm226, 0.0
      %238 = vst.msk [vmem:[#allocation2 + $0x50] sm:$0xff] %vm226, 0.0
      %239 = vst.msk [vmem:[#allocation2 + $0x58] sm:$0x3] %vm229, 0.0
      %240 = vst.msk [vmem:[#allocation2 + $0x60] sm:$0xff] %vm226, 0.0
      %241 = vst.msk [vmem:[#allocation2 + $0x68] sm:$0xff] %vm226, 0.0
      %242 = vst.msk [vmem:[#allocation2 + $0x70] sm:$0x3] %vm229, 0.0
      %243 = vst.msk [vmem:[#allocation2 + $0x78] sm:$0xff] %vm226, 0.0
      %244 = vst.msk [vmem:[#allocation2 + $0x80] sm:$0xff] %vm226, 0.0
      %245 = vst.msk [vmem:[#allocation2 + $0x88] sm:$0x3] %vm229, 0.0
      %246 = vst.msk [vmem:[#allocation2 + $0x90] sm:$0xff] %vm226, 0.0
      %247 = vst.msk [vmem:[#allocation2 + $0x98] sm:$0xff] %vm226, 0.0
      %248 = vst.msk [vmem:[#allocation2 + $0xa0] sm:$0x3] %vm229, 0.0
      %249 = vst.msk [vmem:[#allocation2 + $0xa8] sm:$0xff] %vm226, 0.0
      %250 = vst.msk [vmem:[#allocation2 + $0xb0] sm:$0xff] %vm226, 0.0
      %251 = vst.msk [vmem:[#allocation2 + $0xb8] sm:$0x3] %vm229, 0.0
      %252 = vst.msk [vmem:[#allocation2 + $0xc0] sm:$0xff] %vm226, 0.0
      %253 = vst.msk [vmem:[#allocation2 + $0xc8] sm:$0xff] %vm226, 0.0
      %254 = vst.msk [vmem:[#allocation2 + $0xd0] sm:$0x3] %vm229, 0.0
      %255 = vst.msk [vmem:[#allocation2 + $0xd8] sm:$0xff] %vm226, 0.0
      %256 = vst.msk [vmem:[#allocation2 + $0xe0] sm:$0xff] %vm226, 0.0
      %257 = vst.msk [vmem:[#allocation2 + $0xe8] sm:$0x3] %vm229, 0.0
      %258 = vst.msk [vmem:[#allocation2 + $0xf0] sm:$0xff] %vm226, 0.0
      %259 = vst.msk [vmem:[#allocation2 + $0xf8] sm:$0xff] %vm226, 0.0
      %260 = vst.msk [vmem:[#allocation2 + $0x100] sm:$0x3] %vm229, 0.0
      %261 = vst.msk [vmem:[#allocation2 + $0x108] sm:$0xff] %vm226, 0.0
      %262 = vst.msk [vmem:[#allocation2 + $0x110] sm:$0xff] %vm226, 0.0
      %263 = vst.msk [vmem:[#allocation2 + $0x118] sm:$0x3] %vm229, 0.0
      %264 = vst.msk [vmem:[#allocation2 + $0x120] sm:$0xff] %vm226, 0.0
      %265 = vst.msk [vmem:[#allocation2 + $0x128] sm:$0xff] %vm226, 0.0
      %266 = vst.msk [vmem:[#allocation2 + $0x130] sm:$0x3] %vm229, 0.0
      %267 = vst.msk [vmem:[#allocation2 + $0x138] sm:$0xff] %vm226, 0.0
      %268 = vst.msk [vmem:[#allocation2 + $0x140] sm:$0xff] %vm226, 0.0
      %269 = vst.msk [vmem:[#allocation2 + $0x148] sm:$0x3] %vm229, 0.0
      %270 = vst.msk [vmem:[#allocation2 + $0x150] sm:$0xff] %vm226, 0.0
      %271 = vst.msk [vmem:[#allocation2 + $0x158] sm:$0xff] %vm226, 0.0
      %272 = vst.msk [vmem:[#allocation2 + $0x160] sm:$0x3] %vm229, 0.0
      %273 = vst.msk [vmem:[#allocation2 + $0x168] sm:$0xff] %vm226, 0.0
      %274 = vst.msk [vmem:[#allocation2 + $0x170] sm:$0xff] %vm226, 0.0
      %275 = vst.msk [vmem:[#allocation2 + $0x178] sm:$0x3] %vm229, 0.0
      %276 = vst.msk [vmem:[#allocation2 + $0x180] sm:$0xff] %vm226, 0.0
      %277 = vst.msk [vmem:[#allocation2 + $0x188] sm:$0xff] %vm226, 0.0
      %278 = vst.msk [vmem:[#allocation2 + $0x190] sm:$0x3] %vm229, 0.0
      %279 = vst.msk [vmem:[#allocation2 + $0x198] sm:$0xff] %vm226, 0.0
      %280 = vst.msk [vmem:[#allocation2 + $0x1a0] sm:$0xff] %vm226, 0.0
      %281 = vst.msk [vmem:[#allocation2 + $0x1a8] sm:$0x3] %vm229, 0.0
      %v282 = vld [vmem:[%s2] sm:$0x1]
      %v283 = vld [vmem:[%s4] sm:$0x1]
      %v284 = vld [vmem:[%s1] sm:$0xf]
      %v285 = vld [vmem:[%s1 + $0x4] sm:$0xf]
      %v286 = vld [vmem:[%s1 + $0x8] sm:$0xf]
      %v287 = vld [vmem:[%s1 + $0xc] sm:$0xf]
      %v288 = vld [vmem:[%s1 + $0x10] sm:$0x3]
      %v289 = vld [vmem:[%s3] sm:$0xf]
      %v290 = vld [vmem:[%s3 + $0x4] sm:$0xf]
      %v291 = vld [vmem:[%s3 + $0x8] sm:$0xf]
      %v292 = vld [vmem:[%s3 + $0xc] sm:$0xf]
      %v293 = vld [vmem:[%s3 + $0x10] sm:$0xf]
      %v294 = vld [vmem:[%s3 + $0x14] sm:$0xf]
      %v295 = vld [vmem:[%s3 + $0x18] sm:$0xf]
      %v296 = vld [vmem:[%s3 + $0x1c] sm:$0xf]
      %v297 = vld [vmem:[%s3 + $0x20] sm:$0xf]
      %v298 = vld [vmem:[%s219] sm:$0xf]
      %v299 = vld [vmem:[%s219 + $0xc] sm:$0xf]
      %v300 = vld [vmem:[%s219 + $0x18] sm:$0xf]
      %v301 = vld [vmem:[%s219 + $0x24] sm:$0xf]
      %v302 = vld [vmem:[%s219 + $0x30] sm:$0xf]
      %v303 = vld [vmem:[%s219 + $0x3c] sm:$0xf]
      %v304 = vld [vmem:[%s219 + $0x48] sm:$0xf]
      %v305 = vld [vmem:[%s219 + $0x54] sm:$0xf]
      %v306 = vld [vmem:[%s219 + $0x4] sm:$0xf]
      %v307 = vld [vmem:[%s219 + $0x8] sm:$0x1]
      %v308 = vld [vmem:[%s219 + $0x10] sm:$0xf]
      %v309 = vld [vmem:[%s219 + $0x14] sm:$0x1]
      %v310 = vld [vmem:[%s219 + $0x1c] sm:$0xf]
      %v311 = vld [vmem:[%s219 + $0x20] sm:$0x1]
      %v312 = vld [vmem:[%s219 + $0x28] sm:$0xf]
      %v313 = vld [vmem:[%s219 + $0x2c] sm:$0x1]
      %v314 = vld [vmem:[%s219 + $0x34] sm:$0xf]
      %v315 = vld [vmem:[%s219 + $0x38] sm:$0x1]
      %v316 = vld [vmem:[%s219 + $0x40] sm:$0xf]
      %v317 = vld [vmem:[%s219 + $0x44] sm:$0x1]
      %v318 = vld [vmem:[%s219 + $0x4c] sm:$0xf]
      %v319 = vld [vmem:[%s219 + $0x50] sm:$0x1]
      %v320 = vld [vmem:[%s219 + $0x58] sm:$0xf]
      %v321 = vld [vmem:[%s219 + $0x5c] sm:$0x1]
      %v322 = vld [vmem:[%s219 + $0x4] sm:$0x1]
      %v323 = vld [vmem:[%s219 + $0x10] sm:$0x1]
      %v324 = vld [vmem:[%s219 + $0x1c] sm:$0x1]
      %v325 = vld [vmem:[%s219 + $0x28] sm:$0x1]
      %v326 = vld [vmem:[%s219 + $0x34] sm:$0x1]
      %v327 = vld [vmem:[%s219 + $0x40] sm:$0x1]
      %v328 = vld [vmem:[%s219 + $0x4c] sm:$0x1]
      %v329 = vld [vmem:[%s219 + $0x58] sm:$0x1]
      %s330 = scalar_lea.vmem %s219, 108
      %v331 = vld [vmem:[%s330] sm:$0xf]
      %v332 = vld [vmem:[%s330 + $0xc] sm:$0xf]
      %v333 = vld [vmem:[%s330 + $0x18] sm:$0xf]
      %v334 = vld [vmem:[%s330 + $0x24] sm:$0xf]
      %v335 = vld [vmem:[%s330 + $0x30] sm:$0xf]
      %v336 = vld [vmem:[%s330 + $0x3c] sm:$0xf]
      %v337 = vld [vmem:[%s330 + $0x48] sm:$0xf]
      %v338 = vld [vmem:[%s330 + $0x54] sm:$0xf]
      %v339 = vld [vmem:[%s330 + $0x4] sm:$0xf]
      %v340 = vld [vmem:[%s330 + $0x8] sm:$0x1]
      %v341 = vld [vmem:[%s330 + $0x10] sm:$0xf]
      %v342 = vld [vmem:[%s330 + $0x14] sm:$0x1]
      %v343 = vld [vmem:[%s330 + $0x1c] sm:$0xf]
      %v344 = vld [vmem:[%s330 + $0x20] sm:$0x1]
      %v345 = vld [vmem:[%s330 + $0x28] sm:$0xf]
      %v346 = vld [vmem:[%s330 + $0x2c] sm:$0x1]
      %v347 = vld [vmem:[%s330 + $0x34] sm:$0xf]
      %v348 = vld [vmem:[%s330 + $0x38] sm:$0x1]
      %v349 = vld [vmem:[%s330 + $0x40] sm:$0xf]
      %v350 = vld [vmem:[%s330 + $0x44] sm:$0x1]
      %v351 = vld [vmem:[%s330 + $0x4c] sm:$0xf]
      %v352 = vld [vmem:[%s330 + $0x50] sm:$0x1]
      %v353 = vld [vmem:[%s330 + $0x58] sm:$0xf]
      %v354 = vld [vmem:[%s330 + $0x5c] sm:$0x1]
      %v355 = vld [vmem:[%s330 + $0x4] sm:$0x1]
      %v356 = vld [vmem:[%s330 + $0x10] sm:$0x1]
      %v357 = vld [vmem:[%s330 + $0x1c] sm:$0x1]
      %v358 = vld [vmem:[%s330 + $0x28] sm:$0x1]
      %v359 = vld [vmem:[%s330 + $0x34] sm:$0x1]
      %v360 = vld [vmem:[%s330 + $0x40] sm:$0x1]
      %v361 = vld [vmem:[%s330 + $0x4c] sm:$0x1]
      %v362 = vld [vmem:[%s330 + $0x58] sm:$0x1]
      %s363 = scalar_lea.vmem %s219, 12
      %v364 = vld [vmem:[%s363] sm:$0xf]
      %v365 = vld [vmem:[%s363 + $0xc] sm:$0xf]
      %v366 = vld [vmem:[%s363 + $0x18] sm:$0xf]
      %v367 = vld [vmem:[%s363 + $0x24] sm:$0xf]
      %v368 = vld [vmem:[%s363 + $0x30] sm:$0xf]
      %v369 = vld [vmem:[%s363 + $0x3c] sm:$0xf]
      %v370 = vld [vmem:[%s363 + $0x48] sm:$0xf]
      %v371 = vld [vmem:[%s363 + $0x54] sm:$0xf]
      %v372 = vld [vmem:[%s363 + $0x4] sm:$0xf]
      %v373 = vld [vmem:[%s363 + $0x8] sm:$0x1]
      %v374 = vld [vmem:[%s363 + $0x10] sm:$0xf]
      %v375 = vld [vmem:[%s363 + $0x14] sm:$0x1]
      %v376 = vld [vmem:[%s363 + $0x1c] sm:$0xf]
      %v377 = vld [vmem:[%s363 + $0x20] sm:$0x1]
      %v378 = vld [vmem:[%s363 + $0x28] sm:$0xf]
      %v379 = vld [vmem:[%s363 + $0x2c] sm:$0x1]
      %v380 = vld [vmem:[%s363 + $0x34] sm:$0xf]
      %v381 = vld [vmem:[%s363 + $0x38] sm:$0x1]
      %v382 = vld [vmem:[%s363 + $0x40] sm:$0xf]
      %v383 = vld [vmem:[%s363 + $0x44] sm:$0x1]
      %v384 = vld [vmem:[%s363 + $0x4c] sm:$0xf]
      %v385 = vld [vmem:[%s363 + $0x50] sm:$0x1]
      %v386 = vld [vmem:[%s363 + $0x58] sm:$0xf]
      %v387 = vld [vmem:[%s363 + $0x5c] sm:$0x1]
      %v388 = vld [vmem:[%s363 + $0x4] sm:$0x1]
      %v389 = vld [vmem:[%s363 + $0x10] sm:$0x1]
      %v390 = vld [vmem:[%s363 + $0x1c] sm:$0x1]
      %v391 = vld [vmem:[%s363 + $0x28] sm:$0x1]
      %v392 = vld [vmem:[%s363 + $0x34] sm:$0x1]
      %v393 = vld [vmem:[%s363 + $0x40] sm:$0x1]
      %v394 = vld [vmem:[%s363 + $0x4c] sm:$0x1]
      %v395 = vld [vmem:[%s363 + $0x58] sm:$0x1]
      %v412 = vunpack.c.l.b16 %v306
      %v413 = vunpack.c.l.b16 %v307
      %v414 = vunpack.c.l.b16 %v308
      %v415 = vunpack.c.l.b16 %v309
      %v416 = vunpack.c.l.b16 %v310
      %v417 = vunpack.c.l.b16 %v311
      %v418 = vunpack.c.l.b16 %v312
      %v419 = vunpack.c.l.b16 %v313
      %v420 = vunpack.c.l.b16 %v314
      %v421 = vunpack.c.l.b16 %v315
      %v422 = vunpack.c.l.b16 %v316
      %v423 = vunpack.c.l.b16 %v317
      %v424 = vunpack.c.l.b16 %v318
      %v425 = vunpack.c.l.b16 %v319
      %v426 = vunpack.c.l.b16 %v320
      %v427 = vunpack.c.l.b16 %v321
      %v428 = vpack.c.b16 %v413, %v412
      %v429 = vpack.c.b16 %v415, %v414
      %v430 = vpack.c.b16 %v417, %v416
      %v431 = vpack.c.b16 %v419, %v418
      %v432 = vpack.c.b16 %v421, %v420
      %v433 = vpack.c.b16 %v423, %v422
      %v434 = vpack.c.b16 %v425, %v424
      %v435 = vpack.c.b16 %v427, %v426
      %v437 = vshrl.u32 %v428, 16
      %v439 = vshll.u32 %v428, 16
      %v441 = vrot.slane %v439, 1
      %v442 = vor.u32 %v437, %v441
      %v444 = vshrl.u32 %v429, 16
      %v446 = vshll.u32 %v429, 16
      %v448 = vrot.slane %v446, 1
      %v449 = vor.u32 %v444, %v448
      %v451 = vshrl.u32 %v430, 16
      %v453 = vshll.u32 %v430, 16
      %v455 = vrot.slane %v453, 1
      %v456 = vor.u32 %v451, %v455
      %v458 = vshrl.u32 %v431, 16
      %v460 = vshll.u32 %v431, 16
      %v462 = vrot.slane %v460, 1
      %v463 = vor.u32 %v458, %v462
      %v465 = vshrl.u32 %v432, 16
      %v467 = vshll.u32 %v432, 16
      %v469 = vrot.slane %v467, 1
      %v470 = vor.u32 %v465, %v469
      %v472 = vshrl.u32 %v433, 16
      %v474 = vshll.u32 %v433, 16
      %v476 = vrot.slane %v474, 1
      %v477 = vor.u32 %v472, %v476
      %v479 = vshrl.u32 %v434, 16
      %v481 = vshll.u32 %v434, 16
      %v483 = vrot.slane %v481, 1
      %v484 = vor.u32 %v479, %v483
      %v486 = vshrl.u32 %v435, 16
      %v488 = vshll.u32 %v435, 16
      %v490 = vrot.slane %v488, 1
      %v491 = vor.u32 %v486, %v490
      %492 = vrot.lane.b32.xlu0 %v442, 4
      %v493 = vpop.permute.xlu0 %492
      %494 = vrot.lane.b32.xlu0 %v449, 4
      %v495 = vpop.permute.xlu0 %494
      %496 = vrot.lane.b32.xlu0 %v456, 4
      %v497 = vpop.permute.xlu0 %496
      %498 = vrot.lane.b32.xlu0 %v463, 4
      %v499 = vpop.permute.xlu0 %498
      %500 = vrot.lane.b32.xlu0 %v470, 4
      %v501 = vpop.permute.xlu0 %500
      %502 = vrot.lane.b32.xlu0 %v477, 4
      %v503 = vpop.permute.xlu0 %502
      %504 = vrot.lane.b32.xlu0 %v484, 4
      %v505 = vpop.permute.xlu0 %504
      %506 = vrot.lane.b32.xlu0 %v491, 4
      %v507 = vpop.permute.xlu0 %506
      %v524 = vunpack.c.l.b16 %v298
      %v525 = vunpack.c.l.b16 %v322
      %v526 = vunpack.c.l.b16 %v299
      %v527 = vunpack.c.l.b16 %v323
      %v528 = vunpack.c.l.b16 %v300
      %v529 = vunpack.c.l.b16 %v324
      %v530 = vunpack.c.l.b16 %v301
      %v531 = vunpack.c.l.b16 %v325
      %v532 = vunpack.c.l.b16 %v302
      %v533 = vunpack.c.l.b16 %v326
      %v534 = vunpack.c.l.b16 %v303
      %v535 = vunpack.c.l.b16 %v327
      %v536 = vunpack.c.l.b16 %v304
      %v537 = vunpack.c.l.b16 %v328
      %v538 = vunpack.c.l.b16 %v305
      %v539 = vunpack.c.l.b16 %v329
      %v540 = vpack.c.b16 %v525, %v524
      %v541 = vpack.c.b16 %v527, %v526
      %v542 = vpack.c.b16 %v529, %v528
      %v543 = vpack.c.b16 %v531, %v530
      %v544 = vpack.c.b16 %v533, %v532
      %v545 = vpack.c.b16 %v535, %v534
      %v546 = vpack.c.b16 %v537, %v536
      %v547 = vpack.c.b16 %v539, %v538
      %v549 = vshrl.u32 %v540, 16
      %v551 = vshll.u32 %v540, 16
      %v553 = vrot.slane %v551, 1
      %v554 = vor.u32 %v549, %v553
      %v556 = vshrl.u32 %v541, 16
      %v558 = vshll.u32 %v541, 16
      %v560 = vrot.slane %v558, 1
      %v561 = vor.u32 %v556, %v560
      %v563 = vshrl.u32 %v542, 16
      %v565 = vshll.u32 %v542, 16
      %v567 = vrot.slane %v565, 1
      %v568 = vor.u32 %v563, %v567
      %v570 = vshrl.u32 %v543, 16
      %v572 = vshll.u32 %v543, 16
      %v574 = vrot.slane %v572, 1
      %v575 = vor.u32 %v570, %v574
      %v577 = vshrl.u32 %v544, 16
      %v579 = vshll.u32 %v544, 16
      %v581 = vrot.slane %v579, 1
      %v582 = vor.u32 %v577, %v581
      %v584 = vshrl.u32 %v545, 16
      %v586 = vshll.u32 %v545, 16
      %v588 = vrot.slane %v586, 1
      %v589 = vor.u32 %v584, %v588
      %v591 = vshrl.u32 %v546, 16
      %v593 = vshll.u32 %v546, 16
      %v595 = vrot.slane %v593, 1
      %v596 = vor.u32 %v591, %v595
      %v598 = vshrl.u32 %v547, 16
      %v600 = vshll.u32 %v547, 16
      %v602 = vrot.slane %v600, 1
      %v603 = vor.u32 %v598, %v602
      %604 = vrot.lane.b32.xlu0 %v554, 8
      %v605 = vpop.permute.xlu0 %604
      %606 = vrot.lane.b32.xlu0 %v561, 8
      %v607 = vpop.permute.xlu0 %606
      %608 = vrot.lane.b32.xlu0 %v568, 8
      %v609 = vpop.permute.xlu0 %608
      %610 = vrot.lane.b32.xlu0 %v575, 8
      %v611 = vpop.permute.xlu0 %610
      %612 = vrot.lane.b32.xlu0 %v582, 8
      %v613 = vpop.permute.xlu0 %612
      %614 = vrot.lane.b32.xlu0 %v589, 8
      %v615 = vpop.permute.xlu0 %614
      %616 = vrot.lane.b32.xlu0 %v596, 8
      %v617 = vpop.permute.xlu0 %616
      %618 = vrot.lane.b32.xlu0 %v603, 8
      %v619 = vpop.permute.xlu0 %618
      %v628 = vunpack.c.l.b16 %v331
      %v629 = vunpack.c.l.b16 %v332
      %v630 = vunpack.c.l.b16 %v333
      %v631 = vunpack.c.l.b16 %v334
      %v632 = vunpack.c.l.b16 %v335
      %v633 = vunpack.c.l.b16 %v336
      %v634 = vunpack.c.l.b16 %v337
      %v635 = vunpack.c.l.b16 %v338
      %v636 = vpack.c.b16 %v628, %v628
      %v637 = vpack.c.b16 %v629, %v629
      %v638 = vpack.c.b16 %v630, %v630
      %v639 = vpack.c.b16 %v631, %v631
      %v640 = vpack.c.b16 %v632, %v632
      %v641 = vpack.c.b16 %v633, %v633
      %v642 = vpack.c.b16 %v634, %v634
      %v643 = vpack.c.b16 %v635, %v635
      %644 = vrot.lane.b32.xlu0 %v636, 12
      %v645 = vpop.permute.xlu0 %644
      %646 = vrot.lane.b32.xlu0 %v637, 12
      %v647 = vpop.permute.xlu0 %646
      %648 = vrot.lane.b32.xlu0 %v638, 12
      %v649 = vpop.permute.xlu0 %648
      %650 = vrot.lane.b32.xlu0 %v639, 12
      %v651 = vpop.permute.xlu0 %650
      %652 = vrot.lane.b32.xlu0 %v640, 12
      %v653 = vpop.permute.xlu0 %652
      %654 = vrot.lane.b32.xlu0 %v641, 12
      %v655 = vpop.permute.xlu0 %654
      %656 = vrot.lane.b32.xlu0 %v642, 12
      %v657 = vpop.permute.xlu0 %656
      %658 = vrot.lane.b32.xlu0 %v643, 12
      %v659 = vpop.permute.xlu0 %658
      %v676 = vunpack.c.l.b16 %v339
      %v677 = vunpack.c.l.b16 %v340
      %v678 = vunpack.c.l.b16 %v341
      %v679 = vunpack.c.l.b16 %v342
      %v680 = vunpack.c.l.b16 %v343
      %v681 = vunpack.c.l.b16 %v344
      %v682 = vunpack.c.l.b16 %v345
      %v683 = vunpack.c.l.b16 %v346
      %v684 = vunpack.c.l.b16 %v347
      %v685 = vunpack.c.l.b16 %v348
      %v686 = vunpack.c.l.b16 %v349
      %v687 = vunpack.c.l.b16 %v350
      %v688 = vunpack.c.l.b16 %v351
      %v689 = vunpack.c.l.b16 %v352
      %v690 = vunpack.c.l.b16 %v353
      %v691 = vunpack.c.l.b16 %v354
      %v692 = vpack.c.b16 %v677, %v676
      %v693 = vpack.c.b16 %v679, %v678
      %v694 = vpack.c.b16 %v681, %v680
      %v695 = vpack.c.b16 %v683, %v682
      %v696 = vpack.c.b16 %v685, %v684
      %v697 = vpack.c.b16 %v687, %v686
      %v698 = vpack.c.b16 %v689, %v688
      %v699 = vpack.c.b16 %v691, %v690
      %v701 = vshrl.u32 %v692, 16
      %v703 = vshll.u32 %v692, 16
      %v705 = vrot.slane %v703, 1
      %v706 = vor.u32 %v701, %v705
      %v708 = vshrl.u32 %v693, 16
      %v710 = vshll.u32 %v693, 16
      %v712 = vrot.slane %v710, 1
      %v713 = vor.u32 %v708, %v712
      %v715 = vshrl.u32 %v694, 16
      %v717 = vshll.u32 %v694, 16
      %v719 = vrot.slane %v717, 1
      %v720 = vor.u32 %v715, %v719
      %v722 = vshrl.u32 %v695, 16
      %v724 = vshll.u32 %v695, 16
      %v726 = vrot.slane %v724, 1
      %v727 = vor.u32 %v722, %v726
      %v729 = vshrl.u32 %v696, 16
      %v731 = vshll.u32 %v696, 16
      %v733 = vrot.slane %v731, 1
      %v734 = vor.u32 %v729, %v733
      %v736 = vshrl.u32 %v697, 16
      %v738 = vshll.u32 %v697, 16
      %v740 = vrot.slane %v738, 1
      %v741 = vor.u32 %v736, %v740
      %v743 = vshrl.u32 %v698, 16
      %v745 = vshll.u32 %v698, 16
      %v747 = vrot.slane %v745, 1
      %v748 = vor.u32 %v743, %v747
      %v750 = vshrl.u32 %v699, 16
      %v752 = vshll.u32 %v699, 16
      %v754 = vrot.slane %v752, 1
      %v755 = vor.u32 %v750, %v754
      %756 = vrot.lane.b32.xlu0 %v706, 16
      %v757 = vpop.permute.xlu0 %756
      %758 = vrot.lane.b32.xlu0 %v713, 16
      %v759 = vpop.permute.xlu0 %758
      %760 = vrot.lane.b32.xlu0 %v720, 16
      %v761 = vpop.permute.xlu0 %760
      %762 = vrot.lane.b32.xlu0 %v727, 16
      %v763 = vpop.permute.xlu0 %762
      %764 = vrot.lane.b32.xlu0 %v734, 16
      %v765 = vpop.permute.xlu0 %764
      %766 = vrot.lane.b32.xlu0 %v741, 16
      %v767 = vpop.permute.xlu0 %766
      %768 = vrot.lane.b32.xlu0 %v748, 16
      %v769 = vpop.permute.xlu0 %768
      %770 = vrot.lane.b32.xlu0 %v755, 16
      %v771 = vpop.permute.xlu0 %770
      %v780 = vunpack.c.l.b16 %v355
      %v781 = vunpack.c.l.b16 %v356
      %v782 = vunpack.c.l.b16 %v357
      %v783 = vunpack.c.l.b16 %v358
      %v784 = vunpack.c.l.b16 %v359
      %v785 = vunpack.c.l.b16 %v360
      %v786 = vunpack.c.l.b16 %v361
      %v787 = vunpack.c.l.b16 %v362
      %v788 = vpack.c.b16 %v780, %v628
      %v789 = vpack.c.b16 %v781, %v629
      %v790 = vpack.c.b16 %v782, %v630
      %v791 = vpack.c.b16 %v783, %v631
      %v792 = vpack.c.b16 %v784, %v632
      %v793 = vpack.c.b16 %v785, %v633
      %v794 = vpack.c.b16 %v786, %v634
      %v795 = vpack.c.b16 %v787, %v635
      %v797 = vshrl.u32 %v788, 16
      %v799 = vshll.u32 %v788, 16
      %v801 = vrot.slane %v799, 1
      %v802 = vor.u32 %v797, %v801
      %v804 = vshrl.u32 %v789, 16
      %v806 = vshll.u32 %v789, 16
      %v808 = vrot.slane %v806, 1
      %v809 = vor.u32 %v804, %v808
      %v811 = vshrl.u32 %v790, 16
      %v813 = vshll.u32 %v790, 16
      %v815 = vrot.slane %v813, 1
      %v816 = vor.u32 %v811, %v815
      %v818 = vshrl.u32 %v791, 16
      %v820 = vshll.u32 %v791, 16
      %v822 = vrot.slane %v820, 1
      %v823 = vor.u32 %v818, %v822
      %v825 = vshrl.u32 %v792, 16
      %v827 = vshll.u32 %v792, 16
      %v829 = vrot.slane %v827, 1
      %v830 = vor.u32 %v825, %v829
      %v832 = vshrl.u32 %v793, 16
      %v834 = vshll.u32 %v793, 16
      %v836 = vrot.slane %v834, 1
      %v837 = vor.u32 %v832, %v836
      %v839 = vshrl.u32 %v794, 16
      %v841 = vshll.u32 %v794, 16
      %v843 = vrot.slane %v841, 1
      %v844 = vor.u32 %v839, %v843
      %v846 = vshrl.u32 %v795, 16
      %v848 = vshll.u32 %v795, 16
      %v850 = vrot.slane %v848, 1
      %v851 = vor.u32 %v846, %v850
      %852 = vrot.lane.b32.xlu0 %v802, 20
      %v853 = vpop.permute.xlu0 %852
      %854 = vrot.lane.b32.xlu0 %v809, 20
      %v855 = vpop.permute.xlu0 %854
      %856 = vrot.lane.b32.xlu0 %v816, 20
      %v857 = vpop.permute.xlu0 %856
      %858 = vrot.lane.b32.xlu0 %v823, 20
      %v859 = vpop.permute.xlu0 %858
      %860 = vrot.lane.b32.xlu0 %v830, 20
      %v861 = vpop.permute.xlu0 %860
      %862 = vrot.lane.b32.xlu0 %v837, 20
      %v863 = vpop.permute.xlu0 %862
      %864 = vrot.lane.b32.xlu0 %v844, 20
      %v865 = vpop.permute.xlu0 %864
      %866 = vrot.lane.b32.xlu0 %v851, 20
      %v867 = vpop.permute.xlu0 %866
      %v876 = vunpack.c.l.b16 %v364
      %v877 = vunpack.c.l.b16 %v365
      %v878 = vunpack.c.l.b16 %v366
      %v879 = vunpack.c.l.b16 %v367
      %v880 = vunpack.c.l.b16 %v368
      %v881 = vunpack.c.l.b16 %v369
      %v882 = vunpack.c.l.b16 %v370
      %v883 = vunpack.c.l.b16 %v371
      %v884 = vpack.c.b16 %v876, %v876
      %v885 = vpack.c.b16 %v877, %v877
      %v886 = vpack.c.b16 %v878, %v878
      %v887 = vpack.c.b16 %v879, %v879
      %v888 = vpack.c.b16 %v880, %v880
      %v889 = vpack.c.b16 %v881, %v881
      %v890 = vpack.c.b16 %v882, %v882
      %v891 = vpack.c.b16 %v883, %v883
      %892 = vrot.lane.b32.xlu0 %v884, 24
      %v893 = vpop.permute.xlu0 %892
      %894 = vrot.lane.b32.xlu0 %v885, 24
      %v895 = vpop.permute.xlu0 %894
      %896 = vrot.lane.b32.xlu0 %v886, 24
      %v897 = vpop.permute.xlu0 %896
      %898 = vrot.lane.b32.xlu0 %v887, 24
      %v899 = vpop.permute.xlu0 %898
      %900 = vrot.lane.b32.xlu0 %v888, 24
      %v901 = vpop.permute.xlu0 %900
      %902 = vrot.lane.b32.xlu0 %v889, 24
      %v903 = vpop.permute.xlu0 %902
      %904 = vrot.lane.b32.xlu0 %v890, 24
      %v905 = vpop.permute.xlu0 %904
      %906 = vrot.lane.b32.xlu0 %v891, 24
      %v907 = vpop.permute.xlu0 %906
      %v924 = vunpack.c.l.b16 %v372
      %v925 = vunpack.c.l.b16 %v373
      %v926 = vunpack.c.l.b16 %v374
      %v927 = vunpack.c.l.b16 %v375
      %v928 = vunpack.c.l.b16 %v376
      %v929 = vunpack.c.l.b16 %v377
      %v930 = vunpack.c.l.b16 %v378
      %v931 = vunpack.c.l.b16 %v379
      %v932 = vunpack.c.l.b16 %v380
      %v933 = vunpack.c.l.b16 %v381
      %v934 = vunpack.c.l.b16 %v382
      %v935 = vunpack.c.l.b16 %v383
      %v936 = vunpack.c.l.b16 %v384
      %v937 = vunpack.c.l.b16 %v385
      %v938 = vunpack.c.l.b16 %v386
      %v939 = vunpack.c.l.b16 %v387
      %v940 = vpack.c.b16 %v925, %v924
      %v941 = vpack.c.b16 %v927, %v926
      %v942 = vpack.c.b16 %v929, %v928
      %v943 = vpack.c.b16 %v931, %v930
      %v944 = vpack.c.b16 %v933, %v932
      %v945 = vpack.c.b16 %v935, %v934
      %v946 = vpack.c.b16 %v937, %v936
      %v947 = vpack.c.b16 %v939, %v938
      %v949 = vshrl.u32 %v940, 16
      %v951 = vshll.u32 %v940, 16
      %v953 = vrot.slane %v951, 1
      %v954 = vor.u32 %v949, %v953
      %v956 = vshrl.u32 %v941, 16
      %v958 = vshll.u32 %v941, 16
      %v960 = vrot.slane %v958, 1
      %v961 = vor.u32 %v956, %v960
      %v963 = vshrl.u32 %v942, 16
      %v965 = vshll.u32 %v942, 16
      %v967 = vrot.slane %v965, 1
      %v968 = vor.u32 %v963, %v967
      %v970 = vshrl.u32 %v943, 16
      %v972 = vshll.u32 %v943, 16
      %v974 = vrot.slane %v972, 1
      %v975 = vor.u32 %v970, %v974
      %v977 = vshrl.u32 %v944, 16
      %v979 = vshll.u32 %v944, 16
      %v981 = vrot.slane %v979, 1
      %v982 = vor.u32 %v977, %v981
      %v984 = vshrl.u32 %v945, 16
      %v986 = vshll.u32 %v945, 16
      %v988 = vrot.slane %v986, 1
      %v989 = vor.u32 %v984, %v988
      %v991 = vshrl.u32 %v946, 16
      %v993 = vshll.u32 %v946, 16
      %v995 = vrot.slane %v993, 1
      %v996 = vor.u32 %v991, %v995
      %v998 = vshrl.u32 %v947, 16
      %v1000 = vshll.u32 %v947, 16
      %v1002 = vrot.slane %v1000, 1
      %v1003 = vor.u32 %v998, %v1002
      %1004 = vrot.lane.b32.xlu0 %v954, 28
      %v1005 = vpop.permute.xlu0 %1004
      %1006 = vrot.lane.b32.xlu0 %v961, 28
      %v1007 = vpop.permute.xlu0 %1006
      %1008 = vrot.lane.b32.xlu0 %v968, 28
      %v1009 = vpop.permute.xlu0 %1008
      %1010 = vrot.lane.b32.xlu0 %v975, 28
      %v1011 = vpop.permute.xlu0 %1010
      %1012 = vrot.lane.b32.xlu0 %v982, 28
      %v1013 = vpop.permute.xlu0 %1012
      %1014 = vrot.lane.b32.xlu0 %v989, 28
      %v1015 = vpop.permute.xlu0 %1014
      %1016 = vrot.lane.b32.xlu0 %v996, 28
      %v1017 = vpop.permute.xlu0 %1016
      %1018 = vrot.lane.b32.xlu0 %v1003, 28
      %v1019 = vpop.permute.xlu0 %1018
      %v1028 = vunpack.c.l.b16 %v388
      %v1029 = vunpack.c.l.b16 %v389
      %v1030 = vunpack.c.l.b16 %v390
      %v1031 = vunpack.c.l.b16 %v391
      %v1032 = vunpack.c.l.b16 %v392
      %v1033 = vunpack.c.l.b16 %v393
      %v1034 = vunpack.c.l.b16 %v394
      %v1035 = vunpack.c.l.b16 %v395
      %v1036 = vpack.c.b16 %v1028, %v876
      %v1037 = vpack.c.b16 %v1029, %v877
      %v1038 = vpack.c.b16 %v1030, %v878
      %v1039 = vpack.c.b16 %v1031, %v879
      %v1040 = vpack.c.b16 %v1032, %v880
      %v1041 = vpack.c.b16 %v1033, %v881
      %v1042 = vpack.c.b16 %v1034, %v882
      %v1043 = vpack.c.b16 %v1035, %v883
      %v1045 = vshrl.u32 %v1036, 16
      %v1047 = vshll.u32 %v1036, 16
      %v1049 = vrot.slane %v1047, 1
      %v1050 = vor.u32 %v1045, %v1049
      %v1052 = vshrl.u32 %v1037, 16
      %v1054 = vshll.u32 %v1037, 16
      %v1056 = vrot.slane %v1054, 1
      %v1057 = vor.u32 %v1052, %v1056
      %v1059 = vshrl.u32 %v1038, 16
      %v1061 = vshll.u32 %v1038, 16
      %v1063 = vrot.slane %v1061, 1
      %v1064 = vor.u32 %v1059, %v1063
      %v1066 = vshrl.u32 %v1039, 16
      %v1068 = vshll.u32 %v1039, 16
      %v1070 = vrot.slane %v1068, 1
      %v1071 = vor.u32 %v1066, %v1070
      %v1073 = vshrl.u32 %v1040, 16
      %v1075 = vshll.u32 %v1040, 16
      %v1077 = vrot.slane %v1075, 1
      %v1078 = vor.u32 %v1073, %v1077
      %v1080 = vshrl.u32 %v1041, 16
      %v1082 = vshll.u32 %v1041, 16
      %v1084 = vrot.slane %v1082, 1
      %v1085 = vor.u32 %v1080, %v1084
      %v1087 = vshrl.u32 %v1042, 16
      %v1089 = vshll.u32 %v1042, 16
      %v1091 = vrot.slane %v1089, 1
      %v1092 = vor.u32 %v1087, %v1091
      %v1094 = vshrl.u32 %v1043, 16
      %v1096 = vshll.u32 %v1043, 16
      %v1098 = vrot.slane %v1096, 1
      %v1099 = vor.u32 %v1094, %v1098
      %1100 = vrot.lane.b32.xlu0 %v1050, 32
      %v1101 = vpop.permute.xlu0 %1100
      %1102 = vrot.lane.b32.xlu0 %v1057, 32
      %v1103 = vpop.permute.xlu0 %1102
      %1104 = vrot.lane.b32.xlu0 %v1064, 32
      %v1105 = vpop.permute.xlu0 %1104
      %1106 = vrot.lane.b32.xlu0 %v1071, 32
      %v1107 = vpop.permute.xlu0 %1106
      %1108 = vrot.lane.b32.xlu0 %v1078, 32
      %v1109 = vpop.permute.xlu0 %1108
      %1110 = vrot.lane.b32.xlu0 %v1085, 32
      %v1111 = vpop.permute.xlu0 %1110
      %1112 = vrot.lane.b32.xlu0 %v1092, 32
      %v1113 = vpop.permute.xlu0 %1112
      %1114 = vrot.lane.b32.xlu0 %v1099, 32
      %v1115 = vpop.permute.xlu0 %1114
      %vm1116 = vcmask 31744
      %v1119 = vsel %vm1116, %v298, %v493
      %v1122 = vsel %vm1116, %v299, %v495
      %v1125 = vsel %vm1116, %v300, %v497
      %v1128 = vsel %vm1116, %v301, %v499
      %v1131 = vsel %vm1116, %v302, %v501
      %v1134 = vsel %vm1116, %v303, %v503
      %v1137 = vsel %vm1116, %v304, %v505
      %v1140 = vsel %vm1116, %v305, %v507
      %v1142 = vsel %vm226, %v1119, %v605
      %v1144 = vsel %vm226, %v1122, %v607
      %v1146 = vsel %vm226, %v1125, %v609
      %v1148 = vsel %vm226, %v1128, %v611
      %v1150 = vsel %vm226, %v1131, %v613
      %v1152 = vsel %vm226, %v1134, %v615
      %v1154 = vsel %vm226, %v1137, %v617
      %v1156 = vsel %vm226, %v1140, %v619
      %vm1157 = vcmask 97280
      %v1159 = vsel %vm1157, %v1142, %v645
      %v1161 = vsel %vm1157, %v1144, %v647
      %v1163 = vsel %vm1157, %v1146, %v649
      %v1165 = vsel %vm1157, %v1148, %v651
      %v1167 = vsel %vm1157, %v1150, %v653
      %v1169 = vsel %vm1157, %v1152, %v655
      %v1171 = vsel %vm1157, %v1154, %v657
      %v1173 = vsel %vm1157, %v1156, %v659
      %vm1174 = vcmask 130048
      %v1176 = vsel %vm1174, %v1159, %v757
      %v1178 = vsel %vm1174, %v1161, %v759
      %v1180 = vsel %vm1174, %v1163, %v761
      %v1182 = vsel %vm1174, %v1165, %v763
      %v1184 = vsel %vm1174, %v1167, %v765
      %v1186 = vsel %vm1174, %v1169, %v767
      %v1188 = vsel %vm1174, %v1171, %v769
      %v1190 = vsel %vm1174, %v1173, %v771
      %vm1191 = vcmask 162816
      %v1193 = vsel %vm1191, %v1176, %v853
      %v1195 = vsel %vm1191, %v1178, %v855
      %v1197 = vsel %vm1191, %v1180, %v857
      %v1199 = vsel %vm1191, %v1182, %v859
      %v1201 = vsel %vm1191, %v1184, %v861
      %v1203 = vsel %vm1191, %v1186, %v863
      %v1205 = vsel %vm1191, %v1188, %v865
      %v1207 = vsel %vm1191, %v1190, %v867
      %vm1208 = vcmask 195584
      %v1210 = vsel %vm1208, %v1193, %v893
      %v1212 = vsel %vm1208, %v1195, %v895
      %v1214 = vsel %vm1208, %v1197, %v897
      %v1216 = vsel %vm1208, %v1199, %v899
      %v1218 = vsel %vm1208, %v1201, %v901
      %v1220 = vsel %vm1208, %v1203, %v903
      %v1222 = vsel %vm1208, %v1205, %v905
      %v1224 = vsel %vm1208, %v1207, %v907
      %vm1225 = vcmask 228352
      %v1227 = vsel %vm1225, %v1210, %v1005
      %v1229 = vsel %vm1225, %v1212, %v1007
      %v1231 = vsel %vm1225, %v1214, %v1009
      %v1233 = vsel %vm1225, %v1216, %v1011
      %v1235 = vsel %vm1225, %v1218, %v1013
      %v1237 = vsel %vm1225, %v1220, %v1015
      %v1239 = vsel %vm1225, %v1222, %v1017
      %v1241 = vsel %vm1225, %v1224, %v1019
      %vm1242 = vcmask 261120
      %v1244 = vsel %vm1242, %v1227, %v1101
      %v1246 = vsel %vm1242, %v1229, %v1103
      %v1248 = vsel %vm1242, %v1231, %v1105
      %v1250 = vsel %vm1242, %v1233, %v1107
      %v1252 = vsel %vm1242, %v1235, %v1109
      %v1254 = vsel %vm1242, %v1237, %v1111
      %v1256 = vsel %vm1242, %v1239, %v1113
      %v1258 = vsel %vm1242, %v1241, %v1115
      %v1260 = vlaneseq
      %v1261 = vshrl.u32 %v1260, 7
      %v1262 = vsub.s32 0, %v1261
      %v1263 = vrot.slane %v282, %v1262
      %v1273 = vunpack.c.l.b16 %v1244
      %v1274 = vunpack.c.l.b16 %v1246
      %v1275 = vunpack.c.l.b16 %v1248
      %v1276 = vunpack.c.l.b16 %v1250
      %v1277 = vunpack.c.l.b16 %v1252
      %v1278 = vunpack.c.l.b16 %v1254
      %v1279 = vunpack.c.l.b16 %v1256
      %v1280 = vunpack.c.l.b16 %v1258
      %v1281 = vpack.c.b16 %v1274, %v1273
      %v1282 = vpack.c.b16 %v1276, %v1275
      %v1283 = vpack.c.b16 %v1278, %v1277
      %v1284 = vpack.c.b16 %v1280, %v1279
      %v1290 = vunpack.c.l.b16 %v284
      %v1291 = vunpack.c.l.b16 %v285
      %v1292 = vunpack.c.l.b16 %v286
      %v1293 = vunpack.c.l.b16 %v287
      %v1294 = vunpack.c.l.b16 %v288
      %v1295 = vpack.c.b16 %v1291, %v1290
      %v1296 = vpack.c.b16 %v1293, %v1292
      %v1297 = vpack.c.b16 %v1294, %v1294
      %vm1300 = vcmask 293888
      %v1302 = vsel %vm1300, %v1281, 0
      %v1305 = vsel %vm1300, %v1282, 0
      %v1308 = vsel %vm1300, %v1283, 0
      %v1311 = vsel %vm1300, %v1284, 0
      %vm1313 = vcmask 1041408
      %v1315 = vsel %vm1313, %v1297, 0
      %1317 = vmatprep.subr.bf16.mxu0 0
      %1318 = vmatpush1.bf16.msra.mxu0 %v1295
      %1319 = vmatprep.subr.bf16.mxu0 0
      %1320 = vmatpush1.bf16.msra.mxu0 %v1296
      %1321 = vmatprep.subr.bf16.mxu0 0
      %1322 = vmatpush1.bf16.msra.mxu0 %v1315
      %1323 = vmatprep.subr.bf16.mxu0 0
      %1324 = vmatpush1.bf16.msra.mxu0 0
      %1325 = vmatprep.subr.bf16.mxu0 0
      %1326 = vmatpush1.bf16.msra.mxu0 0
      %1327 = vmatprep.subr.bf16.mxu0 0
      %1328 = vmatpush1.bf16.msra.mxu0 0
      %1329 = vmatprep.subr.bf16.mxu0 0
      %1330 = vmatpush1.bf16.msra.mxu0 0
      %1331 = vmatprep.subr.bf16.mxu0 0
      %1332 = vmatpush1.bf16.msra.mxu0 0
      %1333 = vmatprep.subr.bf16.mxu0 0
      %1334 = vmatpush1.bf16.msra.mxu0 0
      %1335 = vmatprep.subr.bf16.mxu0 0
      %1336 = vmatpush1.bf16.msra.mxu0 0
      %1337 = vmatprep.subr.bf16.mxu0 0
      %1338 = vmatpush1.bf16.msra.mxu0 0
      %1339 = vmatprep.subr.bf16.mxu0 0
      %1340 = vmatpush1.bf16.msra.mxu0 0
      %1341 = vmatprep.subr.bf16.mxu0 0
      %1342 = vmatpush1.bf16.msra.mxu0 0
      %1343 = vmatprep.subr.bf16.mxu0 0
      %1344 = vmatpush1.bf16.msra.mxu0 0
      %1345 = vmatprep.subr.bf16.mxu0 0
      %1346 = vmatpush1.bf16.msra.mxu0 0
      %1347 = vmatprep.subr.bf16.mxu0 0
      %1348 = vmatpush1.bf16.msra.mxu0 0
      %1349 = vmatprep.mubr.bf16.mxu0 0
      %1350 = vmatmul.mubr.bf16.gmra.mrb[0].mxu0 %v1302
      %v1351 = vpop.f32.mrb[0].mxu0
      %v1352 = vadd.f32 %v1263, %v1351
      %v1353 = vpop.f32.mrb[0].mxu0
      %v1354 = vpop.f32.mrb[0].mxu0
      %v1355 = vadd.f32 %v1263, %v1354
      %v1356 = vpop.f32.mrb[0].mxu0
      %1357 = vmatprep.mubr.bf16.mxu0 0
      %1358 = vmatmul.mubr.bf16.gmra.mrb[0].mxu0 %v1305
      %v1359 = vpop.f32.mrb[0].mxu0
      %v1360 = vadd.f32 %v1263, %v1359
      %v1361 = vpop.f32.mrb[0].mxu0
      %v1362 = vpop.f32.mrb[0].mxu0
      %v1363 = vadd.f32 %v1263, %v1362
      %v1364 = vpop.f32.mrb[0].mxu0
      %1365 = vmatprep.mubr.bf16.mxu0 0
      %1366 = vmatmul.mubr.bf16.gmra.mrb[0].mxu0 %v1308
      %v1367 = vpop.f32.mrb[0].mxu0
      %v1368 = vadd.f32 %v1263, %v1367
      %v1369 = vpop.f32.mrb[0].mxu0
      %v1370 = vpop.f32.mrb[0].mxu0
      %v1371 = vadd.f32 %v1263, %v1370
      %v1372 = vpop.f32.mrb[0].mxu0
      %1373 = vmatprep.mubr.bf16.mxu0 0
      %1374 = vmatmul.mubr.bf16.gmra.mrb[0].mxu0 %v1311
      %v1375 = vpop.f32.mrb[0].mxu0
      %v1376 = vadd.f32 %v1263, %v1375
      %v1377 = vpop.f32.mrb[0].mxu0
      %v1378 = vpop.f32.mrb[0].mxu0
      %v1379 = vadd.f32 %v1263, %v1378
      %v1380 = vpop.f32.mrb[0].mxu0
      %1381 = vdwg.mxu0
      %v1382 = vmax.f32 %v1352, 0.0
      %v1383 = vmax.f32 %v1355, 0.0
      %v1384 = vmax.f32 %v1360, 0.0
      %v1385 = vmax.f32 %v1363, 0.0
      %v1386 = vmax.f32 %v1368, 0.0
      %v1387 = vmax.f32 %v1371, 0.0
      %v1388 = vmax.f32 %v1376, 0.0
      %v1389 = vmax.f32 %v1379, 0.0
      %s1390 = scalar_lea.vmem [#allocation2], 216
      %1391 = vst.msk [vmem:[%s1390 + $0x9] sm:$0xff] %vm226, %v1382
      %1392 = vst.msk [vmem:[%s1390 + $0x21] sm:$0xff] %vm226, %v1383
      %1393 = vst.msk [vmem:[%s1390 + $0x39] sm:$0xff] %vm226, %v1384
      %1394 = vst.msk [vmem:[%s1390 + $0x51] sm:$0xff] %vm226, %v1385
      %1395 = vst.msk [vmem:[%s1390 + $0x69] sm:$0xff] %vm226, %v1386
      %1396 = vst.msk [vmem:[%s1390 + $0x81] sm:$0xff] %vm226, %v1387
      %1397 = vst.msk [vmem:[%s1390 + $0x99] sm:$0xff] %vm226, %v1388
      %1398 = vst.msk [vmem:[%s1390 + $0xb1] sm:$0xff] %vm226, %v1389
      %v1399 = vld [vmem:[%s219 + $0x4] sm:$0xf]
      %v1400 = vld [vmem:[%s219 + $0x8] sm:$0x1]
      %v1401 = vld [vmem:[%s219 + $0x10] sm:$0xf]
      %v1402 = vld [vmem:[%s219 + $0x14] sm:$0x1]
      %v1403 = vld [vmem:[%s219 + $0x1c] sm:$0xf]
      %v1404 = vld [vmem:[%s219 + $0x20] sm:$0x1]
      %v1405 = vld [vmem:[%s219 + $0x28] sm:$0xf]
      %v1406 = vld [vmem:[%s219 + $0x2c] sm:$0x1]
      %v1407 = vld [vmem:[%s219 + $0x34] sm:$0xf]
      %v1408 = vld [vmem:[%s219 + $0x38] sm:$0x1]
      %v1409 = vld [vmem:[%s219 + $0x40] sm:$0xf]
      %v1410 = vld [vmem:[%s219 + $0x44] sm:$0x1]
      %v1411 = vld [vmem:[%s219 + $0x4c] sm:$0xf]
      %v1412 = vld [vmem:[%s219 + $0x50] sm:$0x1]
      %v1413 = vld [vmem:[%s219 + $0x58] sm:$0xf]
      %v1414 = vld [vmem:[%s219 + $0x5c] sm:$0x1]
      %v1415 = vld [vmem:[%s219] sm:$0xf]
      %v1416 = vld [vmem:[%s219 + $0x4] sm:$0x1]
      %v1417 = vld [vmem:[%s219 + $0xc] sm:$0xf]
      %v1418 = vld [vmem:[%s219 + $0x10] sm:$0x1]
      %v1419 = vld [vmem:[%s219 + $0x18] sm:$0xf]
      %v1420 = vld [vmem:[%s219 + $0x1c] sm:$0x1]
      %v1421 = vld [vmem:[%s219 + $0x24] sm:$0xf]
      %v1422 = vld [vmem:[%s219 + $0x28] sm:$0x1]
      %v1423 = vld [vmem:[%s219 + $0x30] sm:$0xf]
      %v1424 = vld [vmem:[%s219 + $0x34] sm:$0x1]
      %v1425 = vld [vmem:[%s219 + $0x3c] sm:$0xf]
      %v1426 = vld [vmem:[%s219 + $0x40] sm:$0x1]
      %v1427 = vld [vmem:[%s219 + $0x48] sm:$0xf]
      %v1428 = vld [vmem:[%s219 + $0x4c] sm:$0x1]
      %v1429 = vld [vmem:[%s219 + $0x54] sm:$0xf]
      %v1430 = vld [vmem:[%s219 + $0x58] sm:$0x1]
      %v1431 = vld [vmem:[%s219 + $0x4] sm:$0xe]
      %v1432 = vld [vmem:[%s219 + $0x10] sm:$0xe]
      %v1433 = vld [vmem:[%s219 + $0x1c] sm:$0xe]
      %v1434 = vld [vmem:[%s219 + $0x28] sm:$0xe]
      %v1435 = vld [vmem:[%s219 + $0x34] sm:$0xe]
      %v1436 = vld [vmem:[%s219 + $0x40] sm:$0xe]
      %v1437 = vld [vmem:[%s219 + $0x4c] sm:$0xe]
      %v1438 = vld [vmem:[%s219 + $0x58] sm:$0xe]
      %v1439 = vld [vmem:[%s330 + $0x4] sm:$0xf]
      %v1440 = vld [vmem:[%s330 + $0x8] sm:$0x1]
      %v1441 = vld [vmem:[%s330 + $0x10] sm:$0xf]
      %v1442 = vld [vmem:[%s330 + $0x14] sm:$0x1]
      %v1443 = vld [vmem:[%s330 + $0x1c] sm:$0xf]
      %v1444 = vld [vmem:[%s330 + $0x20] sm:$0x1]
      %v1445 = vld [vmem:[%s330 + $0x28] sm:$0xf]
      %v1446 = vld [vmem:[%s330 + $0x2c] sm:$0x1]
      %v1447 = vld [vmem:[%s330 + $0x34] sm:$0xf]
      %v1448 = vld [vmem:[%s330 + $0x38] sm:$0x1]
      %v1449 = vld [vmem:[%s330 + $0x40] sm:$0xf]
      %v1450 = vld [vmem:[%s330 + $0x44] sm:$0x1]
      %v1451 = vld [vmem:[%s330 + $0x4c] sm:$0xf]
      %v1452 = vld [vmem:[%s330 + $0x50] sm:$0x1]
      %v1453 = vld [vmem:[%s330 + $0x58] sm:$0xf]
      %v1454 = vld [vmem:[%s330 + $0x5c] sm:$0x1]
      %v1455 = vld [vmem:[%s330] sm:$0xf]
      %v1456 = vld [vmem:[%s330 + $0x4] sm:$0x1]
      %v1457 = vld [vmem:[%s330 + $0xc] sm:$0xf]
      %v1458 = vld [vmem:[%s330 + $0x10] sm:$0x1]
      %v1459 = vld [vmem:[%s330 + $0x18] sm:$0xf]
      %v1460 = vld [vmem:[%s330 + $0x1c] sm:$0x1]
      %v1461 = vld [vmem:[%s330 + $0x24] sm:$0xf]
      %v1462 = vld [vmem:[%s330 + $0x28] sm:$0x1]
      %v1463 = vld [vmem:[%s330 + $0x30] sm:$0xf]
      %v1464 = vld [vmem:[%s330 + $0x34] sm:$0x1]
      %v1465 = vld [vmem:[%s330 + $0x3c] sm:$0xf]
      %v1466 = vld [vmem:[%s330 + $0x40] sm:$0x1]
      %v1467 = vld [vmem:[%s330 + $0x48] sm:$0xf]
      %v1468 = vld [vmem:[%s330 + $0x4c] sm:$0x1]
      %v1469 = vld [vmem:[%s330 + $0x54] sm:$0xf]
      %v1470 = vld [vmem:[%s330 + $0x58] sm:$0x1]
      %v1471 = vld [vmem:[%s330 + $0x4] sm:$0xe]
      %v1472 = vld [vmem:[%s330 + $0x10] sm:$0xe]
      %v1473 = vld [vmem:[%s330 + $0x1c] sm:$0xe]
      %v1474 = vld [vmem:[%s330 + $0x28] sm:$0xe]
      %v1475 = vld [vmem:[%s330 + $0x34] sm:$0xe]
      %v1476 = vld [vmem:[%s330 + $0x40] sm:$0xe]
      %v1477 = vld [vmem:[%s330 + $0x4c] sm:$0xe]
      %v1478 = vld [vmem:[%s330 + $0x58] sm:$0xe]
      %v1479 = vld [vmem:[%s363 + $0x4] sm:$0xf]
      %v1480 = vld [vmem:[%s363 + $0x8] sm:$0x1]
      %v1481 = vld [vmem:[%s363 + $0x10] sm:$0xf]
      %v1482 = vld [vmem:[%s363 + $0x14] sm:$0x1]
      %v1483 = vld [vmem:[%s363 + $0x1c] sm:$0xf]
      %v1484 = vld [vmem:[%s363 + $0x20] sm:$0x1]
      %v1485 = vld [vmem:[%s363 + $0x28] sm:$0xf]
      %v1486 = vld [vmem:[%s363 + $0x2c] sm:$0x1]
      %v1487 = vld [vmem:[%s363 + $0x34] sm:$0xf]
      %v1488 = vld [vmem:[%s363 + $0x38] sm:$0x1]
      %v1489 = vld [vmem:[%s363 + $0x40] sm:$0xf]
      %v1490 = vld [vmem:[%s363 + $0x44] sm:$0x1]
      %v1491 = vld [vmem:[%s363 + $0x4c] sm:$0xf]
      %v1492 = vld [vmem:[%s363 + $0x50] sm:$0x1]
      %v1493 = vld [vmem:[%s363 + $0x58] sm:$0xf]
      %v1494 = vld [vmem:[%s363 + $0x5c] sm:$0x1]
      %v1495 = vld [vmem:[%s363] sm:$0xf]
      %v1496 = vld [vmem:[%s363 + $0x4] sm:$0x1]
      %v1497 = vld [vmem:[%s363 + $0xc] sm:$0xf]
      %v1498 = vld [vmem:[%s363 + $0x10] sm:$0x1]
      %v1499 = vld [vmem:[%s363 + $0x18] sm:$0xf]
      %v1500 = vld [vmem:[%s363 + $0x1c] sm:$0x1]
      %v1501 = vld [vmem:[%s363 + $0x24] sm:$0xf]
      %v1502 = vld [vmem:[%s363 + $0x28] sm:$0x1]
      %v1503 = vld [vmem:[%s363 + $0x30] sm:$0xf]
      %v1504 = vld [vmem:[%s363 + $0x34] sm:$0x1]
      %v1505 = vld [vmem:[%s363 + $0x3c] sm:$0xf]
      %v1506 = vld [vmem:[%s363 + $0x40] sm:$0x1]
      %v1507 = vld [vmem:[%s363 + $0x48] sm:$0xf]
      %v1508 = vld [vmem:[%s363 + $0x4c] sm:$0x1]
      %v1509 = vld [vmem:[%s363 + $0x54] sm:$0xf]
      %v1510 = vld [vmem:[%s363 + $0x58] sm:$0x1]
      %v1511 = vld [vmem:[%s363 + $0x4] sm:$0xe]
      %v1512 = vld [vmem:[%s363 + $0x10] sm:$0xe]
      %v1513 = vld [vmem:[%s363 + $0x1c] sm:$0xe]
      %v1514 = vld [vmem:[%s363 + $0x28] sm:$0xe]
      %v1515 = vld [vmem:[%s363 + $0x34] sm:$0xe]
      %v1516 = vld [vmem:[%s363 + $0x40] sm:$0xe]
      %v1517 = vld [vmem:[%s363 + $0x4c] sm:$0xe]
      %v1518 = vld [vmem:[%s363 + $0x58] sm:$0xe]
      %v1535 = vunpack.c.l.b16 %v1399
      %v1536 = vunpack.c.l.b16 %v1400
      %v1537 = vunpack.c.l.b16 %v1401
      %v1538 = vunpack.c.l.b16 %v1402
      %v1539 = vunpack.c.l.b16 %v1403
      %v1540 = vunpack.c.l.b16 %v1404
      %v1541 = vunpack.c.l.b16 %v1405
      %v1542 = vunpack.c.l.b16 %v1406
      %v1543 = vunpack.c.l.b16 %v1407
      %v1544 = vunpack.c.l.b16 %v1408
      %v1545 = vunpack.c.l.b16 %v1409
      %v1546 = vunpack.c.l.b16 %v1410
      %v1547 = vunpack.c.l.b16 %v1411
      %v1548 = vunpack.c.l.b16 %v1412
      %v1549 = vunpack.c.l.b16 %v1413
      %v1550 = vunpack.c.l.b16 %v1414
      %v1551 = vpack.c.b16 %v1536, %v1535
      %v1552 = vpack.c.b16 %v1538, %v1537
      %v1553 = vpack.c.b16 %v1540, %v1539
      %v1554 = vpack.c.b16 %v1542, %v1541
      %v1555 = vpack.c.b16 %v1544, %v1543
      %v1556 = vpack.c.b16 %v1546, %v1545
      %v1557 = vpack.c.b16 %v1548, %v1547
      %v1558 = vpack.c.b16 %v1550, %v1549
      %v1575 = vunpack.c.l.b16 %v1415
      %v1576 = vunpack.c.l.b16 %v1416
      %v1577 = vunpack.c.l.b16 %v1417
      %v1578 = vunpack.c.l.b16 %v1418
      %v1579 = vunpack.c.l.b16 %v1419
      %v1580 = vunpack.c.l.b16 %v1420
      %v1581 = vunpack.c.l.b16 %v1421
      %v1582 = vunpack.c.l.b16 %v1422
      %v1583 = vunpack.c.l.b16 %v1423
      %v1584 = vunpack.c.l.b16 %v1424
      %v1585 = vunpack.c.l.b16 %v1425
      %v1586 = vunpack.c.l.b16 %v1426
      %v1587 = vunpack.c.l.b16 %v1427
      %v1588 = vunpack.c.l.b16 %v1428
      %v1589 = vunpack.c.l.b16 %v1429
      %v1590 = vunpack.c.l.b16 %v1430
      %v1591 = vpack.c.b16 %v1576, %v1575
      %v1592 = vpack.c.b16 %v1578, %v1577
      %v1593 = vpack.c.b16 %v1580, %v1579
      %v1594 = vpack.c.b16 %v1582, %v1581
      %v1595 = vpack.c.b16 %v1584, %v1583
      %v1596 = vpack.c.b16 %v1586, %v1585
      %v1597 = vpack.c.b16 %v1588, %v1587
      %v1598 = vpack.c.b16 %v1590, %v1589
      %1599 = vrot.lane.b32.xlu0 %v1591, 4
      %v1600 = vpop.permute.xlu0 %1599
      %1601 = vrot.lane.b32.xlu0 %v1592, 4
      %v1602 = vpop.permute.xlu0 %1601
      %1603 = vrot.lane.b32.xlu0 %v1593, 4
      %v1604 = vpop.permute.xlu0 %1603
      %1605 = vrot.lane.b32.xlu0 %v1594, 4
      %v1606 = vpop.permute.xlu0 %1605
      %1607 = vrot.lane.b32.xlu0 %v1595, 4
      %v1608 = vpop.permute.xlu0 %1607
      %1609 = vrot.lane.b32.xlu0 %v1596, 4
      %v1610 = vpop.permute.xlu0 %1609
      %1611 = vrot.lane.b32.xlu0 %v1597, 4
      %v1612 = vpop.permute.xlu0 %1611
      %1613 = vrot.lane.b32.xlu0 %v1598, 4
      %v1614 = vpop.permute.xlu0 %1613
      %v1623 = vunpack.c.l.b16 %v1431
      %v1624 = vunpack.c.l.b16 %v1432
      %v1625 = vunpack.c.l.b16 %v1433
      %v1626 = vunpack.c.l.b16 %v1434
      %v1627 = vunpack.c.l.b16 %v1435
      %v1628 = vunpack.c.l.b16 %v1436
      %v1629 = vunpack.c.l.b16 %v1437
      %v1630 = vunpack.c.l.b16 %v1438
      %v1631 = vpack.c.b16 %v1536, %v1623
      %v1632 = vpack.c.b16 %v1538, %v1624
      %v1633 = vpack.c.b16 %v1540, %v1625
      %v1634 = vpack.c.b16 %v1542, %v1626
      %v1635 = vpack.c.b16 %v1544, %v1627
      %v1636 = vpack.c.b16 %v1546, %v1628
      %v1637 = vpack.c.b16 %v1548, %v1629
      %v1638 = vpack.c.b16 %v1550, %v1630
      %v1640 = vshrl.u32 %v1631, 16
      %v1642 = vshll.u32 %v1631, 16
      %v1644 = vrot.slane %v1642, 1
      %v1645 = vor.u32 %v1640, %v1644
      %v1647 = vshrl.u32 %v1632, 16
      %v1649 = vshll.u32 %v1632, 16
      %v1651 = vrot.slane %v1649, 1
      %v1652 = vor.u32 %v1647, %v1651
      %v1654 = vshrl.u32 %v1633, 16
      %v1656 = vshll.u32 %v1633, 16
      %v1658 = vrot.slane %v1656, 1
      %v1659 = vor.u32 %v1654, %v1658
      %v1661 = vshrl.u32 %v1634, 16
      %v1663 = vshll.u32 %v1634, 16
      %v1665 = vrot.slane %v1663, 1
      %v1666 = vor.u32 %v1661, %v1665
      %v1668 = vshrl.u32 %v1635, 16
      %v1670 = vshll.u32 %v1635, 16
      %v1672 = vrot.slane %v1670, 1
      %v1673 = vor.u32 %v1668, %v1672
      %v1675 = vshrl.u32 %v1636, 16
      %v1677 = vshll.u32 %v1636, 16
      %v1679 = vrot.slane %v1677, 1
      %v1680 = vor.u32 %v1675, %v1679
      %v1682 = vshrl.u32 %v1637, 16
      %v1684 = vshll.u32 %v1637, 16
      %v1686 = vrot.slane %v1684, 1
      %v1687 = vor.u32 %v1682, %v1686
      %v1689 = vshrl.u32 %v1638, 16
      %v1691 = vshll.u32 %v1638, 16
      %v1693 = vrot.slane %v1691, 1
      %v1694 = vor.u32 %v1689, %v1693
      %1695 = vrot.lane.b32.xlu0 %v1645, 8
      %v1696 = vpop.permute.xlu0 %1695
      %1697 = vrot.lane.b32.xlu0 %v1652, 8
      %v1698 = vpop.permute.xlu0 %1697
      %1699 = vrot.lane.b32.xlu0 %v1659, 8
      %v1700 = vpop.permute.xlu0 %1699
      %1701 = vrot.lane.b32.xlu0 %v1666, 8
      %v1702 = vpop.permute.xlu0 %1701
      %1703 = vrot.lane.b32.xlu0 %v1673, 8
      %v1704 = vpop.permute.xlu0 %1703
      %1705 = vrot.lane.b32.xlu0 %v1680, 8
      %v1706 = vpop.permute.xlu0 %1705
      %1707 = vrot.lane.b32.xlu0 %v1687, 8
      %v1708 = vpop.permute.xlu0 %1707
      %1709 = vrot.lane.b32.xlu0 %v1694, 8
      %v1710 = vpop.permute.xlu0 %1709
      %v1727 = vunpack.c.l.b16 %v1439
      %v1728 = vunpack.c.l.b16 %v1440
      %v1729 = vunpack.c.l.b16 %v1441
      %v1730 = vunpack.c.l.b16 %v1442
      %v1731 = vunpack.c.l.b16 %v1443
      %v1732 = vunpack.c.l.b16 %v1444
      %v1733 = vunpack.c.l.b16 %v1445
      %v1734 = vunpack.c.l.b16 %v1446
      %v1735 = vunpack.c.l.b16 %v1447
      %v1736 = vunpack.c.l.b16 %v1448
      %v1737 = vunpack.c.l.b16 %v1449
      %v1738 = vunpack.c.l.b16 %v1450
      %v1739 = vunpack.c.l.b16 %v1451
      %v1740 = vunpack.c.l.b16 %v1452
      %v1741 = vunpack.c.l.b16 %v1453
      %v1742 = vunpack.c.l.b16 %v1454
      %v1743 = vpack.c.b16 %v1728, %v1727
      %v1744 = vpack.c.b16 %v1730, %v1729
      %v1745 = vpack.c.b16 %v1732, %v1731
      %v1746 = vpack.c.b16 %v1734, %v1733
      %v1747 = vpack.c.b16 %v1736, %v1735
      %v1748 = vpack.c.b16 %v1738, %v1737
      %v1749 = vpack.c.b16 %v1740, %v1739
      %v1750 = vpack.c.b16 %v1742, %v1741
      %1751 = vrot.lane.b32.xlu0 %v1743, 12
      %v1752 = vpop.permute.xlu0 %1751
      %1753 = vrot.lane.b32.xlu0 %v1744, 12
      %v1754 = vpop.permute.xlu0 %1753
      %1755 = vrot.lane.b32.xlu0 %v1745, 12
      %v1756 = vpop.permute.xlu0 %1755
      %1757 = vrot.lane.b32.xlu0 %v1746, 12
      %v1758 = vpop.permute.xlu0 %1757
      %1759 = vrot.lane.b32.xlu0 %v1747, 12
      %v1760 = vpop.permute.xlu0 %1759
      %1761 = vrot.lane.b32.xlu0 %v1748, 12
      %v1762 = vpop.permute.xlu0 %1761
      %1763 = vrot.lane.b32.xlu0 %v1749, 12
      %v1764 = vpop.permute.xlu0 %1763
      %1765 = vrot.lane.b32.xlu0 %v1750, 12
      %v1766 = vpop.permute.xlu0 %1765
      %v1783 = vunpack.c.l.b16 %v1455
      %v1784 = vunpack.c.l.b16 %v1456
      %v1785 = vunpack.c.l.b16 %v1457
      %v1786 = vunpack.c.l.b16 %v1458
      %v1787 = vunpack.c.l.b16 %v1459
      %v1788 = vunpack.c.l.b16 %v1460
      %v1789 = vunpack.c.l.b16 %v1461
      %v1790 = vunpack.c.l.b16 %v1462
      %v1791 = vunpack.c.l.b16 %v1463
      %v1792 = vunpack.c.l.b16 %v1464
      %v1793 = vunpack.c.l.b16 %v1465
      %v1794 = vunpack.c.l.b16 %v1466
      %v1795 = vunpack.c.l.b16 %v1467
      %v1796 = vunpack.c.l.b16 %v1468
      %v1797 = vunpack.c.l.b16 %v1469
      %v1798 = vunpack.c.l.b16 %v1470
      %v1799 = vpack.c.b16 %v1784, %v1783
      %v1800 = vpack.c.b16 %v1786, %v1785
      %v1801 = vpack.c.b16 %v1788, %v1787
      %v1802 = vpack.c.b16 %v1790, %v1789
      %v1803 = vpack.c.b16 %v1792, %v1791
      %v1804 = vpack.c.b16 %v1794, %v1793
      %v1805 = vpack.c.b16 %v1796, %v1795
      %v1806 = vpack.c.b16 %v1798, %v1797
      %1807 = vrot.lane.b32.xlu0 %v1799, 16
      %v1808 = vpop.permute.xlu0 %1807
      %1809 = vrot.lane.b32.xlu0 %v1800, 16
      %v1810 = vpop.permute.xlu0 %1809
      %1811 = vrot.lane.b32.xlu0 %v1801, 16
      %v1812 = vpop.permute.xlu0 %1811
      %1813 = vrot.lane.b32.xlu0 %v1802, 16
      %v1814 = vpop.permute.xlu0 %1813
      %1815 = vrot.lane.b32.xlu0 %v1803, 16
      %v1816 = vpop.permute.xlu0 %1815
      %1817 = vrot.lane.b32.xlu0 %v1804, 16
      %v1818 = vpop.permute.xlu0 %1817
      %1819 = vrot.lane.b32.xlu0 %v1805, 16
      %v1820 = vpop.permute.xlu0 %1819
      %1821 = vrot.lane.b32.xlu0 %v1806, 16
      %v1822 = vpop.permute.xlu0 %1821
      %v1831 = vunpack.c.l.b16 %v1471
      %v1832 = vunpack.c.l.b16 %v1472
      %v1833 = vunpack.c.l.b16 %v1473
      %v1834 = vunpack.c.l.b16 %v1474
      %v1835 = vunpack.c.l.b16 %v1475
      %v1836 = vunpack.c.l.b16 %v1476
      %v1837 = vunpack.c.l.b16 %v1477
      %v1838 = vunpack.c.l.b16 %v1478
      %v1839 = vpack.c.b16 %v1728, %v1831
      %v1840 = vpack.c.b16 %v1730, %v1832
      %v1841 = vpack.c.b16 %v1732, %v1833
      %v1842 = vpack.c.b16 %v1734, %v1834
      %v1843 = vpack.c.b16 %v1736, %v1835
      %v1844 = vpack.c.b16 %v1738, %v1836
      %v1845 = vpack.c.b16 %v1740, %v1837
      %v1846 = vpack.c.b16 %v1742, %v1838
      %v1848 = vshrl.u32 %v1839, 16
      %v1850 = vshll.u32 %v1839, 16
      %v1852 = vrot.slane %v1850, 1
      %v1853 = vor.u32 %v1848, %v1852
      %v1855 = vshrl.u32 %v1840, 16
      %v1857 = vshll.u32 %v1840, 16
      %v1859 = vrot.slane %v1857, 1
      %v1860 = vor.u32 %v1855, %v1859
      %v1862 = vshrl.u32 %v1841, 16
      %v1864 = vshll.u32 %v1841, 16
      %v1866 = vrot.slane %v1864, 1
      %v1867 = vor.u32 %v1862, %v1866
      %v1869 = vshrl.u32 %v1842, 16
      %v1871 = vshll.u32 %v1842, 16
      %v1873 = vrot.slane %v1871, 1
      %v1874 = vor.u32 %v1869, %v1873
      %v1876 = vshrl.u32 %v1843, 16
      %v1878 = vshll.u32 %v1843, 16
      %v1880 = vrot.slane %v1878, 1
      %v1881 = vor.u32 %v1876, %v1880
      %v1883 = vshrl.u32 %v1844, 16
      %v1885 = vshll.u32 %v1844, 16
      %v1887 = vrot.slane %v1885, 1
      %v1888 = vor.u32 %v1883, %v1887
      %v1890 = vshrl.u32 %v1845, 16
      %v1892 = vshll.u32 %v1845, 16
      %v1894 = vrot.slane %v1892, 1
      %v1895 = vor.u32 %v1890, %v1894
      %v1897 = vshrl.u32 %v1846, 16
      %v1899 = vshll.u32 %v1846, 16
      %v1901 = vrot.slane %v1899, 1
      %v1902 = vor.u32 %v1897, %v1901
      %1903 = vrot.lane.b32.xlu0 %v1853, 20
      %v1904 = vpop.permute.xlu0 %1903
      %1905 = vrot.lane.b32.xlu0 %v1860, 20
      %v1906 = vpop.permute.xlu0 %1905
      %1907 = vrot.lane.b32.xlu0 %v1867, 20
      %v1908 = vpop.permute.xlu0 %1907
      %1909 = vrot.lane.b32.xlu0 %v1874, 20
      %v1910 = vpop.permute.xlu0 %1909
      %1911 = vrot.lane.b32.xlu0 %v1881, 20
      %v1912 = vpop.permute.xlu0 %1911
      %1913 = vrot.lane.b32.xlu0 %v1888, 20
      %v1914 = vpop.permute.xlu0 %1913
      %1915 = vrot.lane.b32.xlu0 %v1895, 20
      %v1916 = vpop.permute.xlu0 %1915
      %1917 = vrot.lane.b32.xlu0 %v1902, 20
      %v1918 = vpop.permute.xlu0 %1917
      %v1935 = vunpack.c.l.b16 %v1479
      %v1936 = vunpack.c.l.b16 %v1480
      %v1937 = vunpack.c.l.b16 %v1481
      %v1938 = vunpack.c.l.b16 %v1482
      %v1939 = vunpack.c.l.b16 %v1483
      %v1940 = vunpack.c.l.b16 %v1484
      %v1941 = vunpack.c.l.b16 %v1485
      %v1942 = vunpack.c.l.b16 %v1486
      %v1943 = vunpack.c.l.b16 %v1487
      %v1944 = vunpack.c.l.b16 %v1488
      %v1945 = vunpack.c.l.b16 %v1489
      %v1946 = vunpack.c.l.b16 %v1490
      %v1947 = vunpack.c.l.b16 %v1491
      %v1948 = vunpack.c.l.b16 %v1492
      %v1949 = vunpack.c.l.b16 %v1493
      %v1950 = vunpack.c.l.b16 %v1494
      %v1951 = vpack.c.b16 %v1936, %v1935
      %v1952 = vpack.c.b16 %v1938, %v1937
      %v1953 = vpack.c.b16 %v1940, %v1939
      %v1954 = vpack.c.b16 %v1942, %v1941
      %v1955 = vpack.c.b16 %v1944, %v1943
      %v1956 = vpack.c.b16 %v1946, %v1945
      %v1957 = vpack.c.b16 %v1948, %v1947
      %v1958 = vpack.c.b16 %v1950, %v1949
      %1959 = vrot.lane.b32.xlu0 %v1951, 24
      %v1960 = vpop.permute.xlu0 %1959
      %1961 = vrot.lane.b32.xlu0 %v1952, 24
      %v1962 = vpop.permute.xlu0 %1961
      %1963 = vrot.lane.b32.xlu0 %v1953, 24
      %v1964 = vpop.permute.xlu0 %1963
      %1965 = vrot.lane.b32.xlu0 %v1954, 24
      %v1966 = vpop.permute.xlu0 %1965
      %1967 = vrot.lane.b32.xlu0 %v1955, 24
      %v1968 = vpop.permute.xlu0 %1967
      %1969 = vrot.lane.b32.xlu0 %v1956, 24
      %v1970 = vpop.permute.xlu0 %1969
      %1971 = vrot.lane.b32.xlu0 %v1957, 24
      %v1972 = vpop.permute.xlu0 %1971
      %1973 = vrot.lane.b32.xlu0 %v1958, 24
      %v1974 = vpop.permute.xlu0 %1973
      %v1991 = vunpack.c.l.b16 %v1495
      %v1992 = vunpack.c.l.b16 %v1496
      %v1993 = vunpack.c.l.b16 %v1497
      %v1994 = vunpack.c.l.b16 %v1498
      %v1995 = vunpack.c.l.b16 %v1499
      %v1996 = vunpack.c.l.b16 %v1500
      %v1997 = vunpack.c.l.b16 %v1501
      %v1998 = vunpack.c.l.b16 %v1502
      %v1999 = vunpack.c.l.b16 %v1503
      %v2000 = vunpack.c.l.b16 %v1504
      %v2001 = vunpack.c.l.b16 %v1505
      %v2002 = vunpack.c.l.b16 %v1506
      %v2003 = vunpack.c.l.b16 %v1507
      %v2004 = vunpack.c.l.b16 %v1508
      %v2005 = vunpack.c.l.b16 %v1509
      %v2006 = vunpack.c.l.b16 %v1510
      %v2007 = vpack.c.b16 %v1992, %v1991
      %v2008 = vpack.c.b16 %v1994, %v1993
      %v2009 = vpack.c.b16 %v1996, %v1995
      %v2010 = vpack.c.b16 %v1998, %v1997
      %v2011 = vpack.c.b16 %v2000, %v1999
      %v2012 = vpack.c.b16 %v2002, %v2001
      %v2013 = vpack.c.b16 %v2004, %v2003
      %v2014 = vpack.c.b16 %v2006, %v2005
      %2015 = vrot.lane.b32.xlu0 %v2007, 28
      %v2016 = vpop.permute.xlu0 %2015
      %2017 = vrot.lane.b32.xlu0 %v2008, 28
      %v2018 = vpop.permute.xlu0 %2017
      %2019 = vrot.lane.b32.xlu0 %v2009, 28
      %v2020 = vpop.permute.xlu0 %2019
      %2021 = vrot.lane.b32.xlu0 %v2010, 28
      %v2022 = vpop.permute.xlu0 %2021
      %2023 = vrot.lane.b32.xlu0 %v2011, 28
      %v2024 = vpop.permute.xlu0 %2023
      %2025 = vrot.lane.b32.xlu0 %v2012, 28
      %v2026 = vpop.permute.xlu0 %2025
      %2027 = vrot.lane.b32.xlu0 %v2013, 28
      %v2028 = vpop.permute.xlu0 %2027
      %2029 = vrot.lane.b32.xlu0 %v2014, 28
      %v2030 = vpop.permute.xlu0 %2029
      %v2039 = vunpack.c.l.b16 %v1511
      %v2040 = vunpack.c.l.b16 %v1512
      %v2041 = vunpack.c.l.b16 %v1513
      %v2042 = vunpack.c.l.b16 %v1514
      %v2043 = vunpack.c.l.b16 %v1515
      %v2044 = vunpack.c.l.b16 %v1516
      %v2045 = vunpack.c.l.b16 %v1517
      %v2046 = vunpack.c.l.b16 %v1518
      %v2047 = vpack.c.b16 %v1936, %v2039
      %v2048 = vpack.c.b16 %v1938, %v2040
      %v2049 = vpack.c.b16 %v1940, %v2041
      %v2050 = vpack.c.b16 %v1942, %v2042
      %v2051 = vpack.c.b16 %v1944, %v2043
      %v2052 = vpack.c.b16 %v1946, %v2044
      %v2053 = vpack.c.b16 %v1948, %v2045
      %v2054 = vpack.c.b16 %v1950, %v2046
      %v2056 = vshrl.u32 %v2047, 16
      %v2058 = vshll.u32 %v2047, 16
      %v2060 = vrot.slane %v2058, 1
      %v2061 = vor.u32 %v2056, %v2060
      %v2063 = vshrl.u32 %v2048, 16
      %v2065 = vshll.u32 %v2048, 16
      %v2067 = vrot.slane %v2065, 1
      %v2068 = vor.u32 %v2063, %v2067
      %v2070 = vshrl.u32 %v2049, 16
      %v2072 = vshll.u32 %v2049, 16
      %v2074 = vrot.slane %v2072, 1
      %v2075 = vor.u32 %v2070, %v2074
      %v2077 = vshrl.u32 %v2050, 16
      %v2079 = vshll.u32 %v2050, 16
      %v2081 = vrot.slane %v2079, 1
      %v2082 = vor.u32 %v2077, %v2081
      %v2084 = vshrl.u32 %v2051, 16
      %v2086 = vshll.u32 %v2051, 16
      %v2088 = vrot.slane %v2086, 1
      %v2089 = vor.u32 %v2084, %v2088
      %v2091 = vshrl.u32 %v2052, 16
      %v2093 = vshll.u32 %v2052, 16
      %v2095 = vrot.slane %v2093, 1
      %v2096 = vor.u32 %v2091, %v2095
      %v2098 = vshrl.u32 %v2053, 16
      %v2100 = vshll.u32 %v2053, 16
      %v2102 = vrot.slane %v2100, 1
      %v2103 = vor.u32 %v2098, %v2102
      %v2105 = vshrl.u32 %v2054, 16
      %v2107 = vshll.u32 %v2054, 16
      %v2109 = vrot.slane %v2107, 1
      %v2110 = vor.u32 %v2105, %v2109
      %2111 = vrot.lane.b32.xlu0 %v2061, 32
      %v2112 = vpop.permute.xlu0 %2111
      %2113 = vrot.lane.b32.xlu0 %v2068, 32
      %v2114 = vpop.permute.xlu0 %2113
      %2115 = vrot.lane.b32.xlu0 %v2075, 32
      %v2116 = vpop.permute.xlu0 %2115
      %2117 = vrot.lane.b32.xlu0 %v2082, 32
      %v2118 = vpop.permute.xlu0 %2117
      %2119 = vrot.lane.b32.xlu0 %v2089, 32
      %v2120 = vpop.permute.xlu0 %2119
      %2121 = vrot.lane.b32.xlu0 %v2096, 32
      %v2122 = vpop.permute.xlu0 %2121
      %2123 = vrot.lane.b32.xlu0 %v2103, 32
      %v2124 = vpop.permute.xlu0 %2123
      %2125 = vrot.lane.b32.xlu0 %v2110, 32
      %v2126 = vpop.permute.xlu0 %2125
      %v2129 = vsel %vm1116, %v1551, %v1600
      %v2132 = vsel %vm1116, %v1552, %v1602
      %v2135 = vsel %vm1116, %v1553, %v1604
      %v2138 = vsel %vm1116, %v1554, %v1606
      %v2141 = vsel %vm1116, %v1555, %v1608
      %v2144 = vsel %vm1116, %v1556, %v1610
      %v2147 = vsel %vm1116, %v1557, %v1612
      %v2150 = vsel %vm1116, %v1558, %v1614
      %v2152 = vsel %vm226, %v2129, %v1696
      %v2154 = vsel %vm226, %v2132, %v1698
      %v2156 = vsel %vm226, %v2135, %v1700
      %v2158 = vsel %vm226, %v2138, %v1702
      %v2160 = vsel %vm226, %v2141, %v1704
      %v2162 = vsel %vm226, %v2144, %v1706
      %v2164 = vsel %vm226, %v2147, %v1708
      %v2166 = vsel %vm226, %v2150, %v1710
      %v2168 = vsel %vm1157, %v2152, %v1752
      %v2170 = vsel %vm1157, %v2154, %v1754
      %v2172 = vsel %vm1157, %v2156, %v1756
      %v2174 = vsel %vm1157, %v2158, %v1758
      %v2176 = vsel %vm1157, %v2160, %v1760
      %v2178 = vsel %vm1157, %v2162, %v1762
      %v2180 = vsel %vm1157, %v2164, %v1764
      %v2182 = vsel %vm1157, %v2166, %v1766
      %v2184 = vsel %vm1174, %v2168, %v1808
      %v2186 = vsel %vm1174, %v2170, %v1810
      %v2188 = vsel %vm1174, %v2172, %v1812
      %v2190 = vsel %vm1174, %v2174, %v1814
      %v2192 = vsel %vm1174, %v2176, %v1816
      %v2194 = vsel %vm1174, %v2178, %v1818
      %v2196 = vsel %vm1174, %v2180, %v1820
      %v2198 = vsel %vm1174, %v2182, %v1822
      %v2200 = vsel %vm1191, %v2184, %v1904
      %v2202 = vsel %vm1191, %v2186, %v1906
      %v2204 = vsel %vm1191, %v2188, %v1908
      %v2206 = vsel %vm1191, %v2190, %v1910
      %v2208 = vsel %vm1191, %v2192, %v1912
      %v2210 = vsel %vm1191, %v2194, %v1914
      %v2212 = vsel %vm1191, %v2196, %v1916
      %v2214 = vsel %vm1191, %v2198, %v1918
      %v2216 = vsel %vm1208, %v2200, %v1960
      %v2218 = vsel %vm1208, %v2202, %v1962
      %v2220 = vsel %vm1208, %v2204, %v1964
      %v2222 = vsel %vm1208, %v2206, %v1966
      %v2224 = vsel %vm1208, %v2208, %v1968
      %v2226 = vsel %vm1208, %v2210, %v1970
      %v2228 = vsel %vm1208, %v2212, %v1972
      %v2230 = vsel %vm1208, %v2214, %v1974
      %v2232 = vsel %vm1225, %v2216, %v2016
      %v2234 = vsel %vm1225, %v2218, %v2018
      %v2236 = vsel %vm1225, %v2220, %v2020
      %v2238 = vsel %vm1225, %v2222, %v2022
      %v2240 = vsel %vm1225, %v2224, %v2024
      %v2242 = vsel %vm1225, %v2226, %v2026
      %v2244 = vsel %vm1225, %v2228, %v2028
      %v2246 = vsel %vm1225, %v2230, %v2030
      %v2248 = vsel %vm1242, %v2232, %v2112
      %v2250 = vsel %vm1242, %v2234, %v2114
      %v2252 = vsel %vm1242, %v2236, %v2116
      %v2254 = vsel %vm1242, %v2238, %v2118
      %v2256 = vsel %vm1242, %v2240, %v2120
      %v2258 = vsel %vm1242, %v2242, %v2122
      %v2260 = vsel %vm1242, %v2244, %v2124
      %v2262 = vsel %vm1242, %v2246, %v2126
      %v2271 = vunpack.c.l.b16 %v2248
      %v2272 = vunpack.c.h.b16 %v2248
      %v2273 = vunpack.c.l.b16 %v2250
      %v2274 = vunpack.c.h.b16 %v2250
      %v2275 = vunpack.c.l.b16 %v2252
      %v2276 = vunpack.c.h.b16 %v2252
      %v2277 = vunpack.c.l.b16 %v2254
      %v2278 = vunpack.c.h.b16 %v2254
      %v2279 = vunpack.c.l.b16 %v2256
      %v2280 = vunpack.c.h.b16 %v2256
      %v2281 = vunpack.c.l.b16 %v2258
      %v2282 = vunpack.c.h.b16 %v2258
      %v2283 = vunpack.c.l.b16 %v2260
      %v2284 = vunpack.c.h.b16 %v2260
      %v2285 = vunpack.c.l.b16 %v2262
      %v2286 = vunpack.c.h.b16 %v2262
      %v2287 = vpack.c.b16 %v2271, %v2271
      %v2288 = vpack.c.b16 %v2272, %v2272
      %v2289 = vpack.c.b16 %v2273, %v2273
      %v2290 = vpack.c.b16 %v2274, %v2274
      %v2291 = vpack.c.b16 %v2275, %v2275
      %v2292 = vpack.c.b16 %v2276, %v2276
      %v2293 = vpack.c.b16 %v2277, %v2277
      %v2294 = vpack.c.b16 %v2278, %v2278
      %v2295 = vpack.c.b16 %v2279, %v2279
      %v2296 = vpack.c.b16 %v2280, %v2280
      %v2297 = vpack.c.b16 %v2281, %v2281
      %v2298 = vpack.c.b16 %v2282, %v2282
      %v2299 = vpack.c.b16 %v2283, %v2283
      %v2300 = vpack.c.b16 %v2284, %v2284
      %v2301 = vpack.c.b16 %v2285, %v2285
      %v2302 = vpack.c.b16 %v2286, %v2286
      %vm2303 = vsmask.f32 3328
      %vm2304 = vsmask.f32 7440
      %vm2305 = vmor %vm2303, %vm2304
      %v2307 = vshrl.u32 %v2287, 16
      %v2309 = vrot.slane %v2307, 4
      %v2310 = vshll.u32 %v2287, 16
      %v2312 = vrot.slane %v2310, 5
      %v2313 = vor.u32 %v2309, %v2312
      %v2314 = vrot.slane %v2313, 4
      %v2316 = vshll.u32 %v2288, 16
      %v2318 = vrot.slane %v2316, 5
      %v2319 = vsel %vm2305, %v2314, %v2318
      %v2321 = vshrl.u32 %v2289, 16
      %v2323 = vrot.slane %v2321, 4
      %v2324 = vshll.u32 %v2289, 16
      %v2326 = vrot.slane %v2324, 5
      %v2327 = vor.u32 %v2323, %v2326
      %v2328 = vrot.slane %v2327, 4
      %v2330 = vshll.u32 %v2290, 16
      %v2332 = vrot.slane %v2330, 5
      %v2333 = vsel %vm2305, %v2328, %v2332
      %v2335 = vshrl.u32 %v2291, 16
      %v2337 = vrot.slane %v2335, 4
      %v2338 = vshll.u32 %v2291, 16
      %v2340 = vrot.slane %v2338, 5
      %v2341 = vor.u32 %v2337, %v2340
      %v2342 = vrot.slane %v2341, 4
      %v2344 = vshll.u32 %v2292, 16
      %v2346 = vrot.slane %v2344, 5
      %v2347 = vsel %vm2305, %v2342, %v2346
      %v2349 = vshrl.u32 %v2293, 16
      %v2351 = vrot.slane %v2349, 4
      %v2352 = vshll.u32 %v2293, 16
      %v2354 = vrot.slane %v2352, 5
      %v2355 = vor.u32 %v2351, %v2354
      %v2356 = vrot.slane %v2355, 4
      %v2358 = vshll.u32 %v2294, 16
      %v2360 = vrot.slane %v2358, 5
      %v2361 = vsel %vm2305, %v2356, %v2360
      %v2363 = vshrl.u32 %v2295, 16
      %v2365 = vrot.slane %v2363, 4
      %v2366 = vshll.u32 %v2295, 16
      %v2368 = vrot.slane %v2366, 5
      %v2369 = vor.u32 %v2365, %v2368
      %v2370 = vrot.slane %v2369, 4
      %v2372 = vshll.u32 %v2296, 16
      %v2374 = vrot.slane %v2372, 5
      %v2375 = vsel %vm2305, %v2370, %v2374
      %v2377 = vshrl.u32 %v2297, 16
      %v2379 = vrot.slane %v2377, 4
      %v2380 = vshll.u32 %v2297, 16
      %v2382 = vrot.slane %v2380, 5
      %v2383 = vor.u32 %v2379, %v2382
      %v2384 = vrot.slane %v2383, 4
      %v2386 = vshll.u32 %v2298, 16
      %v2388 = vrot.slane %v2386, 5
      %v2389 = vsel %vm2305, %v2384, %v2388
      %v2391 = vshrl.u32 %v2299, 16
      %v2393 = vrot.slane %v2391, 4
      %v2394 = vshll.u32 %v2299, 16
      %v2396 = vrot.slane %v2394, 5
      %v2397 = vor.u32 %v2393, %v2396
      %v2398 = vrot.slane %v2397, 4
      %v2400 = vshll.u32 %v2300, 16
      %v2402 = vrot.slane %v2400, 5
      %v2403 = vsel %vm2305, %v2398, %v2402
      %v2405 = vshrl.u32 %v2301, 16
      %v2407 = vrot.slane %v2405, 4
      %v2408 = vshll.u32 %v2301, 16
      %v2410 = vrot.slane %v2408, 5
      %v2411 = vor.u32 %v2407, %v2410
      %v2412 = vrot.slane %v2411, 4
      %v2414 = vshll.u32 %v2302, 16
      %v2416 = vrot.slane %v2414, 5
      %v2417 = vsel %vm2305, %v2412, %v2416
      %v2418 = vunpack.c.l.b16 %v2319
      %v2419 = vunpack.c.l.b16 %v2333
      %v2420 = vunpack.c.l.b16 %v2347
      %v2421 = vunpack.c.l.b16 %v2361
      %v2422 = vunpack.c.l.b16 %v2375
      %v2423 = vunpack.c.l.b16 %v2389
      %v2424 = vunpack.c.l.b16 %v2403
      %v2425 = vunpack.c.l.b16 %v2417
      %v2426 = vpack.c.b16 %v2419, %v2418
      %v2427 = vpack.c.b16 %v2421, %v2420
      %v2428 = vpack.c.b16 %v2423, %v2422
      %v2429 = vpack.c.b16 %v2425, %v2424
      %v2431 = vsel %vm1300, %v2426, 0
      %v2434 = vsel %vm1300, %v2427, 0
      %v2437 = vsel %vm1300, %v2428, 0
      %v2440 = vsel %vm1300, %v2429, 0
      %2442 = vmatprep.subr.bf16.mxu0 0
      %2443 = vmatpush1.bf16.msra.mxu0 %v1295
      %2444 = vmatprep.subr.bf16.mxu0 0
      %2445 = vmatpush1.bf16.msra.mxu0 %v1296
      %2446 = vmatprep.subr.bf16.mxu0 0
      %2447 = vmatpush1.bf16.msra.mxu0 %v1315
      %2448 = vmatprep.subr.bf16.mxu0 0
      %2449 = vmatpush1.bf16.msra.mxu0 0
      %2450 = vmatprep.subr.bf16.mxu0 0
      %2451 = vmatpush1.bf16.msra.mxu0 0
      %2452 = vmatprep.subr.bf16.mxu0 0
      %2453 = vmatpush1.bf16.msra.mxu0 0
      %2454 = vmatprep.subr.bf16.mxu0 0
      %2455 = vmatpush1.bf16.msra.mxu0 0
      %2456 = vmatprep.subr.bf16.mxu0 0
      %2457 = vmatpush1.bf16.msra.mxu0 0
      %2458 = vmatprep.subr.bf16.mxu0 0
      %2459 = vmatpush1.bf16.msra.mxu0 0
      %2460 = vmatprep.subr.bf16.mxu0 0
      %2461 = vmatpush1.bf16.msra.mxu0 0
      %2462 = vmatprep.subr.bf16.mxu0 0
      %2463 = vmatpush1.bf16.msra.mxu0 0
      %2464 = vmatprep.subr.bf16.mxu0 0
      %2465 = vmatpush1.bf16.msra.mxu0 0
      %2466 = vmatprep.subr.bf16.mxu0 0
      %2467 = vmatpush1.bf16.msra.mxu0 0
      %2468 = vmatprep.subr.bf16.mxu0 0
      %2469 = vmatpush1.bf16.msra.mxu0 0
      %2470 = vmatprep.subr.bf16.mxu0 0
      %2471 = vmatpush1.bf16.msra.mxu0 0
      %2472 = vmatprep.subr.bf16.mxu0 0
      %2473 = vmatpush1.bf16.msra.mxu0 0
      %2474 = vmatprep.mubr.bf16.mxu0 0
      %2475 = vmatmul.mubr.bf16.gmra.mrb[0].mxu0 %v2431
      %v2476 = vpop.f32.mrb[0].mxu0
      %v2477 = vadd.f32 %v1263, %v2476
      %v2478 = vpop.f32.mrb[0].mxu0
      %v2479 = vpop.f32.mrb[0].mxu0
      %v2480 = vadd.f32 %v1263, %v2479
      %v2481 = vpop.f32.mrb[0].mxu0
      %2482 = vmatprep.mubr.bf16.mxu0 0
      %2483 = vmatmul.mubr.bf16.gmra.mrb[0].mxu0 %v2434
      %v2484 = vpop.f32.mrb[0].mxu0
      %v2485 = vadd.f32 %v1263, %v2484
      %v2486 = vpop.f32.mrb[0].mxu0
      %v2487 = vpop.f32.mrb[0].mxu0
      %v2488 = vadd.f32 %v1263, %v2487
      %v2489 = vpop.f32.mrb[0].mxu0
      %2490 = vmatprep.mubr.bf16.mxu0 0
      %2491 = vmatmul.mubr.bf16.gmra.mrb[0].mxu0 %v2437
      %v2492 = vpop.f32.mrb[0].mxu0
      %v2493 = vadd.f32 %v1263, %v2492
      %v2494 = vpop.f32.mrb[0].mxu0
      %v2495 = vpop.f32.mrb[0].mxu0
      %v2496 = vadd.f32 %v1263, %v2495
      %v2497 = vpop.f32.mrb[0].mxu0
      %2498 = vmatprep.mubr.bf16.mxu0 0
      %2499 = vmatmul.mubr.bf16.gmra.mrb[0].mxu0 %v2440
      %v2500 = vpop.f32.mrb[0].mxu0
      %v2501 = vadd.f32 %v1263, %v2500
      %v2502 = vpop.f32.mrb[0].mxu0
      %v2503 = vpop.f32.mrb[0].mxu0
      %v2504 = vadd.f32 %v1263, %v2503
      %v2505 = vpop.f32.mrb[0].mxu0
      %2506 = vdwg.mxu0
      %v2507 = vmax.f32 %v2477, 0.0
      %v2508 = vmax.f32 %v2480, 0.0
      %v2509 = vmax.f32 %v2485, 0.0
      %v2510 = vmax.f32 %v2488, 0.0
      %v2511 = vmax.f32 %v2493, 0.0
      %v2512 = vmax.f32 %v2496, 0.0
      %v2513 = vmax.f32 %v2501, 0.0
      %v2514 = vmax.f32 %v2504, 0.0
      %2515 = vst.msk [vmem:[%s1390 + $0x1] sm:$0xff] %vm226, %v2507
      %2516 = vst.msk [vmem:[%s1390 + $0x19] sm:$0xff] %vm226, %v2508
      %2517 = vst.msk [vmem:[%s1390 + $0x31] sm:$0xff] %vm226, %v2509
      %2518 = vst.msk [vmem:[%s1390 + $0x49] sm:$0xff] %vm226, %v2510
      %2519 = vst.msk [vmem:[%s1390 + $0x61] sm:$0xff] %vm226, %v2511
      %2520 = vst.msk [vmem:[%s1390 + $0x79] sm:$0xff] %vm226, %v2512
      %2521 = vst.msk [vmem:[%s1390 + $0x91] sm:$0xff] %vm226, %v2513
      %2522 = vst.msk [vmem:[%s1390 + $0xa9] sm:$0xff] %vm226, %v2514
      %v2523 = vld [vmem:[%s330] sm:$0xf]
      %v2524 = vld [vmem:[%s330 + $0xc] sm:$0xf]
      %v2525 = vld [vmem:[%s330 + $0x18] sm:$0xf]
      %v2526 = vld [vmem:[%s330 + $0x24] sm:$0xf]
      %v2527 = vld [vmem:[%s330 + $0x30] sm:$0xf]
      %v2528 = vld [vmem:[%s330 + $0x3c] sm:$0xf]
      %v2529 = vld [vmem:[%s330 + $0x48] sm:$0xf]
      %v2530 = vld [vmem:[%s330 + $0x54] sm:$0xf]
      %v2531 = vld [vmem:[%s330 + $0x4] sm:$0xf]
      %v2532 = vld [vmem:[%s330 + $0x8] sm:$0x1]
      %v2533 = vld [vmem:[%s330 + $0x10] sm:$0xf]
      %v2534 = vld [vmem:[%s330 + $0x14] sm:$0x1]
      %v2535 = vld [vmem:[%s330 + $0x1c] sm:$0xf]
      %v2536 = vld [vmem:[%s330 + $0x20] sm:$0x1]
      %v2537 = vld [vmem:[%s330 + $0x28] sm:$0xf]
      %v2538 = vld [vmem:[%s330 + $0x2c] sm:$0x1]
      %v2539 = vld [vmem:[%s330 + $0x34] sm:$0xf]
      %v2540 = vld [vmem:[%s330 + $0x38] sm:$0x1]
      %v2541 = vld [vmem:[%s330 + $0x40] sm:$0xf]
      %v2542 = vld [vmem:[%s330 + $0x44] sm:$0x1]
      %v2543 = vld [vmem:[%s330 + $0x4c] sm:$0xf]
      %v2544 = vld [vmem:[%s330 + $0x50] sm:$0x1]
      %v2545 = vld [vmem:[%s330 + $0x58] sm:$0xf]
      %v2546 = vld [vmem:[%s330 + $0x5c] sm:$0x1]
      %v2547 = vld [vmem:[%s330 + $0x4] sm:$0x1]
      %v2548 = vld [vmem:[%s330 + $0x10] sm:$0x1]
      %v2549 = vld [vmem:[%s330 + $0x1c] sm:$0x1]
      %v2550 = vld [vmem:[%s330 + $0x28] sm:$0x1]
      %v2551 = vld [vmem:[%s330 + $0x34] sm:$0x1]
      %v2552 = vld [vmem:[%s330 + $0x40] sm:$0x1]
      %v2553 = vld [vmem:[%s330 + $0x4c] sm:$0x1]
      %v2554 = vld [vmem:[%s330 + $0x58] sm:$0x1]
      %v2555 = vld [vmem:[%s363] sm:$0xf]
      %v2556 = vld [vmem:[%s363 + $0xc] sm:$0xf]
      %v2557 = vld [vmem:[%s363 + $0x18] sm:$0xf]
      %v2558 = vld [vmem:[%s363 + $0x24] sm:$0xf]
      %v2559 = vld [vmem:[%s363 + $0x30] sm:$0xf]
      %v2560 = vld [vmem:[%s363 + $0x3c] sm:$0xf]
      %v2561 = vld [vmem:[%s363 + $0x48] sm:$0xf]
      %v2562 = vld [vmem:[%s363 + $0x54] sm:$0xf]
      %v2563 = vld [vmem:[%s363 + $0x4] sm:$0xf]
      %v2564 = vld [vmem:[%s363 + $0x8] sm:$0x1]
      %v2565 = vld [vmem:[%s363 + $0x10] sm:$0xf]
      %v2566 = vld [vmem:[%s363 + $0x14] sm:$0x1]
      %v2567 = vld [vmem:[%s363 + $0x1c] sm:$0xf]
      %v2568 = vld [vmem:[%s363 + $0x20] sm:$0x1]
      %v2569 = vld [vmem:[%s363 + $0x28] sm:$0xf]
      %v2570 = vld [vmem:[%s363 + $0x2c] sm:$0x1]
      %v2571 = vld [vmem:[%s363 + $0x34] sm:$0xf]
      %v2572 = vld [vmem:[%s363 + $0x38] sm:$0x1]
      %v2573 = vld [vmem:[%s363 + $0x40] sm:$0xf]
      %v2574 = vld [vmem:[%s363 + $0x44] sm:$0x1]
      %v2575 = vld [vmem:[%s363 + $0x4c] sm:$0xf]
      %v2576 = vld [vmem:[%s363 + $0x50] sm:$0x1]
      %v2577 = vld [vmem:[%s363 + $0x58] sm:$0xf]
      %v2578 = vld [vmem:[%s363 + $0x5c] sm:$0x1]
      %v2579 = vld [vmem:[%s363 + $0x4] sm:$0x1]
      %v2580 = vld [vmem:[%s363 + $0x10] sm:$0x1]
      %v2581 = vld [vmem:[%s363 + $0x1c] sm:$0x1]
      %v2582 = vld [vmem:[%s363 + $0x28] sm:$0x1]
      %v2583 = vld [vmem:[%s363 + $0x34] sm:$0x1]
      %v2584 = vld [vmem:[%s363 + $0x40] sm:$0x1]
      %v2585 = vld [vmem:[%s363 + $0x4c] sm:$0x1]
      %v2586 = vld [vmem:[%s363 + $0x58] sm:$0x1]
      %s2587 = scalar_lea.vmem %s219, 120
      %v2588 = vld [vmem:[%s2587] sm:$0xf]
      %v2589 = vld [vmem:[%s2587 + $0xc] sm:$0xf]
      %v2590 = vld [vmem:[%s2587 + $0x18] sm:$0xf]
      %v2591 = vld [vmem:[%s2587 + $0x24] sm:$0xf]
      %v2592 = vld [vmem:[%s2587 + $0x30] sm:$0xf]
      %v2593 = vld [vmem:[%s2587 + $0x3c] sm:$0xf]
      %v2594 = vld [vmem:[%s2587 + $0x48] sm:$0xf]
      %v2595 = vld [vmem:[%s2587 + $0x54] sm:$0xf]
      %v2596 = vld [vmem:[%s2587 + $0x4] sm:$0xf]
      %v2597 = vld [vmem:[%s2587 + $0x8] sm:$0x1]
      %v2598 = vld [vmem:[%s2587 + $0x10] sm:$0xf]
      %v2599 = vld [vmem:[%s2587 + $0x14] sm:$0x1]
      %v2600 = vld [vmem:[%s2587 + $0x1c] sm:$0xf]
      %v2601 = vld [vmem:[%s2587 + $0x20] sm:$0x1]
      %v2602 = vld [vmem:[%s2587 + $0x28] sm:$0xf]
      %v2603 = vld [vmem:[%s2587 + $0x2c] sm:$0x1]
      %v2604 = vld [vmem:[%s2587 + $0x34] sm:$0xf]
      %v2605 = vld [vmem:[%s2587 + $0x38] sm:$0x1]
      %v2606 = vld [vmem:[%s2587 + $0x40] sm:$0xf]
      %v2607 = vld [vmem:[%s2587 + $0x44] sm:$0x1]
      %v2608 = vld [vmem:[%s2587 + $0x4c] sm:$0xf]
      %v2609 = vld [vmem:[%s2587 + $0x50] sm:$0x1]
      %v2610 = vld [vmem:[%s2587 + $0x58] sm:$0xf]
      %v2611 = vld [vmem:[%s2587 + $0x5c] sm:$0x1]
      %v2612 = vld [vmem:[%s2587 + $0x4] sm:$0x1]
      %v2613 = vld [vmem:[%s2587 + $0x10] sm:$0x1]
      %v2614 = vld [vmem:[%s2587 + $0x1c] sm:$0x1]
      %v2615 = vld [vmem:[%s2587 + $0x28] sm:$0x1]
      %v2616 = vld [vmem:[%s2587 + $0x34] sm:$0x1]
      %v2617 = vld [vmem:[%s2587 + $0x40] sm:$0x1]
      %v2618 = vld [vmem:[%s2587 + $0x4c] sm:$0x1]
      %v2619 = vld [vmem:[%s2587 + $0x58] sm:$0x1]
      %v2636 = vunpack.c.l.b16 %v2531
      %v2637 = vunpack.c.l.b16 %v2532
      %v2638 = vunpack.c.l.b16 %v2533
      %v2639 = vunpack.c.l.b16 %v2534
      %v2640 = vunpack.c.l.b16 %v2535
      %v2641 = vunpack.c.l.b16 %v2536
      %v2642 = vunpack.c.l.b16 %v2537
      %v2643 = vunpack.c.l.b16 %v2538
      %v2644 = vunpack.c.l.b16 %v2539
      %v2645 = vunpack.c.l.b16 %v2540
      %v2646 = vunpack.c.l.b16 %v2541
      %v2647 = vunpack.c.l.b16 %v2542
      %v2648 = vunpack.c.l.b16 %v2543
      %v2649 = vunpack.c.l.b16 %v2544
      %v2650 = vunpack.c.l.b16 %v2545
      %v2651 = vunpack.c.l.b16 %v2546
      %v2652 = vpack.c.b16 %v2637, %v2636
      %v2653 = vpack.c.b16 %v2639, %v2638
      %v2654 = vpack.c.b16 %v2641, %v2640
      %v2655 = vpack.c.b16 %v2643, %v2642
      %v2656 = vpack.c.b16 %v2645, %v2644
      %v2657 = vpack.c.b16 %v2647, %v2646
      %v2658 = vpack.c.b16 %v2649, %v2648
      %v2659 = vpack.c.b16 %v2651, %v2650
      %v2661 = vshrl.u32 %v2652, 16
      %v2663 = vshll.u32 %v2652, 16
      %v2665 = vrot.slane %v2663, 1
      %v2666 = vor.u32 %v2661, %v2665
      %v2668 = vshrl.u32 %v2653, 16
      %v2670 = vshll.u32 %v2653, 16
      %v2672 = vrot.slane %v2670, 1
      %v2673 = vor.u32 %v2668, %v2672
      %v2675 = vshrl.u32 %v2654, 16
      %v2677 = vshll.u32 %v2654, 16
      %v2679 = vrot.slane %v2677, 1
      %v2680 = vor.u32 %v2675, %v2679
      %v2682 = vshrl.u32 %v2655, 16
      %v2684 = vshll.u32 %v2655, 16
      %v2686 = vrot.slane %v2684, 1
      %v2687 = vor.u32 %v2682, %v2686
      %v2689 = vshrl.u32 %v2656, 16
      %v2691 = vshll.u32 %v2656, 16
      %v2693 = vrot.slane %v2691, 1
      %v2694 = vor.u32 %v2689, %v2693
      %v2696 = vshrl.u32 %v2657, 16
      %v2698 = vshll.u32 %v2657, 16
      %v2700 = vrot.slane %v2698, 1
      %v2701 = vor.u32 %v2696, %v2700
      %v2703 = vshrl.u32 %v2658, 16
      %v2705 = vshll.u32 %v2658, 16
      %v2707 = vrot.slane %v2705, 1
      %v2708 = vor.u32 %v2703, %v2707
      %v2710 = vshrl.u32 %v2659, 16
      %v2712 = vshll.u32 %v2659, 16
      %v2714 = vrot.slane %v2712, 1
      %v2715 = vor.u32 %v2710, %v2714
      %2716 = vrot.lane.b32.xlu0 %v2666, 4
      %v2717 = vpop.permute.xlu0 %2716
      %2718 = vrot.lane.b32.xlu0 %v2673, 4
      %v2719 = vpop.permute.xlu0 %2718
      %2720 = vrot.lane.b32.xlu0 %v2680, 4
      %v2721 = vpop.permute.xlu0 %2720
      %2722 = vrot.lane.b32.xlu0 %v2687, 4
      %v2723 = vpop.permute.xlu0 %2722
      %2724 = vrot.lane.b32.xlu0 %v2694, 4
      %v2725 = vpop.permute.xlu0 %2724
      %2726 = vrot.lane.b32.xlu0 %v2701, 4
      %v2727 = vpop.permute.xlu0 %2726
      %2728 = vrot.lane.b32.xlu0 %v2708, 4
      %v2729 = vpop.permute.xlu0 %2728
      %2730 = vrot.lane.b32.xlu0 %v2715, 4
      %v2731 = vpop.permute.xlu0 %2730
      %v2748 = vunpack.c.l.b16 %v2523
      %v2749 = vunpack.c.l.b16 %v2547
      %v2750 = vunpack.c.l.b16 %v2524
      %v2751 = vunpack.c.l.b16 %v2548
      %v2752 = vunpack.c.l.b16 %v2525
      %v2753 = vunpack.c.l.b16 %v2549
      %v2754 = vunpack.c.l.b16 %v2526
      %v2755 = vunpack.c.l.b16 %v2550
      %v2756 = vunpack.c.l.b16 %v2527
      %v2757 = vunpack.c.l.b16 %v2551
      %v2758 = vunpack.c.l.b16 %v2528
      %v2759 = vunpack.c.l.b16 %v2552
      %v2760 = vunpack.c.l.b16 %v2529
      %v2761 = vunpack.c.l.b16 %v2553
      %v2762 = vunpack.c.l.b16 %v2530
      %v2763 = vunpack.c.l.b16 %v2554
      %v2764 = vpack.c.b16 %v2749, %v2748
      %v2765 = vpack.c.b16 %v2751, %v2750
      %v2766 = vpack.c.b16 %v2753, %v2752
      %v2767 = vpack.c.b16 %v2755, %v2754
      %v2768 = vpack.c.b16 %v2757, %v2756
      %v2769 = vpack.c.b16 %v2759, %v2758
      %v2770 = vpack.c.b16 %v2761, %v2760
      %v2771 = vpack.c.b16 %v2763, %v2762
      %v2773 = vshrl.u32 %v2764, 16
      %v2775 = vshll.u32 %v2764, 16
      %v2777 = vrot.slane %v2775, 1
      %v2778 = vor.u32 %v2773, %v2777
      %v2780 = vshrl.u32 %v2765, 16
      %v2782 = vshll.u32 %v2765, 16
      %v2784 = vrot.slane %v2782, 1
      %v2785 = vor.u32 %v2780, %v2784
      %v2787 = vshrl.u32 %v2766, 16
      %v2789 = vshll.u32 %v2766, 16
      %v2791 = vrot.slane %v2789, 1
      %v2792 = vor.u32 %v2787, %v2791
      %v2794 = vshrl.u32 %v2767, 16
      %v2796 = vshll.u32 %v2767, 16
      %v2798 = vrot.slane %v2796, 1
      %v2799 = vor.u32 %v2794, %v2798
      %v2801 = vshrl.u32 %v2768, 16
      %v2803 = vshll.u32 %v2768, 16
      %v2805 = vrot.slane %v2803, 1
      %v2806 = vor.u32 %v2801, %v2805
      %v2808 = vshrl.u32 %v2769, 16
      %v2810 = vshll.u32 %v2769, 16
      %v2812 = vrot.slane %v2810, 1
      %v2813 = vor.u32 %v2808, %v2812
      %v2815 = vshrl.u32 %v2770, 16
      %v2817 = vshll.u32 %v2770, 16
      %v2819 = vrot.slane %v2817, 1
      %v2820 = vor.u32 %v2815, %v2819
      %v2822 = vshrl.u32 %v2771, 16
      %v2824 = vshll.u32 %v2771, 16
      %v2826 = vrot.slane %v2824, 1
      %v2827 = vor.u32 %v2822, %v2826
      %2828 = vrot.lane.b32.xlu0 %v2778, 8
      %v2829 = vpop.permute.xlu0 %2828
      %2830 = vrot.lane.b32.xlu0 %v2785, 8
      %v2831 = vpop.permute.xlu0 %2830
      %2832 = vrot.lane.b32.xlu0 %v2792, 8
      %v2833 = vpop.permute.xlu0 %2832
      %2834 = vrot.lane.b32.xlu0 %v2799, 8
      %v2835 = vpop.permute.xlu0 %2834
      %2836 = vrot.lane.b32.xlu0 %v2806, 8
      %v2837 = vpop.permute.xlu0 %2836
      %2838 = vrot.lane.b32.xlu0 %v2813, 8
      %v2839 = vpop.permute.xlu0 %2838
      %2840 = vrot.lane.b32.xlu0 %v2820, 8
      %v2841 = vpop.permute.xlu0 %2840
      %2842 = vrot.lane.b32.xlu0 %v2827, 8
      %v2843 = vpop.permute.xlu0 %2842
      %v2852 = vunpack.c.l.b16 %v2555
      %v2853 = vunpack.c.l.b16 %v2556
      %v2854 = vunpack.c.l.b16 %v2557
      %v2855 = vunpack.c.l.b16 %v2558
      %v2856 = vunpack.c.l.b16 %v2559
      %v2857 = vunpack.c.l.b16 %v2560
      %v2858 = vunpack.c.l.b16 %v2561
      %v2859 = vunpack.c.l.b16 %v2562
      %v2860 = vpack.c.b16 %v2852, %v2852
      %v2861 = vpack.c.b16 %v2853, %v2853
      %v2862 = vpack.c.b16 %v2854, %v2854
      %v2863 = vpack.c.b16 %v2855, %v2855
      %v2864 = vpack.c.b16 %v2856, %v2856
      %v2865 = vpack.c.b16 %v2857, %v2857
      %v2866 = vpack.c.b16 %v2858, %v2858
      %v2867 = vpack.c.b16 %v2859, %v2859
      %2868 = vrot.lane.b32.xlu0 %v2860, 12
      %v2869 = vpop.permute.xlu0 %2868
      %2870 = vrot.lane.b32.xlu0 %v2861, 12
      %v2871 = vpop.permute.xlu0 %2870
      %2872 = vrot.lane.b32.xlu0 %v2862, 12
      %v2873 = vpop.permute.xlu0 %2872
      %2874 = vrot.lane.b32.xlu0 %v2863, 12
      %v2875 = vpop.permute.xlu0 %2874
      %2876 = vrot.lane.b32.xlu0 %v2864, 12
      %v2877 = vpop.permute.xlu0 %2876
      %2878 = vrot.lane.b32.xlu0 %v2865, 12
      %v2879 = vpop.permute.xlu0 %2878
      %2880 = vrot.lane.b32.xlu0 %v2866, 12
      %v2881 = vpop.permute.xlu0 %2880
      %2882 = vrot.lane.b32.xlu0 %v2867, 12
      %v2883 = vpop.permute.xlu0 %2882
      %v2900 = vunpack.c.l.b16 %v2563
      %v2901 = vunpack.c.l.b16 %v2564
      %v2902 = vunpack.c.l.b16 %v2565
      %v2903 = vunpack.c.l.b16 %v2566
      %v2904 = vunpack.c.l.b16 %v2567
      %v2905 = vunpack.c.l.b16 %v2568
      %v2906 = vunpack.c.l.b16 %v2569
      %v2907 = vunpack.c.l.b16 %v2570
      %v2908 = vunpack.c.l.b16 %v2571
      %v2909 = vunpack.c.l.b16 %v2572
      %v2910 = vunpack.c.l.b16 %v2573
      %v2911 = vunpack.c.l.b16 %v2574
      %v2912 = vunpack.c.l.b16 %v2575
      %v2913 = vunpack.c.l.b16 %v2576
      %v2914 = vunpack.c.l.b16 %v2577
      %v2915 = vunpack.c.l.b16 %v2578
      %v2916 = vpack.c.b16 %v2901, %v2900
      %v2917 = vpack.c.b16 %v2903, %v2902
      %v2918 = vpack.c.b16 %v2905, %v2904
      %v2919 = vpack.c.b16 %v2907, %v2906
      %v2920 = vpack.c.b16 %v2909, %v2908
      %v2921 = vpack.c.b16 %v2911, %v2910
      %v2922 = vpack.c.b16 %v2913, %v2912
      %v2923 = vpack.c.b16 %v2915, %v2914
      %v2925 = vshrl.u32 %v2916, 16
      %v2927 = vshll.u32 %v2916, 16
      %v2929 = vrot.slane %v2927, 1
      %v2930 = vor.u32 %v2925, %v2929
      %v2932 = vshrl.u32 %v2917, 16
      %v2934 = vshll.u32 %v2917, 16
      %v2936 = vrot.slane %v2934, 1
      %v2937 = vor.u32 %v2932, %v2936
      %v2939 = vshrl.u32 %v2918, 16
      %v2941 = vshll.u32 %v2918, 16
      %v2943 = vrot.slane %v2941, 1
      %v2944 = vor.u32 %v2939, %v2943
      %v2946 = vshrl.u32 %v2919, 16
      %v2948 = vshll.u32 %v2919, 16
      %v2950 = vrot.slane %v2948, 1
      %v2951 = vor.u32 %v2946, %v2950
      %v2953 = vshrl.u32 %v2920, 16
      %v2955 = vshll.u32 %v2920, 16
      %v2957 = vrot.slane %v2955, 1
      %v2958 = vor.u32 %v2953, %v2957
      %v2960 = vshrl.u32 %v2921, 16
      %v2962 = vshll.u32 %v2921, 16
      %v2964 = vrot.slane %v2962, 1
      %v2965 = vor.u32 %v2960, %v2964
      %v2967 = vshrl.u32 %v2922, 16
      %v2969 = vshll.u32 %v2922, 16
      %v2971 = vrot.slane %v2969, 1
      %v2972 = vor.u32 %v2967, %v2971
      %v2974 = vshrl.u32 %v2923, 16
      %v2976 = vshll.u32 %v2923, 16
      %v2978 = vrot.slane %v2976, 1
      %v2979 = vor.u32 %v2974, %v2978
      %2980 = vrot.lane.b32.xlu0 %v2930, 16
      %v2981 = vpop.permute.xlu0 %2980
      %2982 = vrot.lane.b32.xlu0 %v2937, 16
      %v2983 = vpop.permute.xlu0 %2982
      %2984 = vrot.lane.b32.xlu0 %v2944, 16
      %v2985 = vpop.permute.xlu0 %2984
      %2986 = vrot.lane.b32.xlu0 %v2951, 16
      %v2987 = vpop.permute.xlu0 %2986
      %2988 = vrot.lane.b32.xlu0 %v2958, 16
      %v2989 = vpop.permute.xlu0 %2988
      %2990 = vrot.lane.b32.xlu0 %v2965, 16
      %v2991 = vpop.permute.xlu0 %2990
      %2992 = vrot.lane.b32.xlu0 %v2972, 16
      %v2993 = vpop.permute.xlu0 %2992
      %2994 = vrot.lane.b32.xlu0 %v2979, 16
      %v2995 = vpop.permute.xlu0 %2994
      %v3004 = vunpack.c.l.b16 %v2579
      %v3005 = vunpack.c.l.b16 %v2580
      %v3006 = vunpack.c.l.b16 %v2581
      %v3007 = vunpack.c.l.b16 %v2582
      %v3008 = vunpack.c.l.b16 %v2583
      %v3009 = vunpack.c.l.b16 %v2584
      %v3010 = vunpack.c.l.b16 %v2585
      %v3011 = vunpack.c.l.b16 %v2586
      %v3012 = vpack.c.b16 %v3004, %v2852
      %v3013 = vpack.c.b16 %v3005, %v2853
      %v3014 = vpack.c.b16 %v3006, %v2854
      %v3015 = vpack.c.b16 %v3007, %v2855
      %v3016 = vpack.c.b16 %v3008, %v2856
      %v3017 = vpack.c.b16 %v3009, %v2857
      %v3018 = vpack.c.b16 %v3010, %v2858
      %v3019 = vpack.c.b16 %v3011, %v2859
      %v3021 = vshrl.u32 %v3012, 16
      %v3023 = vshll.u32 %v3012, 16
      %v3025 = vrot.slane %v3023, 1
      %v3026 = vor.u32 %v3021, %v3025
      %v3028 = vshrl.u32 %v3013, 16
      %v3030 = vshll.u32 %v3013, 16
      %v3032 = vrot.slane %v3030, 1
      %v3033 = vor.u32 %v3028, %v3032
      %v3035 = vshrl.u32 %v3014, 16
      %v3037 = vshll.u32 %v3014, 16
      %v3039 = vrot.slane %v3037, 1
      %v3040 = vor.u32 %v3035, %v3039
      %v3042 = vshrl.u32 %v3015, 16
      %v3044 = vshll.u32 %v3015, 16
      %v3046 = vrot.slane %v3044, 1
      %v3047 = vor.u32 %v3042, %v3046
      %v3049 = vshrl.u32 %v3016, 16
      %v3051 = vshll.u32 %v3016, 16
      %v3053 = vrot.slane %v3051, 1
      %v3054 = vor.u32 %v3049, %v3053
      %v3056 = vshrl.u32 %v3017, 16
      %v3058 = vshll.u32 %v3017, 16
      %v3060 = vrot.slane %v3058, 1
      %v3061 = vor.u32 %v3056, %v3060
      %v3063 = vshrl.u32 %v3018, 16
      %v3065 = vshll.u32 %v3018, 16
      %v3067 = vrot.slane %v3065, 1
      %v3068 = vor.u32 %v3063, %v3067
      %v3070 = vshrl.u32 %v3019, 16
      %v3072 = vshll.u32 %v3019, 16
      %v3074 = vrot.slane %v3072, 1
      %v3075 = vor.u32 %v3070, %v3074
      %3076 = vrot.lane.b32.xlu0 %v3026, 20
      %v3077 = vpop.permute.xlu0 %3076
      %3078 = vrot.lane.b32.xlu0 %v3033, 20
      %v3079 = vpop.permute.xlu0 %3078
      %3080 = vrot.lane.b32.xlu0 %v3040, 20
      %v3081 = vpop.permute.xlu0 %3080
      %3082 = vrot.lane.b32.xlu0 %v3047, 20
      %v3083 = vpop.permute.xlu0 %3082
      %3084 = vrot.lane.b32.xlu0 %v3054, 20
      %v3085 = vpop.permute.xlu0 %3084
      %3086 = vrot.lane.b32.xlu0 %v3061, 20
      %v3087 = vpop.permute.xlu0 %3086
      %3088 = vrot.lane.b32.xlu0 %v3068, 20
      %v3089 = vpop.permute.xlu0 %3088
      %3090 = vrot.lane.b32.xlu0 %v3075, 20
      %v3091 = vpop.permute.xlu0 %3090
      %v3100 = vunpack.c.l.b16 %v2588
      %v3101 = vunpack.c.l.b16 %v2589
      %v3102 = vunpack.c.l.b16 %v2590
      %v3103 = vunpack.c.l.b16 %v2591
      %v3104 = vunpack.c.l.b16 %v2592
      %v3105 = vunpack.c.l.b16 %v2593
      %v3106 = vunpack.c.l.b16 %v2594
      %v3107 = vunpack.c.l.b16 %v2595
      %v3108 = vpack.c.b16 %v3100, %v3100
      %v3109 = vpack.c.b16 %v3101, %v3101
      %v3110 = vpack.c.b16 %v3102, %v3102
      %v3111 = vpack.c.b16 %v3103, %v3103
      %v3112 = vpack.c.b16 %v3104, %v3104
      %v3113 = vpack.c.b16 %v3105, %v3105
      %v3114 = vpack.c.b16 %v3106, %v3106
      %v3115 = vpack.c.b16 %v3107, %v3107
      %3116 = vrot.lane.b32.xlu0 %v3108, 24
      %v3117 = vpop.permute.xlu0 %3116
      %3118 = vrot.lane.b32.xlu0 %v3109, 24
      %v3119 = vpop.permute.xlu0 %3118
      %3120 = vrot.lane.b32.xlu0 %v3110, 24
      %v3121 = vpop.permute.xlu0 %3120
      %3122 = vrot.lane.b32.xlu0 %v3111, 24
      %v3123 = vpop.permute.xlu0 %3122
      %3124 = vrot.lane.b32.xlu0 %v3112, 24
      %v3125 = vpop.permute.xlu0 %3124
      %3126 = vrot.lane.b32.xlu0 %v3113, 24
      %v3127 = vpop.permute.xlu0 %3126
      %3128 = vrot.lane.b32.xlu0 %v3114, 24
      %v3129 = vpop.permute.xlu0 %3128
      %3130 = vrot.lane.b32.xlu0 %v3115, 24
      %v3131 = vpop.permute.xlu0 %3130
      %v3148 = vunpack.c.l.b16 %v2596
      %v3149 = vunpack.c.l.b16 %v2597
      %v3150 = vunpack.c.l.b16 %v2598
      %v3151 = vunpack.c.l.b16 %v2599
      %v3152 = vunpack.c.l.b16 %v2600
      %v3153 = vunpack.c.l.b16 %v2601
      %v3154 = vunpack.c.l.b16 %v2602
      %v3155 = vunpack.c.l.b16 %v2603
      %v3156 = vunpack.c.l.b16 %v2604
      %v3157 = vunpack.c.l.b16 %v2605
      %v3158 = vunpack.c.l.b16 %v2606
      %v3159 = vunpack.c.l.b16 %v2607
      %v3160 = vunpack.c.l.b16 %v2608
      %v3161 = vunpack.c.l.b16 %v2609
      %v3162 = vunpack.c.l.b16 %v2610
      %v3163 = vunpack.c.l.b16 %v2611
      %v3164 = vpack.c.b16 %v3149, %v3148
      %v3165 = vpack.c.b16 %v3151, %v3150
      %v3166 = vpack.c.b16 %v3153, %v3152
      %v3167 = vpack.c.b16 %v3155, %v3154
      %v3168 = vpack.c.b16 %v3157, %v3156
      %v3169 = vpack.c.b16 %v3159, %v3158
      %v3170 = vpack.c.b16 %v3161, %v3160
      %v3171 = vpack.c.b16 %v3163, %v3162
      %v3173 = vshrl.u32 %v3164, 16
      %v3175 = vshll.u32 %v3164, 16
      %v3177 = vrot.slane %v3175, 1
      %v3178 = vor.u32 %v3173, %v3177
      %v3180 = vshrl.u32 %v3165, 16
      %v3182 = vshll.u32 %v3165, 16
      %v3184 = vrot.slane %v3182, 1
      %v3185 = vor.u32 %v3180, %v3184
      %v3187 = vshrl.u32 %v3166, 16
      %v3189 = vshll.u32 %v3166, 16
      %v3191 = vrot.slane %v3189, 1
      %v3192 = vor.u32 %v3187, %v3191
      %v3194 = vshrl.u32 %v3167, 16
      %v3196 = vshll.u32 %v3167, 16
      %v3198 = vrot.slane %v3196, 1
      %v3199 = vor.u32 %v3194, %v3198
      %v3201 = vshrl.u32 %v3168, 16
      %v3203 = vshll.u32 %v3168, 16
      %v3205 = vrot.slane %v3203, 1
      %v3206 = vor.u32 %v3201, %v3205
      %v3208 = vshrl.u32 %v3169, 16
      %v3210 = vshll.u32 %v3169, 16
      %v3212 = vrot.slane %v3210, 1
      %v3213 = vor.u32 %v3208, %v3212
      %v3215 = vshrl.u32 %v3170, 16
      %v3217 = vshll.u32 %v3170, 16
      %v3219 = vrot.slane %v3217, 1
      %v3220 = vor.u32 %v3215, %v3219
      %v3222 = vshrl.u32 %v3171, 16
      %v3224 = vshll.u32 %v3171, 16
      %v3226 = vrot.slane %v3224, 1
      %v3227 = vor.u32 %v3222, %v3226
      %3228 = vrot.lane.b32.xlu0 %v3178, 28
      %v3229 = vpop.permute.xlu0 %3228
      %3230 = vrot.lane.b32.xlu0 %v3185, 28
      %v3231 = vpop.permute.xlu0 %3230
      %3232 = vrot.lane.b32.xlu0 %v3192, 28
      %v3233 = vpop.permute.xlu0 %3232
      %3234 = vrot.lane.b32.xlu0 %v3199, 28
      %v3235 = vpop.permute.xlu0 %3234
      %3236 = vrot.lane.b32.xlu0 %v3206, 28
      %v3237 = vpop.permute.xlu0 %3236
      %3238 = vrot.lane.b32.xlu0 %v3213, 28
      %v3239 = vpop.permute.xlu0 %3238
      %3240 = vrot.lane.b32.xlu0 %v3220, 28
      %v3241 = vpop.permute.xlu0 %3240
      %3242 = vrot.lane.b32.xlu0 %v3227, 28
      %v3243 = vpop.permute.xlu0 %3242
      %v3252 = vunpack.c.l.b16 %v2612
      %v3253 = vunpack.c.l.b16 %v2613
      %v3254 = vunpack.c.l.b16 %v2614
      %v3255 = vunpack.c.l.b16 %v2615
      %v3256 = vunpack.c.l.b16 %v2616
      %v3257 = vunpack.c.l.b16 %v2617
      %v3258 = vunpack.c.l.b16 %v2618
      %v3259 = vunpack.c.l.b16 %v2619
      %v3260 = vpack.c.b16 %v3252, %v3100
      %v3261 = vpack.c.b16 %v3253, %v3101
      %v3262 = vpack.c.b16 %v3254, %v3102
      %v3263 = vpack.c.b16 %v3255, %v3103
      %v3264 = vpack.c.b16 %v3256, %v3104
      %v3265 = vpack.c.b16 %v3257, %v3105
      %v3266 = vpack.c.b16 %v3258, %v3106
      %v3267 = vpack.c.b16 %v3259, %v3107
      %v3269 = vshrl.u32 %v3260, 16
      %v3271 = vshll.u32 %v3260, 16
      %v3273 = vrot.slane %v3271, 1
      %v3274 = vor.u32 %v3269, %v3273
      %v3276 = vshrl.u32 %v3261, 16
      %v3278 = vshll.u32 %v3261, 16
      %v3280 = vrot.slane %v3278, 1
      %v3281 = vor.u32 %v3276, %v3280
      %v3283 = vshrl.u32 %v3262, 16
      %v3285 = vshll.u32 %v3262, 16
      %v3287 = vrot.slane %v3285, 1
      %v3288 = vor.u32 %v3283, %v3287
      %v3290 = vshrl.u32 %v3263, 16
      %v3292 = vshll.u32 %v3263, 16
      %v3294 = vrot.slane %v3292, 1
      %v3295 = vor.u32 %v3290, %v3294
      %v3297 = vshrl.u32 %v3264, 16
      %v3299 = vshll.u32 %v3264, 16
      %v3301 = vrot.slane %v3299, 1
      %v3302 = vor.u32 %v3297, %v3301
      %v3304 = vshrl.u32 %v3265, 16
      %v3306 = vshll.u32 %v3265, 16
      %v3308 = vrot.slane %v3306, 1
      %v3309 = vor.u32 %v3304, %v3308
      %v3311 = vshrl.u32 %v3266, 16
      %v3313 = vshll.u32 %v3266, 16
      %v3315 = vrot.slane %v3313, 1
      %v3316 = vor.u32 %v3311, %v3315
      %v3318 = vshrl.u32 %v3267, 16
      %v3320 = vshll.u32 %v3267, 16
      %v3322 = vrot.slane %v3320, 1
      %v3323 = vor.u32 %v3318, %v3322
      %3324 = vrot.lane.b32.xlu0 %v3274, 32
      %v3325 = vpop.permute.xlu0 %3324
      %3326 = vrot.lane.b32.xlu0 %v3281, 32
      %v3327 = vpop.permute.xlu0 %3326
      %3328 = vrot.lane.b32.xlu0 %v3288, 32
      %v3329 = vpop.permute.xlu0 %3328
      %3330 = vrot.lane.b32.xlu0 %v3295, 32
      %v3331 = vpop.permute.xlu0 %3330
      %3332 = vrot.lane.b32.xlu0 %v3302, 32
      %v3333 = vpop.permute.xlu0 %3332
      %3334 = vrot.lane.b32.xlu0 %v3309, 32
      %v3335 = vpop.permute.xlu0 %3334
      %3336 = vrot.lane.b32.xlu0 %v3316, 32
      %v3337 = vpop.permute.xlu0 %3336
      %3338 = vrot.lane.b32.xlu0 %v3323, 32
      %v3339 = vpop.permute.xlu0 %3338
      %v3342 = vsel %vm1116, %v2523, %v2717
      %v3345 = vsel %vm1116, %v2524, %v2719
      %v3348 = vsel %vm1116, %v2525, %v2721
      %v3351 = vsel %vm1116, %v2526, %v2723
      %v3354 = vsel %vm1116, %v2527, %v2725
      %v3357 = vsel %vm1116, %v2528, %v2727
      %v3360 = vsel %vm1116, %v2529, %v2729
      %v3363 = vsel %vm1116, %v2530, %v2731
      %v3365 = vsel %vm226, %v3342, %v2829
      %v3367 = vsel %vm226, %v3345, %v2831
      %v3369 = vsel %vm226, %v3348, %v2833
      %v3371 = vsel %vm226, %v3351, %v2835
      %v3373 = vsel %vm226, %v3354, %v2837
      %v3375 = vsel %vm226, %v3357, %v2839
      %v3377 = vsel %vm226, %v3360, %v2841
      %v3379 = vsel %vm226, %v3363, %v2843
      %v3381 = vsel %vm1157, %v3365, %v2869
      %v3383 = vsel %vm1157, %v3367, %v2871
      %v3385 = vsel %vm1157, %v3369, %v2873
      %v3387 = vsel %vm1157, %v3371, %v2875
      %v3389 = vsel %vm1157, %v3373, %v2877
      %v3391 = vsel %vm1157, %v3375, %v2879
      %v3393 = vsel %vm1157, %v3377, %v2881
      %v3395 = vsel %vm1157, %v3379, %v2883
      %v3397 = vsel %vm1174, %v3381, %v2981
      %v3399 = vsel %vm1174, %v3383, %v2983
      %v3401 = vsel %vm1174, %v3385, %v2985
      %v3403 = vsel %vm1174, %v3387, %v2987
      %v3405 = vsel %vm1174, %v3389, %v2989
      %v3407 = vsel %vm1174, %v3391, %v2991
      %v3409 = vsel %vm1174, %v3393, %v2993
      %v3411 = vsel %vm1174, %v3395, %v2995
      %v3413 = vsel %vm1191, %v3397, %v3077
      %v3415 = vsel %vm1191, %v3399, %v3079
      %v3417 = vsel %vm1191, %v3401, %v3081
      %v3419 = vsel %vm1191, %v3403, %v3083
      %v3421 = vsel %vm1191, %v3405, %v3085
      %v3423 = vsel %vm1191, %v3407, %v3087
      %v3425 = vsel %vm1191, %v3409, %v3089
      %v3427 = vsel %vm1191, %v3411, %v3091
      %v3429 = vsel %vm1208, %v3413, %v3117
      %v3431 = vsel %vm1208, %v3415, %v3119
      %v3433 = vsel %vm1208, %v3417, %v3121
      %v3435 = vsel %vm1208, %v3419, %v3123
      %v3437 = vsel %vm1208, %v3421, %v3125
      %v3439 = vsel %vm1208, %v3423, %v3127
      %v3441 = vsel %vm1208, %v3425, %v3129
      %v3443 = vsel %vm1208, %v3427, %v3131
      %v3445 = vsel %vm1225, %v3429, %v3229
      %v3447 = vsel %vm1225, %v3431, %v3231
      %v3449 = vsel %vm1225, %v3433, %v3233
      %v3451 = vsel %vm1225, %v3435, %v3235
      %v3453 = vsel %vm1225, %v3437, %v3237
      %v3455 = vsel %vm1225, %v3439, %v3239
      %v3457 = vsel %vm1225, %v3441, %v3241
      %v3459 = vsel %vm1225, %v3443, %v3243
      %v3461 = vsel %vm1242, %v3445, %v3325
      %v3463 = vsel %vm1242, %v3447, %v3327
      %v3465 = vsel %vm1242, %v3449, %v3329
      %v3467 = vsel %vm1242, %v3451, %v3331
      %v3469 = vsel %vm1242, %v3453, %v3333
      %v3471 = vsel %vm1242, %v3455, %v3335
      %v3473 = vsel %vm1242, %v3457, %v3337
      %v3475 = vsel %vm1242, %v3459, %v3339
      %v3484 = vunpack.c.l.b16 %v3461
      %v3485 = vunpack.c.l.b16 %v3463
      %v3486 = vunpack.c.l.b16 %v3465
      %v3487 = vunpack.c.l.b16 %v3467
      %v3488 = vunpack.c.l.b16 %v3469
      %v3489 = vunpack.c.l.b16 %v3471
      %v3490 = vunpack.c.l.b16 %v3473
      %v3491 = vunpack.c.l.b16 %v3475
      %v3492 = vpack.c.b16 %v3485, %v3484
      %v3493 = vpack.c.b16 %v3487, %v3486
      %v3494 = vpack.c.b16 %v3489, %v3488
      %v3495 = vpack.c.b16 %v3491, %v3490
      %v3497 = vsel %vm1300, %v3492, 0
      %v3500 = vsel %vm1300, %v3493, 0
      %v3503 = vsel %vm1300, %v3494, 0
      %v3506 = vsel %vm1300, %v3495, 0
      %3508 = vmatprep.subr.bf16.mxu0 0
      %3509 = vmatpush1.bf16.msra.mxu0 %v1295
      %3510 = vmatprep.subr.bf16.mxu0 0
      %3511 = vmatpush1.bf16.msra.mxu0 %v1296
      %3512 = vmatprep.subr.bf16.mxu0 0
      %3513 = vmatpush1.bf16.msra.mxu0 %v1315
      %3514 = vmatprep.subr.bf16.mxu0 0
      %3515 = vmatpush1.bf16.msra.mxu0 0
      %3516 = vmatprep.subr.bf16.mxu0 0
      %3517 = vmatpush1.bf16.msra.mxu0 0
      %3518 = vmatprep.subr.bf16.mxu0 0
      %3519 = vmatpush1.bf16.msra.mxu0 0
      %3520 = vmatprep.subr.bf16.mxu0 0
      %3521 = vmatpush1.bf16.msra.mxu0 0
      %3522 = vmatprep.subr.bf16.mxu0 0
      %3523 = vmatpush1.bf16.msra.mxu0 0
      %3524 = vmatprep.subr.bf16.mxu0 0
      %3525 = vmatpush1.bf16.msra.mxu0 0
      %3526 = vmatprep.subr.bf16.mxu0 0
      %3527 = vmatpush1.bf16.msra.mxu0 0
      %3528 = vmatprep.subr.bf16.mxu0 0
      %3529 = vmatpush1.bf16.msra.mxu0 0
      %3530 = vmatprep.subr.bf16.mxu0 0
      %3531 = vmatpush1.bf16.msra.mxu0 0
      %3532 = vmatprep.subr.bf16.mxu0 0
      %3533 = vmatpush1.bf16.msra.mxu0 0
      %3534 = vmatprep.subr.bf16.mxu0 0
      %3535 = vmatpush1.bf16.msra.mxu0 0
      %3536 = vmatprep.subr.bf16.mxu0 0
      %3537 = vmatpush1.bf16.msra.mxu0 0
      %3538 = vmatprep.subr.bf16.mxu0 0
      %3539 = vmatpush1.bf16.msra.mxu0 0
      %3540 = vmatprep.mubr.bf16.mxu0 0
      %3541 = vmatmul.mubr.bf16.gmra.mrb[0].mxu0 %v3497
      %v3542 = vpop.f32.mrb[0].mxu0
      %v3543 = vadd.f32 %v1263, %v3542
      %v3544 = vpop.f32.mrb[0].mxu0
      %v3545 = vpop.f32.mrb[0].mxu0
      %v3546 = vadd.f32 %v1263, %v3545
      %v3547 = vpop.f32.mrb[0].mxu0
      %3548 = vmatprep.mubr.bf16.mxu0 0
      %3549 = vmatmul.mubr.bf16.gmra.mrb[0].mxu0 %v3500
      %v3550 = vpop.f32.mrb[0].mxu0
      %v3551 = vadd.f32 %v1263, %v3550
      %v3552 = vpop.f32.mrb[0].mxu0
      %v3553 = vpop.f32.mrb[0].mxu0
      %v3554 = vadd.f32 %v1263, %v3553
      %v3555 = vpop.f32.mrb[0].mxu0
      %3556 = vmatprep.mubr.bf16.mxu0 0
      %3557 = vmatmul.mubr.bf16.gmra.mrb[0].mxu0 %v3503
      %v3558 = vpop.f32.mrb[0].mxu0
      %v3559 = vadd.f32 %v1263, %v3558
      %v3560 = vpop.f32.mrb[0].mxu0
      %v3561 = vpop.f32.mrb[0].mxu0
      %v3562 = vadd.f32 %v1263, %v3561
      %v3563 = vpop.f32.mrb[0].mxu0
      %3564 = vmatprep.mubr.bf16.mxu0 0
      %3565 = vmatmul.mubr.bf16.gmra.mrb[0].mxu0 %v3506
      %v3566 = vpop.f32.mrb[0].mxu0
      %v3567 = vadd.f32 %v1263, %v3566
      %v3568 = vpop.f32.mrb[0].mxu0
      %v3569 = vpop.f32.mrb[0].mxu0
      %v3570 = vadd.f32 %v1263, %v3569
      %v3571 = vpop.f32.mrb[0].mxu0
      %3572 = vdwg.mxu0
      %v3573 = vmax.f32 %v3543, 0.0
      %v3574 = vmax.f32 %v3546, 0.0
      %v3575 = vmax.f32 %v3551, 0.0
      %v3576 = vmax.f32 %v3554, 0.0
      %v3577 = vmax.f32 %v3559, 0.0
      %v3578 = vmax.f32 %v3562, 0.0
      %v3579 = vmax.f32 %v3567, 0.0
      %v3580 = vmax.f32 %v3570, 0.0
      %s3581 = scalar_lea.vmem [#allocation2], 24
      %3582 = vst.msk [vmem:[%s3581 + $0x9] sm:$0xff] %vm226, %v3573
      %3583 = vst.msk [vmem:[%s3581 + $0x21] sm:$0xff] %vm226, %v3574
      %3584 = vst.msk [vmem:[%s3581 + $0x39] sm:$0xff] %vm226, %v3575
      %3585 = vst.msk [vmem:[%s3581 + $0x51] sm:$0xff] %vm226, %v3576
      %3586 = vst.msk [vmem:[%s3581 + $0x69] sm:$0xff] %vm226, %v3577
      %3587 = vst.msk [vmem:[%s3581 + $0x81] sm:$0xff] %vm226, %v3578
      %3588 = vst.msk [vmem:[%s3581 + $0x99] sm:$0xff] %vm226, %v3579
      %3589 = vst.msk [vmem:[%s3581 + $0xb1] sm:$0xff] %vm226, %v3580
      %v3590 = vld [vmem:[%s330 + $0x4] sm:$0xf]
      %v3591 = vld [vmem:[%s330 + $0x8] sm:$0x1]
      %v3592 = vld [vmem:[%s330 + $0x10] sm:$0xf]
      %v3593 = vld [vmem:[%s330 + $0x14] sm:$0x1]
      %v3594 = vld [vmem:[%s330 + $0x1c] sm:$0xf]
      %v3595 = vld [vmem:[%s330 + $0x20] sm:$0x1]
      %v3596 = vld [vmem:[%s330 + $0x28] sm:$0xf]
      %v3597 = vld [vmem:[%s330 + $0x2c] sm:$0x1]
      %v3598 = vld [vmem:[%s330 + $0x34] sm:$0xf]
      %v3599 = vld [vmem:[%s330 + $0x38] sm:$0x1]
      %v3600 = vld [vmem:[%s330 + $0x40] sm:$0xf]
      %v3601 = vld [vmem:[%s330 + $0x44] sm:$0x1]
      %v3602 = vld [vmem:[%s330 + $0x4c] sm:$0xf]
      %v3603 = vld [vmem:[%s330 + $0x50] sm:$0x1]
      %v3604 = vld [vmem:[%s330 + $0x58] sm:$0xf]
      %v3605 = vld [vmem:[%s330 + $0x5c] sm:$0x1]
      %v3606 = vld [vmem:[%s330] sm:$0xf]
      %v3607 = vld [vmem:[%s330 + $0x4] sm:$0x1]
      %v3608 = vld [vmem:[%s330 + $0xc] sm:$0xf]
      %v3609 = vld [vmem:[%s330 + $0x10] sm:$0x1]
      %v3610 = vld [vmem:[%s330 + $0x18] sm:$0xf]
      %v3611 = vld [vmem:[%s330 + $0x1c] sm:$0x1]
      %v3612 = vld [vmem:[%s330 + $0x24] sm:$0xf]
      %v3613 = vld [vmem:[%s330 + $0x28] sm:$0x1]
      %v3614 = vld [vmem:[%s330 + $0x30] sm:$0xf]
      %v3615 = vld [vmem:[%s330 + $0x34] sm:$0x1]
      %v3616 = vld [vmem:[%s330 + $0x3c] sm:$0xf]
      %v3617 = vld [vmem:[%s330 + $0x40] sm:$0x1]
      %v3618 = vld [vmem:[%s330 + $0x48] sm:$0xf]
      %v3619 = vld [vmem:[%s330 + $0x4c] sm:$0x1]
      %v3620 = vld [vmem:[%s330 + $0x54] sm:$0xf]
      %v3621 = vld [vmem:[%s330 + $0x58] sm:$0x1]
      %v3622 = vld [vmem:[%s330 + $0x4] sm:$0xe]
      %v3623 = vld [vmem:[%s330 + $0x10] sm:$0xe]
      %v3624 = vld [vmem:[%s330 + $0x1c] sm:$0xe]
      %v3625 = vld [vmem:[%s330 + $0x28] sm:$0xe]
      %v3626 = vld [vmem:[%s330 + $0x34] sm:$0xe]
      %v3627 = vld [vmem:[%s330 + $0x40] sm:$0xe]
      %v3628 = vld [vmem:[%s330 + $0x4c] sm:$0xe]
      %v3629 = vld [vmem:[%s330 + $0x58] sm:$0xe]
      %v3630 = vld [vmem:[%s363 + $0x4] sm:$0xf]
      %v3631 = vld [vmem:[%s363 + $0x8] sm:$0x1]
      %v3632 = vld [vmem:[%s363 + $0x10] sm:$0xf]
      %v3633 = vld [vmem:[%s363 + $0x14] sm:$0x1]
      %v3634 = vld [vmem:[%s363 + $0x1c] sm:$0xf]
      %v3635 = vld [vmem:[%s363 + $0x20] sm:$0x1]
      %v3636 = vld [vmem:[%s363 + $0x28] sm:$0xf]
      %v3637 = vld [vmem:[%s363 + $0x2c] sm:$0x1]
      %v3638 = vld [vmem:[%s363 + $0x34] sm:$0xf]
      %v3639 = vld [vmem:[%s363 + $0x38] sm:$0x1]
      %v3640 = vld [vmem:[%s363 + $0x40] sm:$0xf]
      %v3641 = vld [vmem:[%s363 + $0x44] sm:$0x1]
      %v3642 = vld [vmem:[%s363 + $0x4c] sm:$0xf]
      %v3643 = vld [vmem:[%s363 + $0x50] sm:$0x1]
      %v3644 = vld [vmem:[%s363 + $0x58] sm:$0xf]
      %v3645 = vld [vmem:[%s363 + $0x5c] sm:$0x1]
      %v3646 = vld [vmem:[%s363] sm:$0xf]
      %v3647 = vld [vmem:[%s363 + $0x4] sm:$0x1]
      %v3648 = vld [vmem:[%s363 + $0xc] sm:$0xf]
      %v3649 = vld [vmem:[%s363 + $0x10] sm:$0x1]
      %v3650 = vld [vmem:[%s363 + $0x18] sm:$0xf]
      %v3651 = vld [vmem:[%s363 + $0x1c] sm:$0x1]
      %v3652 = vld [vmem:[%s363 + $0x24] sm:$0xf]
      %v3653 = vld [vmem:[%s363 + $0x28] sm:$0x1]
      %v3654 = vld [vmem:[%s363 + $0x30] sm:$0xf]
      %v3655 = vld [vmem:[%s363 + $0x34] sm:$0x1]
      %v3656 = vld [vmem:[%s363 + $0x3c] sm:$0xf]
      %v3657 = vld [vmem:[%s363 + $0x40] sm:$0x1]
      %v3658 = vld [vmem:[%s363 + $0x48] sm:$0xf]
      %v3659 = vld [vmem:[%s363 + $0x4c] sm:$0x1]
      %v3660 = vld [vmem:[%s363 + $0x54] sm:$0xf]
      %v3661 = vld [vmem:[%s363 + $0x58] sm:$0x1]
      %v3662 = vld [vmem:[%s363 + $0x4] sm:$0xe]
      %v3663 = vld [vmem:[%s363 + $0x10] sm:$0xe]
      %v3664 = vld [vmem:[%s363 + $0x1c] sm:$0xe]
      %v3665 = vld [vmem:[%s363 + $0x28] sm:$0xe]
      %v3666 = vld [vmem:[%s363 + $0x34] sm:$0xe]
      %v3667 = vld [vmem:[%s363 + $0x40] sm:$0xe]
      %v3668 = vld [vmem:[%s363 + $0x4c] sm:$0xe]
      %v3669 = vld [vmem:[%s363 + $0x58] sm:$0xe]
      %v3670 = vld [vmem:[%s2587 + $0x4] sm:$0xf]
      %v3671 = vld [vmem:[%s2587 + $0x8] sm:$0x1]
      %v3672 = vld [vmem:[%s2587 + $0x10] sm:$0xf]
      %v3673 = vld [vmem:[%s2587 + $0x14] sm:$0x1]
      %v3674 = vld [vmem:[%s2587 + $0x1c] sm:$0xf]
      %v3675 = vld [vmem:[%s2587 + $0x20] sm:$0x1]
      %v3676 = vld [vmem:[%s2587 + $0x28] sm:$0xf]
      %v3677 = vld [vmem:[%s2587 + $0x2c] sm:$0x1]
      %v3678 = vld [vmem:[%s2587 + $0x34] sm:$0xf]
      %v3679 = vld [vmem:[%s2587 + $0x38] sm:$0x1]
      %v3680 = vld [vmem:[%s2587 + $0x40] sm:$0xf]
      %v3681 = vld [vmem:[%s2587 + $0x44] sm:$0x1]
      %v3682 = vld [vmem:[%s2587 + $0x4c] sm:$0xf]
      %v3683 = vld [vmem:[%s2587 + $0x50] sm:$0x1]
      %v3684 = vld [vmem:[%s2587 + $0x58] sm:$0xf]
      %v3685 = vld [vmem:[%s2587 + $0x5c] sm:$0x1]
      %v3686 = vld [vmem:[%s2587] sm:$0xf]
      %v3687 = vld [vmem:[%s2587 + $0x4] sm:$0x1]
      %v3688 = vld [vmem:[%s2587 + $0xc] sm:$0xf]
      %v3689 = vld [vmem:[%s2587 + $0x10] sm:$0x1]
      %v3690 = vld [vmem:[%s2587 + $0x18] sm:$0xf]
      %v3691 = vld [vmem:[%s2587 + $0x1c] sm:$0x1]
      %v3692 = vld [vmem:[%s2587 + $0x24] sm:$0xf]
      %v3693 = vld [vmem:[%s2587 + $0x28] sm:$0x1]
      %v3694 = vld [vmem:[%s2587 + $0x30] sm:$0xf]
      %v3695 = vld [vmem:[%s2587 + $0x34] sm:$0x1]
      %v3696 = vld [vmem:[%s2587 + $0x3c] sm:$0xf]
      %v3697 = vld [vmem:[%s2587 + $0x40] sm:$0x1]
      %v3698 = vld [vmem:[%s2587 + $0x48] sm:$0xf]
      %v3699 = vld [vmem:[%s2587 + $0x4c] sm:$0x1]
      %v3700 = vld [vmem:[%s2587 + $0x54] sm:$0xf]
      %v3701 = vld [vmem:[%s2587 + $0x58] sm:$0x1]
      %v3702 = vld [vmem:[%s2587 + $0x4] sm:$0xe]
      %v3703 = vld [vmem:[%s2587 + $0x10] sm:$0xe]
      %v3704 = vld [vmem:[%s2587 + $0x1c] sm:$0xe]
      %v3705 = vld [vmem:[%s2587 + $0x28] sm:$0xe]
      %v3706 = vld [vmem:[%s2587 + $0x34] sm:$0xe]
      %v3707 = vld [vmem:[%s2587 + $0x40] sm:$0xe]
      %v3708 = vld [vmem:[%s2587 + $0x4c] sm:$0xe]
      %v3709 = vld [vmem:[%s2587 + $0x58] sm:$0xe]
      %v3726 = vunpack.c.l.b16 %v3590
      %v3727 = vunpack.c.l.b16 %v3591
      %v3728 = vunpack.c.l.b16 %v3592
      %v3729 = vunpack.c.l.b16 %v3593
      %v3730 = vunpack.c.l.b16 %v3594
      %v3731 = vunpack.c.l.b16 %v3595
      %v3732 = vunpack.c.l.b16 %v3596
      %v3733 = vunpack.c.l.b16 %v3597
      %v3734 = vunpack.c.l.b16 %v3598
      %v3735 = vunpack.c.l.b16 %v3599
      %v3736 = vunpack.c.l.b16 %v3600
      %v3737 = vunpack.c.l.b16 %v3601
      %v3738 = vunpack.c.l.b16 %v3602
      %v3739 = vunpack.c.l.b16 %v3603
      %v3740 = vunpack.c.l.b16 %v3604
      %v3741 = vunpack.c.l.b16 %v3605
      %v3742 = vpack.c.b16 %v3727, %v3726
      %v3743 = vpack.c.b16 %v3729, %v3728
      %v3744 = vpack.c.b16 %v3731, %v3730
      %v3745 = vpack.c.b16 %v3733, %v3732
      %v3746 = vpack.c.b16 %v3735, %v3734
      %v3747 = vpack.c.b16 %v3737, %v3736
      %v3748 = vpack.c.b16 %v3739, %v3738
      %v3749 = vpack.c.b16 %v3741, %v3740
      %v3766 = vunpack.c.l.b16 %v3606
      %v3767 = vunpack.c.l.b16 %v3607
      %v3768 = vunpack.c.l.b16 %v3608
      %v3769 = vunpack.c.l.b16 %v3609
      %v3770 = vunpack.c.l.b16 %v3610
      %v3771 = vunpack.c.l.b16 %v3611
      %v3772 = vunpack.c.l.b16 %v3612
      %v3773 = vunpack.c.l.b16 %v3613
      %v3774 = vunpack.c.l.b16 %v3614
      %v3775 = vunpack.c.l.b16 %v3615
      %v3776 = vunpack.c.l.b16 %v3616
      %v3777 = vunpack.c.l.b16 %v3617
      %v3778 = vunpack.c.l.b16 %v3618
      %v3779 = vunpack.c.l.b16 %v3619
      %v3780 = vunpack.c.l.b16 %v3620
      %v3781 = vunpack.c.l.b16 %v3621
      %v3782 = vpack.c.b16 %v3767, %v3766
      %v3783 = vpack.c.b16 %v3769, %v3768
      %v3784 = vpack.c.b16 %v3771, %v3770
      %v3785 = vpack.c.b16 %v3773, %v3772
      %v3786 = vpack.c.b16 %v3775, %v3774
      %v3787 = vpack.c.b16 %v3777, %v3776
      %v3788 = vpack.c.b16 %v3779, %v3778
      %v3789 = vpack.c.b16 %v3781, %v3780
      %3790 = vrot.lane.b32.xlu0 %v3782, 4
      %v3791 = vpop.permute.xlu0 %3790
      %3792 = vrot.lane.b32.xlu0 %v3783, 4
      %v3793 = vpop.permute.xlu0 %3792
      %3794 = vrot.lane.b32.xlu0 %v3784, 4
      %v3795 = vpop.permute.xlu0 %3794
      %3796 = vrot.lane.b32.xlu0 %v3785, 4
      %v3797 = vpop.permute.xlu0 %3796
      %3798 = vrot.lane.b32.xlu0 %v3786, 4
      %v3799 = vpop.permute.xlu0 %3798
      %3800 = vrot.lane.b32.xlu0 %v3787, 4
      %v3801 = vpop.permute.xlu0 %3800
      %3802 = vrot.lane.b32.xlu0 %v3788, 4
      %v3803 = vpop.permute.xlu0 %3802
      %3804 = vrot.lane.b32.xlu0 %v3789, 4
      %v3805 = vpop.permute.xlu0 %3804
      %v3814 = vunpack.c.l.b16 %v3622
      %v3815 = vunpack.c.l.b16 %v3623
      %v3816 = vunpack.c.l.b16 %v3624
      %v3817 = vunpack.c.l.b16 %v3625
      %v3818 = vunpack.c.l.b16 %v3626
      %v3819 = vunpack.c.l.b16 %v3627
      %v3820 = vunpack.c.l.b16 %v3628
      %v3821 = vunpack.c.l.b16 %v3629
      %v3822 = vpack.c.b16 %v3727, %v3814
      %v3823 = vpack.c.b16 %v3729, %v3815
      %v3824 = vpack.c.b16 %v3731, %v3816
      %v3825 = vpack.c.b16 %v3733, %v3817
      %v3826 = vpack.c.b16 %v3735, %v3818
      %v3827 = vpack.c.b16 %v3737, %v3819
      %v3828 = vpack.c.b16 %v3739, %v3820
      %v3829 = vpack.c.b16 %v3741, %v3821
      %v3831 = vshrl.u32 %v3822, 16
      %v3833 = vshll.u32 %v3822, 16
      %v3835 = vrot.slane %v3833, 1
      %v3836 = vor.u32 %v3831, %v3835
      %v3838 = vshrl.u32 %v3823, 16
      %v3840 = vshll.u32 %v3823, 16
      %v3842 = vrot.slane %v3840, 1
      %v3843 = vor.u32 %v3838, %v3842
      %v3845 = vshrl.u32 %v3824, 16
      %v3847 = vshll.u32 %v3824, 16
      %v3849 = vrot.slane %v3847, 1
      %v3850 = vor.u32 %v3845, %v3849
      %v3852 = vshrl.u32 %v3825, 16
      %v3854 = vshll.u32 %v3825, 16
      %v3856 = vrot.slane %v3854, 1
      %v3857 = vor.u32 %v3852, %v3856
      %v3859 = vshrl.u32 %v3826, 16
      %v3861 = vshll.u32 %v3826, 16
      %v3863 = vrot.slane %v3861, 1
      %v3864 = vor.u32 %v3859, %v3863
      %v3866 = vshrl.u32 %v3827, 16
      %v3868 = vshll.u32 %v3827, 16
      %v3870 = vrot.slane %v3868, 1
      %v3871 = vor.u32 %v3866, %v3870
      %v3873 = vshrl.u32 %v3828, 16
      %v3875 = vshll.u32 %v3828, 16
      %v3877 = vrot.slane %v3875, 1
      %v3878 = vor.u32 %v3873, %v3877
      %v3880 = vshrl.u32 %v3829, 16
      %v3882 = vshll.u32 %v3829, 16
      %v3884 = vrot.slane %v3882, 1
      %v3885 = vor.u32 %v3880, %v3884
      %3886 = vrot.lane.b32.xlu0 %v3836, 8
      %v3887 = vpop.permute.xlu0 %3886
      %3888 = vrot.lane.b32.xlu0 %v3843, 8
      %v3889 = vpop.permute.xlu0 %3888
      %3890 = vrot.lane.b32.xlu0 %v3850, 8
      %v3891 = vpop.permute.xlu0 %3890
      %3892 = vrot.lane.b32.xlu0 %v3857, 8
      %v3893 = vpop.permute.xlu0 %3892
      %3894 = vrot.lane.b32.xlu0 %v3864, 8
      %v3895 = vpop.permute.xlu0 %3894
      %3896 = vrot.lane.b32.xlu0 %v3871, 8
      %v3897 = vpop.permute.xlu0 %3896
      %3898 = vrot.lane.b32.xlu0 %v3878, 8
      %v3899 = vpop.permute.xlu0 %3898
      %3900 = vrot.lane.b32.xlu0 %v3885, 8
      %v3901 = vpop.permute.xlu0 %3900
      %v3918 = vunpack.c.l.b16 %v3630
      %v3919 = vunpack.c.l.b16 %v3631
      %v3920 = vunpack.c.l.b16 %v3632
      %v3921 = vunpack.c.l.b16 %v3633
      %v3922 = vunpack.c.l.b16 %v3634
      %v3923 = vunpack.c.l.b16 %v3635
      %v3924 = vunpack.c.l.b16 %v3636
      %v3925 = vunpack.c.l.b16 %v3637
      %v3926 = vunpack.c.l.b16 %v3638
      %v3927 = vunpack.c.l.b16 %v3639
      %v3928 = vunpack.c.l.b16 %v3640
      %v3929 = vunpack.c.l.b16 %v3641
      %v3930 = vunpack.c.l.b16 %v3642
      %v3931 = vunpack.c.l.b16 %v3643
      %v3932 = vunpack.c.l.b16 %v3644
      %v3933 = vunpack.c.l.b16 %v3645
      %v3934 = vpack.c.b16 %v3919, %v3918
      %v3935 = vpack.c.b16 %v3921, %v3920
      %v3936 = vpack.c.b16 %v3923, %v3922
      %v3937 = vpack.c.b16 %v3925, %v3924
      %v3938 = vpack.c.b16 %v3927, %v3926
      %v3939 = vpack.c.b16 %v3929, %v3928
      %v3940 = vpack.c.b16 %v3931, %v3930
      %v3941 = vpack.c.b16 %v3933, %v3932
      %3942 = vrot.lane.b32.xlu0 %v3934, 12
      %v3943 = vpop.permute.xlu0 %3942
      %3944 = vrot.lane.b32.xlu0 %v3935, 12
      %v3945 = vpop.permute.xlu0 %3944
      %3946 = vrot.lane.b32.xlu0 %v3936, 12
      %v3947 = vpop.permute.xlu0 %3946
      %3948 = vrot.lane.b32.xlu0 %v3937, 12
      %v3949 = vpop.permute.xlu0 %3948
      %3950 = vrot.lane.b32.xlu0 %v3938, 12
      %v3951 = vpop.permute.xlu0 %3950
      %3952 = vrot.lane.b32.xlu0 %v3939, 12
      %v3953 = vpop.permute.xlu0 %3952
      %3954 = vrot.lane.b32.xlu0 %v3940, 12
      %v3955 = vpop.permute.xlu0 %3954
      %3956 = vrot.lane.b32.xlu0 %v3941, 12
      %v3957 = vpop.permute.xlu0 %3956
      %v3974 = vunpack.c.l.b16 %v3646
      %v3975 = vunpack.c.l.b16 %v3647
      %v3976 = vunpack.c.l.b16 %v3648
      %v3977 = vunpack.c.l.b16 %v3649
      %v3978 = vunpack.c.l.b16 %v3650
      %v3979 = vunpack.c.l.b16 %v3651
      %v3980 = vunpack.c.l.b16 %v3652
      %v3981 = vunpack.c.l.b16 %v3653
      %v3982 = vunpack.c.l.b16 %v3654
      %v3983 = vunpack.c.l.b16 %v3655
      %v3984 = vunpack.c.l.b16 %v3656
      %v3985 = vunpack.c.l.b16 %v3657
      %v3986 = vunpack.c.l.b16 %v3658
      %v3987 = vunpack.c.l.b16 %v3659
      %v3988 = vunpack.c.l.b16 %v3660
      %v3989 = vunpack.c.l.b16 %v3661
      %v3990 = vpack.c.b16 %v3975, %v3974
      %v3991 = vpack.c.b16 %v3977, %v3976
      %v3992 = vpack.c.b16 %v3979, %v3978
      %v3993 = vpack.c.b16 %v3981, %v3980
      %v3994 = vpack.c.b16 %v3983, %v3982
      %v3995 = vpack.c.b16 %v3985, %v3984
      %v3996 = vpack.c.b16 %v3987, %v3986
      %v3997 = vpack.c.b16 %v3989, %v3988
      %3998 = vrot.lane.b32.xlu0 %v3990, 16
      %v3999 = vpop.permute.xlu0 %3998
      %4000 = vrot.lane.b32.xlu0 %v3991, 16
      %v4001 = vpop.permute.xlu0 %4000
      %4002 = vrot.lane.b32.xlu0 %v3992, 16
      %v4003 = vpop.permute.xlu0 %4002
      %4004 = vrot.lane.b32.xlu0 %v3993, 16
      %v4005 = vpop.permute.xlu0 %4004
      %4006 = vrot.lane.b32.xlu0 %v3994, 16
      %v4007 = vpop.permute.xlu0 %4006
      %4008 = vrot.lane.b32.xlu0 %v3995, 16
      %v4009 = vpop.permute.xlu0 %4008
      %4010 = vrot.lane.b32.xlu0 %v3996, 16
      %v4011 = vpop.permute.xlu0 %4010
      %4012 = vrot.lane.b32.xlu0 %v3997, 16
      %v4013 = vpop.permute.xlu0 %4012
      %v4022 = vunpack.c.l.b16 %v3662
      %v4023 = vunpack.c.l.b16 %v3663
      %v4024 = vunpack.c.l.b16 %v3664
      %v4025 = vunpack.c.l.b16 %v3665
      %v4026 = vunpack.c.l.b16 %v3666
      %v4027 = vunpack.c.l.b16 %v3667
      %v4028 = vunpack.c.l.b16 %v3668
      %v4029 = vunpack.c.l.b16 %v3669
      %v4030 = vpack.c.b16 %v3919, %v4022
      %v4031 = vpack.c.b16 %v3921, %v4023
      %v4032 = vpack.c.b16 %v3923, %v4024
      %v4033 = vpack.c.b16 %v3925, %v4025
      %v4034 = vpack.c.b16 %v3927, %v4026
      %v4035 = vpack.c.b16 %v3929, %v4027
      %v4036 = vpack.c.b16 %v3931, %v4028
      %v4037 = vpack.c.b16 %v3933, %v4029
      %v4039 = vshrl.u32 %v4030, 16
      %v4041 = vshll.u32 %v4030, 16
      %v4043 = vrot.slane %v4041, 1
      %v4044 = vor.u32 %v4039, %v4043
      %v4046 = vshrl.u32 %v4031, 16
      %v4048 = vshll.u32 %v4031, 16
      %v4050 = vrot.slane %v4048, 1
      %v4051 = vor.u32 %v4046, %v4050
      %v4053 = vshrl.u32 %v4032, 16
      %v4055 = vshll.u32 %v4032, 16
      %v4057 = vrot.slane %v4055, 1
      %v4058 = vor.u32 %v4053, %v4057
      %v4060 = vshrl.u32 %v4033, 16
      %v4062 = vshll.u32 %v4033, 16
      %v4064 = vrot.slane %v4062, 1
      %v4065 = vor.u32 %v4060, %v4064
      %v4067 = vshrl.u32 %v4034, 16
      %v4069 = vshll.u32 %v4034, 16
      %v4071 = vrot.slane %v4069, 1
      %v4072 = vor.u32 %v4067, %v4071
      %v4074 = vshrl.u32 %v4035, 16
      %v4076 = vshll.u32 %v4035, 16
      %v4078 = vrot.slane %v4076, 1
      %v4079 = vor.u32 %v4074, %v4078
      %v4081 = vshrl.u32 %v4036, 16
      %v4083 = vshll.u32 %v4036, 16
      %v4085 = vrot.slane %v4083, 1
      %v4086 = vor.u32 %v4081, %v4085
      %v4088 = vshrl.u32 %v4037, 16
      %v4090 = vshll.u32 %v4037, 16
      %v4092 = vrot.slane %v4090, 1
      %v4093 = vor.u32 %v4088, %v4092
      %4094 = vrot.lane.b32.xlu0 %v4044, 20
      %v4095 = vpop.permute.xlu0 %4094
      %4096 = vrot.lane.b32.xlu0 %v4051, 20
      %v4097 = vpop.permute.xlu0 %4096
      %4098 = vrot.lane.b32.xlu0 %v4058, 20
      %v4099 = vpop.permute.xlu0 %4098
      %4100 = vrot.lane.b32.xlu0 %v4065, 20
      %v4101 = vpop.permute.xlu0 %4100
      %4102 = vrot.lane.b32.xlu0 %v4072, 20
      %v4103 = vpop.permute.xlu0 %4102
      %4104 = vrot.lane.b32.xlu0 %v4079, 20
      %v4105 = vpop.permute.xlu0 %4104
      %4106 = vrot.lane.b32.xlu0 %v4086, 20
      %v4107 = vpop.permute.xlu0 %4106
      %4108 = vrot.lane.b32.xlu0 %v4093, 20
      %v4109 = vpop.permute.xlu0 %4108
      %v4126 = vunpack.c.l.b16 %v3670
      %v4127 = vunpack.c.l.b16 %v3671
      %v4128 = vunpack.c.l.b16 %v3672
      %v4129 = vunpack.c.l.b16 %v3673
      %v4130 = vunpack.c.l.b16 %v3674
      %v4131 = vunpack.c.l.b16 %v3675
      %v4132 = vunpack.c.l.b16 %v3676
      %v4133 = vunpack.c.l.b16 %v3677
      %v4134 = vunpack.c.l.b16 %v3678
      %v4135 = vunpack.c.l.b16 %v3679
      %v4136 = vunpack.c.l.b16 %v3680
      %v4137 = vunpack.c.l.b16 %v3681
      %v4138 = vunpack.c.l.b16 %v3682
      %v4139 = vunpack.c.l.b16 %v3683
      %v4140 = vunpack.c.l.b16 %v3684
      %v4141 = vunpack.c.l.b16 %v3685
      %v4142 = vpack.c.b16 %v4127, %v4126
      %v4143 = vpack.c.b16 %v4129, %v4128
      %v4144 = vpack.c.b16 %v4131, %v4130
      %v4145 = vpack.c.b16 %v4133, %v4132
      %v4146 = vpack.c.b16 %v4135, %v4134
      %v4147 = vpack.c.b16 %v4137, %v4136
      %v4148 = vpack.c.b16 %v4139, %v4138
      %v4149 = vpack.c.b16 %v4141, %v4140
      %4150 = vrot.lane.b32.xlu0 %v4142, 24
      %v4151 = vpop.permute.xlu0 %4150
      %4152 = vrot.lane.b32.xlu0 %v4143, 24
      %v4153 = vpop.permute.xlu0 %4152
      %4154 = vrot.lane.b32.xlu0 %v4144, 24
      %v4155 = vpop.permute.xlu0 %4154
      %4156 = vrot.lane.b32.xlu0 %v4145, 24
      %v4157 = vpop.permute.xlu0 %4156
      %4158 = vrot.lane.b32.xlu0 %v4146, 24
      %v4159 = vpop.permute.xlu0 %4158
      %4160 = vrot.lane.b32.xlu0 %v4147, 24
      %v4161 = vpop.permute.xlu0 %4160
      %4162 = vrot.lane.b32.xlu0 %v4148, 24
      %v4163 = vpop.permute.xlu0 %4162
      %4164 = vrot.lane.b32.xlu0 %v4149, 24
      %v4165 = vpop.permute.xlu0 %4164
      %v4182 = vunpack.c.l.b16 %v3686
      %v4183 = vunpack.c.l.b16 %v3687
      %v4184 = vunpack.c.l.b16 %v3688
      %v4185 = vunpack.c.l.b16 %v3689
      %v4186 = vunpack.c.l.b16 %v3690
      %v4187 = vunpack.c.l.b16 %v3691
      %v4188 = vunpack.c.l.b16 %v3692
      %v4189 = vunpack.c.l.b16 %v3693
      %v4190 = vunpack.c.l.b16 %v3694
      %v4191 = vunpack.c.l.b16 %v3695
      %v4192 = vunpack.c.l.b16 %v3696
      %v4193 = vunpack.c.l.b16 %v3697
      %v4194 = vunpack.c.l.b16 %v3698
      %v4195 = vunpack.c.l.b16 %v3699
      %v4196 = vunpack.c.l.b16 %v3700
      %v4197 = vunpack.c.l.b16 %v3701
      %v4198 = vpack.c.b16 %v4183, %v4182
      %v4199 = vpack.c.b16 %v4185, %v4184
      %v4200 = vpack.c.b16 %v4187, %v4186
      %v4201 = vpack.c.b16 %v4189, %v4188
      %v4202 = vpack.c.b16 %v4191, %v4190
      %v4203 = vpack.c.b16 %v4193, %v4192
      %v4204 = vpack.c.b16 %v4195, %v4194
      %v4205 = vpack.c.b16 %v4197, %v4196
      %4206 = vrot.lane.b32.xlu0 %v4198, 28
      %v4207 = vpop.permute.xlu0 %4206
      %4208 = vrot.lane.b32.xlu0 %v4199, 28
      %v4209 = vpop.permute.xlu0 %4208
      %4210 = vrot.lane.b32.xlu0 %v4200, 28
      %v4211 = vpop.permute.xlu0 %4210
      %4212 = vrot.lane.b32.xlu0 %v4201, 28
      %v4213 = vpop.permute.xlu0 %4212
      %4214 = vrot.lane.b32.xlu0 %v4202, 28
      %v4215 = vpop.permute.xlu0 %4214
      %4216 = vrot.lane.b32.xlu0 %v4203, 28
      %v4217 = vpop.permute.xlu0 %4216
      %4218 = vrot.lane.b32.xlu0 %v4204, 28
      %v4219 = vpop.permute.xlu0 %4218
      %4220 = vrot.lane.b32.xlu0 %v4205, 28
      %v4221 = vpop.permute.xlu0 %4220
      %v4230 = vunpack.c.l.b16 %v3702
      %v4231 = vunpack.c.l.b16 %v3703
      %v4232 = vunpack.c.l.b16 %v3704
      %v4233 = vunpack.c.l.b16 %v3705
      %v4234 = vunpack.c.l.b16 %v3706
      %v4235 = vunpack.c.l.b16 %v3707
      %v4236 = vunpack.c.l.b16 %v3708
      %v4237 = vunpack.c.l.b16 %v3709
      %v4238 = vpack.c.b16 %v4127, %v4230
      %v4239 = vpack.c.b16 %v4129, %v4231
      %v4240 = vpack.c.b16 %v4131, %v4232
      %v4241 = vpack.c.b16 %v4133, %v4233
      %v4242 = vpack.c.b16 %v4135, %v4234
      %v4243 = vpack.c.b16 %v4137, %v4235
      %v4244 = vpack.c.b16 %v4139, %v4236
      %v4245 = vpack.c.b16 %v4141, %v4237
      %v4247 = vshrl.u32 %v4238, 16
      %v4249 = vshll.u32 %v4238, 16
      %v4251 = vrot.slane %v4249, 1
      %v4252 = vor.u32 %v4247, %v4251
      %v4254 = vshrl.u32 %v4239, 16
      %v4256 = vshll.u32 %v4239, 16
      %v4258 = vrot.slane %v4256, 1
      %v4259 = vor.u32 %v4254, %v4258
      %v4261 = vshrl.u32 %v4240, 16
      %v4263 = vshll.u32 %v4240, 16
      %v4265 = vrot.slane %v4263, 1
      %v4266 = vor.u32 %v4261, %v4265
      %v4268 = vshrl.u32 %v4241, 16
      %v4270 = vshll.u32 %v4241, 16
      %v4272 = vrot.slane %v4270, 1
      %v4273 = vor.u32 %v4268, %v4272
      %v4275 = vshrl.u32 %v4242, 16
      %v4277 = vshll.u32 %v4242, 16
      %v4279 = vrot.slane %v4277, 1
      %v4280 = vor.u32 %v4275, %v4279
      %v4282 = vshrl.u32 %v4243, 16
      %v4284 = vshll.u32 %v4243, 16
      %v4286 = vrot.slane %v4284, 1
      %v4287 = vor.u32 %v4282, %v4286
      %v4289 = vshrl.u32 %v4244, 16
      %v4291 = vshll.u32 %v4244, 16
      %v4293 = vrot.slane %v4291, 1
      %v4294 = vor.u32 %v4289, %v4293
      %v4296 = vshrl.u32 %v4245, 16
      %v4298 = vshll.u32 %v4245, 16
      %v4300 = vrot.slane %v4298, 1
      %v4301 = vor.u32 %v4296, %v4300
      %4302 = vrot.lane.b32.xlu0 %v4252, 32
      %v4303 = vpop.permute.xlu0 %4302
      %4304 = vrot.lane.b32.xlu0 %v4259, 32
      %v4305 = vpop.permute.xlu0 %4304
      %4306 = vrot.lane.b32.xlu0 %v4266, 32
      %v4307 = vpop.permute.xlu0 %4306
      %4308 = vrot.lane.b32.xlu0 %v4273, 32
      %v4309 = vpop.permute.xlu0 %4308
      %4310 = vrot.lane.b32.xlu0 %v4280, 32
      %v4311 = vpop.permute.xlu0 %4310
      %4312 = vrot.lane.b32.xlu0 %v4287, 32
      %v4313 = vpop.permute.xlu0 %4312
      %4314 = vrot.lane.b32.xlu0 %v4294, 32
      %v4315 = vpop.permute.xlu0 %4314
      %4316 = vrot.lane.b32.xlu0 %v4301, 32
      %v4317 = vpop.permute.xlu0 %4316
      %v4320 = vsel %vm1116, %v3742, %v3791
      %v4323 = vsel %vm1116, %v3743, %v3793
      %v4326 = vsel %vm1116, %v3744, %v3795
      %v4329 = vsel %vm1116, %v3745, %v3797
      %v4332 = vsel %vm1116, %v3746, %v3799
      %v4335 = vsel %vm1116, %v3747, %v3801
      %v4338 = vsel %vm1116, %v3748, %v3803
      %v4341 = vsel %vm1116, %v3749, %v3805
      %v4343 = vsel %vm226, %v4320, %v3887
      %v4345 = vsel %vm226, %v4323, %v3889
      %v4347 = vsel %vm226, %v4326, %v3891
      %v4349 = vsel %vm226, %v4329, %v3893
      %v4351 = vsel %vm226, %v4332, %v3895
      %v4353 = vsel %vm226, %v4335, %v3897
      %v4355 = vsel %vm226, %v4338, %v3899
      %v4357 = vsel %vm226, %v4341, %v3901
      %v4359 = vsel %vm1157, %v4343, %v3943
      %v4361 = vsel %vm1157, %v4345, %v3945
      %v4363 = vsel %vm1157, %v4347, %v3947
      %v4365 = vsel %vm1157, %v4349, %v3949
      %v4367 = vsel %vm1157, %v4351, %v3951
      %v4369 = vsel %vm1157, %v4353, %v3953
      %v4371 = vsel %vm1157, %v4355, %v3955
      %v4373 = vsel %vm1157, %v4357, %v3957
      %v4375 = vsel %vm1174, %v4359, %v3999
      %v4377 = vsel %vm1174, %v4361, %v4001
      %v4379 = vsel %vm1174, %v4363, %v4003
      %v4381 = vsel %vm1174, %v4365, %v4005
      %v4383 = vsel %vm1174, %v4367, %v4007
      %v4385 = vsel %vm1174, %v4369, %v4009
      %v4387 = vsel %vm1174, %v4371, %v4011
      %v4389 = vsel %vm1174, %v4373, %v4013
      %v4391 = vsel %vm1191, %v4375, %v4095
      %v4393 = vsel %vm1191, %v4377, %v4097
      %v4395 = vsel %vm1191, %v4379, %v4099
      %v4397 = vsel %vm1191, %v4381, %v4101
      %v4399 = vsel %vm1191, %v4383, %v4103
      %v4401 = vsel %vm1191, %v4385, %v4105
      %v4403 = vsel %vm1191, %v4387, %v4107
      %v4405 = vsel %vm1191, %v4389, %v4109
      %v4407 = vsel %vm1208, %v4391, %v4151
      %v4409 = vsel %vm1208, %v4393, %v4153
      %v4411 = vsel %vm1208, %v4395, %v4155
      %v4413 = vsel %vm1208, %v4397, %v4157
      %v4415 = vsel %vm1208, %v4399, %v4159
      %v4417 = vsel %vm1208, %v4401, %v4161
      %v4419 = vsel %vm1208, %v4403, %v4163
      %v4421 = vsel %vm1208, %v4405, %v4165
      %v4423 = vsel %vm1225, %v4407, %v4207
      %v4425 = vsel %vm1225, %v4409, %v4209
      %v4427 = vsel %vm1225, %v4411, %v4211
      %v4429 = vsel %vm1225, %v4413, %v4213
      %v4431 = vsel %vm1225, %v4415, %v4215
      %v4433 = vsel %vm1225, %v4417, %v4217
      %v4435 = vsel %vm1225, %v4419, %v4219
      %v4437 = vsel %vm1225, %v4421, %v4221
      %v4439 = vsel %vm1242, %v4423, %v4303
      %v4441 = vsel %vm1242, %v4425, %v4305
      %v4443 = vsel %vm1242, %v4427, %v4307
      %v4445 = vsel %vm1242, %v4429, %v4309
      %v4447 = vsel %vm1242, %v4431, %v4311
      %v4449 = vsel %vm1242, %v4433, %v4313
      %v4451 = vsel %vm1242, %v4435, %v4315
      %v4453 = vsel %vm1242, %v4437, %v4317
      %v4462 = vunpack.c.l.b16 %v4439
      %v4463 = vunpack.c.h.b16 %v4439
      %v4464 = vunpack.c.l.b16 %v4441
      %v4465 = vunpack.c.h.b16 %v4441
      %v4466 = vunpack.c.l.b16 %v4443
      %v4467 = vunpack.c.h.b16 %v4443
      %v4468 = vunpack.c.l.b16 %v4445
      %v4469 = vunpack.c.h.b16 %v4445
      %v4470 = vunpack.c.l.b16 %v4447
      %v4471 = vunpack.c.h.b16 %v4447
      %v4472 = vunpack.c.l.b16 %v4449
      %v4473 = vunpack.c.h.b16 %v4449
      %v4474 = vunpack.c.l.b16 %v4451
      %v4475 = vunpack.c.h.b16 %v4451
      %v4476 = vunpack.c.l.b16 %v4453
      %v4477 = vunpack.c.h.b16 %v4453
      %v4478 = vpack.c.b16 %v4462, %v4462
      %v4479 = vpack.c.b16 %v4463, %v4463
      %v4480 = vpack.c.b16 %v4464, %v4464
      %v4481 = vpack.c.b16 %v4465, %v4465
      %v4482 = vpack.c.b16 %v4466, %v4466
      %v4483 = vpack.c.b16 %v4467, %v4467
      %v4484 = vpack.c.b16 %v4468, %v4468
      %v4485 = vpack.c.b16 %v4469, %v4469
      %v4486 = vpack.c.b16 %v4470, %v4470
      %v4487 = vpack.c.b16 %v4471, %v4471
      %v4488 = vpack.c.b16 %v4472, %v4472
      %v4489 = vpack.c.b16 %v4473, %v4473
      %v4490 = vpack.c.b16 %v4474, %v4474
      %v4491 = vpack.c.b16 %v4475, %v4475
      %v4492 = vpack.c.b16 %v4476, %v4476
      %v4493 = vpack.c.b16 %v4477, %v4477
      %v4495 = vshrl.u32 %v4478, 16
      %v4497 = vrot.slane %v4495, 4
      %v4498 = vshll.u32 %v4478, 16
      %v4500 = vrot.slane %v4498, 5
      %v4501 = vor.u32 %v4497, %v4500
      %v4502 = vrot.slane %v4501, 4
      %v4504 = vshll.u32 %v4479, 16
      %v4506 = vrot.slane %v4504, 5
      %v4507 = vsel %vm2305, %v4502, %v4506
      %v4509 = vshrl.u32 %v4480, 16
      %v4511 = vrot.slane %v4509, 4
      %v4512 = vshll.u32 %v4480, 16
      %v4514 = vrot.slane %v4512, 5
      %v4515 = vor.u32 %v4511, %v4514
      %v4516 = vrot.slane %v4515, 4
      %v4518 = vshll.u32 %v4481, 16
      %v4520 = vrot.slane %v4518, 5
      %v4521 = vsel %vm2305, %v4516, %v4520
      %v4523 = vshrl.u32 %v4482, 16
      %v4525 = vrot.slane %v4523, 4
      %v4526 = vshll.u32 %v4482, 16
      %v4528 = vrot.slane %v4526, 5
      %v4529 = vor.u32 %v4525, %v4528
      %v4530 = vrot.slane %v4529, 4
      %v4532 = vshll.u32 %v4483, 16
      %v4534 = vrot.slane %v4532, 5
      %v4535 = vsel %vm2305, %v4530, %v4534
      %v4537 = vshrl.u32 %v4484, 16
      %v4539 = vrot.slane %v4537, 4
      %v4540 = vshll.u32 %v4484, 16
      %v4542 = vrot.slane %v4540, 5
      %v4543 = vor.u32 %v4539, %v4542
      %v4544 = vrot.slane %v4543, 4
      %v4546 = vshll.u32 %v4485, 16
      %v4548 = vrot.slane %v4546, 5
      %v4549 = vsel %vm2305, %v4544, %v4548
      %v4551 = vshrl.u32 %v4486, 16
      %v4553 = vrot.slane %v4551, 4
      %v4554 = vshll.u32 %v4486, 16
      %v4556 = vrot.slane %v4554, 5
      %v4557 = vor.u32 %v4553, %v4556
      %v4558 = vrot.slane %v4557, 4
      %v4560 = vshll.u32 %v4487, 16
      %v4562 = vrot.slane %v4560, 5
      %v4563 = vsel %vm2305, %v4558, %v4562
      %v4565 = vshrl.u32 %v4488, 16
      %v4567 = vrot.slane %v4565, 4
      %v4568 = vshll.u32 %v4488, 16
      %v4570 = vrot.slane %v4568, 5
      %v4571 = vor.u32 %v4567, %v4570
      %v4572 = vrot.slane %v4571, 4
      %v4574 = vshll.u32 %v4489, 16
      %v4576 = vrot.slane %v4574, 5
      %v4577 = vsel %vm2305, %v4572, %v4576
      %v4579 = vshrl.u32 %v4490, 16
      %v4581 = vrot.slane %v4579, 4
      %v4582 = vshll.u32 %v4490, 16
      %v4584 = vrot.slane %v4582, 5
      %v4585 = vor.u32 %v4581, %v4584
      %v4586 = vrot.slane %v4585, 4
      %v4588 = vshll.u32 %v4491, 16
      %v4590 = vrot.slane %v4588, 5
      %v4591 = vsel %vm2305, %v4586, %v4590
      %v4593 = vshrl.u32 %v4492, 16
      %v4595 = vrot.slane %v4593, 4
      %v4596 = vshll.u32 %v4492, 16
      %v4598 = vrot.slane %v4596, 5
      %v4599 = vor.u32 %v4595, %v4598
      %v4600 = vrot.slane %v4599, 4
      %v4602 = vshll.u32 %v4493, 16
      %v4604 = vrot.slane %v4602, 5
      %v4605 = vsel %vm2305, %v4600, %v4604
      %v4606 = vunpack.c.l.b16 %v4507
      %v4607 = vunpack.c.l.b16 %v4521
      %v4608 = vunpack.c.l.b16 %v4535
      %v4609 = vunpack.c.l.b16 %v4549
      %v4610 = vunpack.c.l.b16 %v4563
      %v4611 = vunpack.c.l.b16 %v4577
      %v4612 = vunpack.c.l.b16 %v4591
      %v4613 = vunpack.c.l.b16 %v4605
      %v4614 = vpack.c.b16 %v4607, %v4606
      %v4615 = vpack.c.b16 %v4609, %v4608
      %v4616 = vpack.c.b16 %v4611, %v4610
      %v4617 = vpack.c.b16 %v4613, %v4612
      %v4619 = vsel %vm1300, %v4614, 0
      %v4622 = vsel %vm1300, %v4615, 0
      %v4625 = vsel %vm1300, %v4616, 0
      %v4628 = vsel %vm1300, %v4617, 0
      %4630 = vmatprep.subr.bf16.mxu0 0
      %4631 = vmatpush1.bf16.msra.mxu0 %v1295
      %4632 = vmatprep.subr.bf16.mxu0 0
      %4633 = vmatpush1.bf16.msra.mxu0 %v1296
      %4634 = vmatprep.subr.bf16.mxu0 0
      %4635 = vmatpush1.bf16.msra.mxu0 %v1315
      %4636 = vmatprep.subr.bf16.mxu0 0
      %4637 = vmatpush1.bf16.msra.mxu0 0
      %4638 = vmatprep.subr.bf16.mxu0 0
      %4639 = vmatpush1.bf16.msra.mxu0 0
      %4640 = vmatprep.subr.bf16.mxu0 0
      %4641 = vmatpush1.bf16.msra.mxu0 0
      %4642 = vmatprep.subr.bf16.mxu0 0
      %4643 = vmatpush1.bf16.msra.mxu0 0
      %4644 = vmatprep.subr.bf16.mxu0 0
      %4645 = vmatpush1.bf16.msra.mxu0 0
      %4646 = vmatprep.subr.bf16.mxu0 0
      %4647 = vmatpush1.bf16.msra.mxu0 0
      %4648 = vmatprep.subr.bf16.mxu0 0
      %4649 = vmatpush1.bf16.msra.mxu0 0
      %4650 = vmatprep.subr.bf16.mxu0 0
      %4651 = vmatpush1.bf16.msra.mxu0 0
      %4652 = vmatprep.subr.bf16.mxu0 0
      %4653 = vmatpush1.bf16.msra.mxu0 0
      %4654 = vmatprep.subr.bf16.mxu0 0
      %4655 = vmatpush1.bf16.msra.mxu0 0
      %4656 = vmatprep.subr.bf16.mxu0 0
      %4657 = vmatpush1.bf16.msra.mxu0 0
      %4658 = vmatprep.subr.bf16.mxu0 0
      %4659 = vmatpush1.bf16.msra.mxu0 0
      %4660 = vmatprep.subr.bf16.mxu0 0
      %4661 = vmatpush1.bf16.msra.mxu0 0
      %4662 = vmatprep.mubr.bf16.mxu0 0
      %4663 = vmatmul.mubr.bf16.gmra.mrb[0].mxu0 %v4619
      %v4664 = vpop.f32.mrb[0].mxu0
      %v4665 = vadd.f32 %v1263, %v4664
      %v4666 = vpop.f32.mrb[0].mxu0
      %v4667 = vpop.f32.mrb[0].mxu0
      %v4668 = vadd.f32 %v1263, %v4667
      %v4669 = vpop.f32.mrb[0].mxu0
      %4670 = vmatprep.mubr.bf16.mxu0 0
      %4671 = vmatmul.mubr.bf16.gmra.mrb[0].mxu0 %v4622
      %v4672 = vpop.f32.mrb[0].mxu0
      %v4673 = vadd.f32 %v1263, %v4672
      %v4674 = vpop.f32.mrb[0].mxu0
      %v4675 = vpop.f32.mrb[0].mxu0
      %v4676 = vadd.f32 %v1263, %v4675
      %v4677 = vpop.f32.mrb[0].mxu0
      %4678 = vmatprep.mubr.bf16.mxu0 0
      %4679 = vmatmul.mubr.bf16.gmra.mrb[0].mxu0 %v4625
      %v4680 = vpop.f32.mrb[0].mxu0
      %v4681 = vadd.f32 %v1263, %v4680
      %v4682 = vpop.f32.mrb[0].mxu0
      %v4683 = vpop.f32.mrb[0].mxu0
      %v4684 = vadd.f32 %v1263, %v4683
      %v4685 = vpop.f32.mrb[0].mxu0
      %4686 = vmatprep.mubr.bf16.mxu0 0
      %4687 = vmatmul.mubr.bf16.gmra.mrb[0].mxu0 %v4628
      %v4688 = vpop.f32.mrb[0].mxu0
      %v4689 = vadd.f32 %v1263, %v4688
      %v4690 = vpop.f32.mrb[0].mxu0
      %v4691 = vpop.f32.mrb[0].mxu0
      %v4692 = vadd.f32 %v1263, %v4691
      %v4693 = vpop.f32.mrb[0].mxu0
      %4694 = vdwg.mxu0
      %v4695 = vmax.f32 %v4665, 0.0
      %v4696 = vmax.f32 %v4668, 0.0
      %v4697 = vmax.f32 %v4673, 0.0
      %v4698 = vmax.f32 %v4676, 0.0
      %v4699 = vmax.f32 %v4681, 0.0
      %v4700 = vmax.f32 %v4684, 0.0
      %v4701 = vmax.f32 %v4689, 0.0
      %v4702 = vmax.f32 %v4692, 0.0
      %4703 = vst.msk [vmem:[%s3581 + $0x1] sm:$0xff] %vm226, %v4695
      %4704 = vst.msk [vmem:[%s3581 + $0x19] sm:$0xff] %vm226, %v4696
      %4705 = vst.msk [vmem:[%s3581 + $0x31] sm:$0xff] %vm226, %v4697
      %4706 = vst.msk [vmem:[%s3581 + $0x49] sm:$0xff] %vm226, %v4698
      %4707 = vst.msk [vmem:[%s3581 + $0x61] sm:$0xff] %vm226, %v4699
      %4708 = vst.msk [vmem:[%s3581 + $0x79] sm:$0xff] %vm226, %v4700
      %4709 = vst.msk [vmem:[%s3581 + $0x91] sm:$0xff] %vm226, %v4701
      %4710 = vst.msk [vmem:[%s3581 + $0xa9] sm:$0xff] %vm226, %v4702
      %v4711 = vld [vmem:[#allocation2] sm:$0xff]
      %v4712 = vld [vmem:[#allocation2 + $0x18] sm:$0xff]
      %v4713 = vld [vmem:[#allocation2 + $0x30] sm:$0xff]
      %v4714 = vld [vmem:[#allocation2 + $0x48] sm:$0xff]
      %v4715 = vld [vmem:[#allocation2 + $0x60] sm:$0xff]
      %v4716 = vld [vmem:[#allocation2 + $0x78] sm:$0xff]
      %v4717 = vld [vmem:[#allocation2 + $0x90] sm:$0xff]
      %v4718 = vld [vmem:[#allocation2 + $0xa8] sm:$0xff]
      %v4719 = vld [vmem:[#allocation2 + $0x9] sm:$0xff]
      %v4720 = vld [vmem:[#allocation2 + $0x21] sm:$0xff]
      %v4721 = vld [vmem:[#allocation2 + $0x39] sm:$0xff]
      %v4722 = vld [vmem:[#allocation2 + $0x51] sm:$0xff]
      %v4723 = vld [vmem:[#allocation2 + $0x69] sm:$0xff]
      %v4724 = vld [vmem:[#allocation2 + $0x81] sm:$0xff]
      %v4725 = vld [vmem:[#allocation2 + $0x99] sm:$0xff]
      %v4726 = vld [vmem:[#allocation2 + $0xb1] sm:$0xff]
      %v4727 = vld [vmem:[#allocation2 + $0x1] sm:$0xff]
      %v4728 = vld [vmem:[#allocation2 + $0x19] sm:$0xff]
      %v4729 = vld [vmem:[#allocation2 + $0x31] sm:$0xff]
      %v4730 = vld [vmem:[#allocation2 + $0x49] sm:$0xff]
      %v4731 = vld [vmem:[#allocation2 + $0x61] sm:$0xff]
      %v4732 = vld [vmem:[#allocation2 + $0x79] sm:$0xff]
      %v4733 = vld [vmem:[#allocation2 + $0x91] sm:$0xff]
      %v4734 = vld [vmem:[#allocation2 + $0xa9] sm:$0xff]
      %v4735 = vld [vmem:[%s1390] sm:$0xff]
      %v4736 = vld [vmem:[%s1390 + $0x18] sm:$0xff]
      %v4737 = vld [vmem:[%s1390 + $0x30] sm:$0xff]
      %v4738 = vld [vmem:[%s1390 + $0x48] sm:$0xff]
      %v4739 = vld [vmem:[%s1390 + $0x60] sm:$0xff]
      %v4740 = vld [vmem:[%s1390 + $0x78] sm:$0xff]
      %v4741 = vld [vmem:[%s1390 + $0x90] sm:$0xff]
      %v4742 = vld [vmem:[%s1390 + $0xa8] sm:$0xff]
      %v4743 = vld [vmem:[%s1390 + $0x9] sm:$0xff]
      %v4744 = vld [vmem:[%s1390 + $0x21] sm:$0xff]
      %v4745 = vld [vmem:[%s1390 + $0x39] sm:$0xff]
      %v4746 = vld [vmem:[%s1390 + $0x51] sm:$0xff]
      %v4747 = vld [vmem:[%s1390 + $0x69] sm:$0xff]
      %v4748 = vld [vmem:[%s1390 + $0x81] sm:$0xff]
      %v4749 = vld [vmem:[%s1390 + $0x99] sm:$0xff]
      %v4750 = vld [vmem:[%s1390 + $0xb1] sm:$0xff]
      %v4751 = vld [vmem:[%s1390 + $0x1] sm:$0xff]
      %v4752 = vld [vmem:[%s1390 + $0x19] sm:$0xff]
      %v4753 = vld [vmem:[%s1390 + $0x31] sm:$0xff]
      %v4754 = vld [vmem:[%s1390 + $0x49] sm:$0xff]
      %v4755 = vld [vmem:[%s1390 + $0x61] sm:$0xff]
      %v4756 = vld [vmem:[%s1390 + $0x79] sm:$0xff]
      %v4757 = vld [vmem:[%s1390 + $0x91] sm:$0xff]
      %v4758 = vld [vmem:[%s1390 + $0xa9] sm:$0xff]
      %v4759 = vld [vmem:[%s3581] sm:$0xff]
      %v4760 = vld [vmem:[%s3581 + $0x18] sm:$0xff]
      %v4761 = vld [vmem:[%s3581 + $0x30] sm:$0xff]
      %v4762 = vld [vmem:[%s3581 + $0x48] sm:$0xff]
      %v4763 = vld [vmem:[%s3581 + $0x60] sm:$0xff]
      %v4764 = vld [vmem:[%s3581 + $0x78] sm:$0xff]
      %v4765 = vld [vmem:[%s3581 + $0x90] sm:$0xff]
      %v4766 = vld [vmem:[%s3581 + $0xa8] sm:$0xff]
      %v4767 = vld [vmem:[%s3581 + $0x9] sm:$0xff]
      %v4768 = vld [vmem:[%s3581 + $0x21] sm:$0xff]
      %v4769 = vld [vmem:[%s3581 + $0x39] sm:$0xff]
      %v4770 = vld [vmem:[%s3581 + $0x51] sm:$0xff]
      %v4771 = vld [vmem:[%s3581 + $0x69] sm:$0xff]
      %v4772 = vld [vmem:[%s3581 + $0x81] sm:$0xff]
      %v4773 = vld [vmem:[%s3581 + $0x99] sm:$0xff]
      %v4774 = vld [vmem:[%s3581 + $0xb1] sm:$0xff]
      %v4775 = vld [vmem:[%s3581 + $0x1] sm:$0xff]
      %v4776 = vld [vmem:[%s3581 + $0x19] sm:$0xff]
      %v4777 = vld [vmem:[%s3581 + $0x31] sm:$0xff]
      %v4778 = vld [vmem:[%s3581 + $0x49] sm:$0xff]
      %v4779 = vld [vmem:[%s3581 + $0x61] sm:$0xff]
      %v4780 = vld [vmem:[%s3581 + $0x79] sm:$0xff]
      %v4781 = vld [vmem:[%s3581 + $0x91] sm:$0xff]
      %v4782 = vld [vmem:[%s3581 + $0xa9] sm:$0xff]
      %4791 = vrot.lane.b32.xlu0 %v4719, 8
      %v4792 = vpop.permute.xlu0 %4791
      %4793 = vrot.lane.b32.xlu0 %v4720, 8
      %v4794 = vpop.permute.xlu0 %4793
      %4795 = vrot.lane.b32.xlu0 %v4721, 8
      %v4796 = vpop.permute.xlu0 %4795
      %4797 = vrot.lane.b32.xlu0 %v4722, 8
      %v4798 = vpop.permute.xlu0 %4797
      %4799 = vrot.lane.b32.xlu0 %v4723, 8
      %v4800 = vpop.permute.xlu0 %4799
      %4801 = vrot.lane.b32.xlu0 %v4724, 8
      %v4802 = vpop.permute.xlu0 %4801
      %4803 = vrot.lane.b32.xlu0 %v4725, 8
      %v4804 = vpop.permute.xlu0 %4803
      %4805 = vrot.lane.b32.xlu0 %v4726, 8
      %v4806 = vpop.permute.xlu0 %4805
      %4823 = vrot.lane.b32.xlu0 %v4727, 16
      %v4824 = vpop.permute.xlu0 %4823
      %4825 = vrot.lane.b32.xlu0 %v4728, 16
      %v4826 = vpop.permute.xlu0 %4825
      %4827 = vrot.lane.b32.xlu0 %v4729, 16
      %v4828 = vpop.permute.xlu0 %4827
      %4829 = vrot.lane.b32.xlu0 %v4730, 16
      %v4830 = vpop.permute.xlu0 %4829
      %4831 = vrot.lane.b32.xlu0 %v4731, 16
      %v4832 = vpop.permute.xlu0 %4831
      %4833 = vrot.lane.b32.xlu0 %v4732, 16
      %v4834 = vpop.permute.xlu0 %4833
      %4835 = vrot.lane.b32.xlu0 %v4733, 16
      %v4836 = vpop.permute.xlu0 %4835
      %4837 = vrot.lane.b32.xlu0 %v4734, 16
      %v4838 = vpop.permute.xlu0 %4837
      %4855 = vrot.lane.b32.xlu0 %v4735, 24
      %v4856 = vpop.permute.xlu0 %4855
      %4857 = vrot.lane.b32.xlu0 %v4736, 24
      %v4858 = vpop.permute.xlu0 %4857
      %4859 = vrot.lane.b32.xlu0 %v4737, 24
      %v4860 = vpop.permute.xlu0 %4859
      %4861 = vrot.lane.b32.xlu0 %v4738, 24
      %v4862 = vpop.permute.xlu0 %4861
      %4863 = vrot.lane.b32.xlu0 %v4739, 24
      %v4864 = vpop.permute.xlu0 %4863
      %4865 = vrot.lane.b32.xlu0 %v4740, 24
      %v4866 = vpop.permute.xlu0 %4865
      %4867 = vrot.lane.b32.xlu0 %v4741, 24
      %v4868 = vpop.permute.xlu0 %4867
      %4869 = vrot.lane.b32.xlu0 %v4742, 24
      %v4870 = vpop.permute.xlu0 %4869
      %4887 = vrot.lane.b32.xlu0 %v4743, 32
      %v4888 = vpop.permute.xlu0 %4887
      %4889 = vrot.lane.b32.xlu0 %v4744, 32
      %v4890 = vpop.permute.xlu0 %4889
      %4891 = vrot.lane.b32.xlu0 %v4745, 32
      %v4892 = vpop.permute.xlu0 %4891
      %4893 = vrot.lane.b32.xlu0 %v4746, 32
      %v4894 = vpop.permute.xlu0 %4893
      %4895 = vrot.lane.b32.xlu0 %v4747, 32
      %v4896 = vpop.permute.xlu0 %4895
      %4897 = vrot.lane.b32.xlu0 %v4748, 32
      %v4898 = vpop.permute.xlu0 %4897
      %4899 = vrot.lane.b32.xlu0 %v4749, 32
      %v4900 = vpop.permute.xlu0 %4899
      %4901 = vrot.lane.b32.xlu0 %v4750, 32
      %v4902 = vpop.permute.xlu0 %4901
      %4919 = vrot.lane.b32.xlu0 %v4751, 40
      %v4920 = vpop.permute.xlu0 %4919
      %4921 = vrot.lane.b32.xlu0 %v4752, 40
      %v4922 = vpop.permute.xlu0 %4921
      %4923 = vrot.lane.b32.xlu0 %v4753, 40
      %v4924 = vpop.permute.xlu0 %4923
      %4925 = vrot.lane.b32.xlu0 %v4754, 40
      %v4926 = vpop.permute.xlu0 %4925
      %4927 = vrot.lane.b32.xlu0 %v4755, 40
      %v4928 = vpop.permute.xlu0 %4927
      %4929 = vrot.lane.b32.xlu0 %v4756, 40
      %v4930 = vpop.permute.xlu0 %4929
      %4931 = vrot.lane.b32.xlu0 %v4757, 40
      %v4932 = vpop.permute.xlu0 %4931
      %4933 = vrot.lane.b32.xlu0 %v4758, 40
      %v4934 = vpop.permute.xlu0 %4933
      %4951 = vrot.lane.b32.xlu0 %v4759, 48
      %v4952 = vpop.permute.xlu0 %4951
      %4953 = vrot.lane.b32.xlu0 %v4760, 48
      %v4954 = vpop.permute.xlu0 %4953
      %4955 = vrot.lane.b32.xlu0 %v4761, 48
      %v4956 = vpop.permute.xlu0 %4955
      %4957 = vrot.lane.b32.xlu0 %v4762, 48
      %v4958 = vpop.permute.xlu0 %4957
      %4959 = vrot.lane.b32.xlu0 %v4763, 48
      %v4960 = vpop.permute.xlu0 %4959
      %4961 = vrot.lane.b32.xlu0 %v4764, 48
      %v4962 = vpop.permute.xlu0 %4961
      %4963 = vrot.lane.b32.xlu0 %v4765, 48
      %v4964 = vpop.permute.xlu0 %4963
      %4965 = vrot.lane.b32.xlu0 %v4766, 48
      %v4966 = vpop.permute.xlu0 %4965
      %4983 = vrot.lane.b32.xlu0 %v4767, 56
      %v4984 = vpop.permute.xlu0 %4983
      %4985 = vrot.lane.b32.xlu0 %v4768, 56
      %v4986 = vpop.permute.xlu0 %4985
      %4987 = vrot.lane.b32.xlu0 %v4769, 56
      %v4988 = vpop.permute.xlu0 %4987
      %4989 = vrot.lane.b32.xlu0 %v4770, 56
      %v4990 = vpop.permute.xlu0 %4989
      %4991 = vrot.lane.b32.xlu0 %v4771, 56
      %v4992 = vpop.permute.xlu0 %4991
      %4993 = vrot.lane.b32.xlu0 %v4772, 56
      %v4994 = vpop.permute.xlu0 %4993
      %4995 = vrot.lane.b32.xlu0 %v4773, 56
      %v4996 = vpop.permute.xlu0 %4995
      %4997 = vrot.lane.b32.xlu0 %v4774, 56
      %v4998 = vpop.permute.xlu0 %4997
      %5015 = vrot.lane.b32.xlu0 %v4775, 64
      %v5016 = vpop.permute.xlu0 %5015
      %5017 = vrot.lane.b32.xlu0 %v4776, 64
      %v5018 = vpop.permute.xlu0 %5017
      %5019 = vrot.lane.b32.xlu0 %v4777, 64
      %v5020 = vpop.permute.xlu0 %5019
      %5021 = vrot.lane.b32.xlu0 %v4778, 64
      %v5022 = vpop.permute.xlu0 %5021
      %5023 = vrot.lane.b32.xlu0 %v4779, 64
      %v5024 = vpop.permute.xlu0 %5023
      %5025 = vrot.lane.b32.xlu0 %v4780, 64
      %v5026 = vpop.permute.xlu0 %5025
      %5027 = vrot.lane.b32.xlu0 %v4781, 64
      %v5028 = vpop.permute.xlu0 %5027
      %5029 = vrot.lane.b32.xlu0 %v4782, 64
      %v5030 = vpop.permute.xlu0 %5029
      %v5039 = vsel %vm226, %v4711, %v4792
      %v5040 = vsel %vm226, %v4712, %v4794
      %v5041 = vsel %vm226, %v4713, %v4796
      %v5042 = vsel %vm226, %v4714, %v4798
      %v5043 = vsel %vm226, %v4715, %v4800
      %v5044 = vsel %vm226, %v4716, %v4802
      %v5045 = vsel %vm226, %v4717, %v4804
      %v5046 = vsel %vm226, %v4718, %v4806
      %v5047 = vsel %vm1174, %v5039, %v4824
      %v5048 = vsel %vm1174, %v5040, %v4826
      %v5049 = vsel %vm1174, %v5041, %v4828
      %v5050 = vsel %vm1174, %v5042, %v4830
      %v5051 = vsel %vm1174, %v5043, %v4832
      %v5052 = vsel %vm1174, %v5044, %v4834
      %v5053 = vsel %vm1174, %v5045, %v4836
      %v5054 = vsel %vm1174, %v5046, %v4838
      %v5055 = vsel %vm1208, %v5047, %v4856
      %v5056 = vsel %vm1208, %v5048, %v4858
      %v5057 = vsel %vm1208, %v5049, %v4860
      %v5058 = vsel %vm1208, %v5050, %v4862
      %v5059 = vsel %vm1208, %v5051, %v4864
      %v5060 = vsel %vm1208, %v5052, %v4866
      %v5061 = vsel %vm1208, %v5053, %v4868
      %v5062 = vsel %vm1208, %v5054, %v4870
      %v5063 = vsel %vm1242, %v5055, %v4888
      %v5064 = vsel %vm1242, %v5056, %v4890
      %v5065 = vsel %vm1242, %v5057, %v4892
      %v5066 = vsel %vm1242, %v5058, %v4894
      %v5067 = vsel %vm1242, %v5059, %v4896
      %v5068 = vsel %vm1242, %v5060, %v4898
      %v5069 = vsel %vm1242, %v5061, %v4900
      %v5070 = vsel %vm1242, %v5062, %v4902
      %vm5071 = vcmask 326656
      %v5072 = vsel %vm5071, %v5063, %v4920
      %v5073 = vsel %vm5071, %v5064, %v4922
      %v5074 = vsel %vm5071, %v5065, %v4924
      %v5075 = vsel %vm5071, %v5066, %v4926
      %v5076 = vsel %vm5071, %v5067, %v4928
      %v5077 = vsel %vm5071, %v5068, %v4930
      %v5078 = vsel %vm5071, %v5069, %v4932
      %v5079 = vsel %vm5071, %v5070, %v4934
      %vm5080 = vcmask 392192
      %v5081 = vsel %vm5080, %v5072, %v4952
      %v5082 = vsel %vm5080, %v5073, %v4954
      %v5083 = vsel %vm5080, %v5074, %v4956
      %v5084 = vsel %vm5080, %v5075, %v4958
      %v5085 = vsel %vm5080, %v5076, %v4960
      %v5086 = vsel %vm5080, %v5077, %v4962
      %v5087 = vsel %vm5080, %v5078, %v4964
      %v5088 = vsel %vm5080, %v5079, %v4966
      %vm5089 = vcmask 457728
      %v5090 = vsel %vm5089, %v5081, %v4984
      %v5091 = vsel %vm5089, %v5082, %v4986
      %v5092 = vsel %vm5089, %v5083, %v4988
      %v5093 = vsel %vm5089, %v5084, %v4990
      %v5094 = vsel %vm5089, %v5085, %v4992
      %v5095 = vsel %vm5089, %v5086, %v4994
      %v5096 = vsel %vm5089, %v5087, %v4996
      %v5097 = vsel %vm5089, %v5088, %v4998
      %vm5098 = vcmask 523264
      %v5099 = vsel %vm5098, %v5090, %v5016
      %v5100 = vsel %vm5098, %v5091, %v5018
      %v5101 = vsel %vm5098, %v5092, %v5020
      %v5102 = vsel %vm5098, %v5093, %v5022
      %v5103 = vsel %vm5098, %v5094, %v5024
      %v5104 = vsel %vm5098, %v5095, %v5026
      %v5105 = vsel %vm5098, %v5096, %v5028
      %v5106 = vsel %vm5098, %v5097, %v5030
      %v5107 = vpack.c.bf16 %v5100, %v5099
      %v5108 = vpack.c.bf16 %v5102, %v5101
      %v5109 = vpack.c.bf16 %v5104, %v5103
      %v5110 = vpack.c.bf16 %v5106, %v5105
      %v5112 = vlaneseq
      %v5113 = vshrl.u32 %v5112, 7
      %v5114 = vsub.s32 0, %v5113
      %v5115 = vrot.slane %v283, %v5114
      %v5126 = vunpack.c.l.b16 %v289
      %v5127 = vunpack.c.l.b16 %v290
      %v5128 = vunpack.c.l.b16 %v291
      %v5129 = vunpack.c.l.b16 %v292
      %v5130 = vunpack.c.l.b16 %v293
      %v5131 = vunpack.c.l.b16 %v294
      %v5132 = vunpack.c.l.b16 %v295
      %v5133 = vunpack.c.l.b16 %v296
      %v5134 = vunpack.c.l.b16 %v297
      %v5135 = vpack.c.b16 %v5127, %v5126
      %v5136 = vpack.c.b16 %v5129, %v5128
      %v5137 = vpack.c.b16 %v5131, %v5130
      %v5138 = vpack.c.b16 %v5133, %v5132
      %v5139 = vpack.c.b16 %v5134, %v5134
      %vm5144 = vcmask 588800
      %v5146 = vsel %vm5144, %v5107, 0
      %v5149 = vsel %vm5144, %v5108, 0
      %v5152 = vsel %vm5144, %v5109, 0
      %v5155 = vsel %vm5144, %v5110, 0
      %vm5157 = vcmask 1043456
      %v5159 = vsel %vm5157, %v5139, 0
      %5161 = vmatprep.subr.bf16.mxu0 0
      %5162 = vmatpush1.bf16.msra.mxu0 %v5135
      %5163 = vmatprep.subr.bf16.mxu0 0
      %5164 = vmatpush1.bf16.msra.mxu0 %v5136
      %5165 = vmatprep.subr.bf16.mxu0 0
      %5166 = vmatpush1.bf16.msra.mxu0 %v5137
      %5167 = vmatprep.subr.bf16.mxu0 0
      %5168 = vmatpush1.bf16.msra.mxu0 %v5138
      %5169 = vmatprep.subr.bf16.mxu0 0
      %5170 = vmatpush1.bf16.msra.mxu0 %v5159
      %5171 = vmatprep.subr.bf16.mxu0 0
      %5172 = vmatpush1.bf16.msra.mxu0 0
      %5173 = vmatprep.subr.bf16.mxu0 0
      %5174 = vmatpush1.bf16.msra.mxu0 0
      %5175 = vmatprep.subr.bf16.mxu0 0
      %5176 = vmatpush1.bf16.msra.mxu0 0
      %5177 = vmatprep.subr.bf16.mxu0 0
      %5178 = vmatpush1.bf16.msra.mxu0 0
      %5179 = vmatprep.subr.bf16.mxu0 0
      %5180 = vmatpush1.bf16.msra.mxu0 0
      %5181 = vmatprep.subr.bf16.mxu0 0
      %5182 = vmatpush1.bf16.msra.mxu0 0
      %5183 = vmatprep.subr.bf16.mxu0 0
      %5184 = vmatpush1.bf16.msra.mxu0 0
      %5185 = vmatprep.subr.bf16.mxu0 0
      %5186 = vmatpush1.bf16.msra.mxu0 0
      %5187 = vmatprep.subr.bf16.mxu0 0
      %5188 = vmatpush1.bf16.msra.mxu0 0
      %5189 = vmatprep.subr.bf16.mxu0 0
      %5190 = vmatpush1.bf16.msra.mxu0 0
      %5191 = vmatprep.subr.bf16.mxu0 0
      %5192 = vmatpush1.bf16.msra.mxu0 0
      %5193 = vmatprep.mubr.bf16.mxu0 0
      %5194 = vmatmul.mubr.bf16.gmra.mrb[0].mxu0 %v5146
      %v5195 = vpop.f32.mrb[0].mxu0
      %v5196 = vadd.f32 %v5115, %v5195
      %v5197 = vpop.f32.mrb[0].mxu0
      %v5198 = vpop.f32.mrb[0].mxu0
      %v5199 = vadd.f32 %v5115, %v5198
      %v5200 = vpop.f32.mrb[0].mxu0
      %5201 = vmatprep.mubr.bf16.mxu0 0
      %5202 = vmatmul.mubr.bf16.gmra.mrb[0].mxu0 %v5149
      %v5203 = vpop.f32.mrb[0].mxu0
      %v5204 = vadd.f32 %v5115, %v5203
      %v5205 = vpop.f32.mrb[0].mxu0
      %v5206 = vpop.f32.mrb[0].mxu0
      %v5207 = vadd.f32 %v5115, %v5206
      %v5208 = vpop.f32.mrb[0].mxu0
      %5209 = vmatprep.mubr.bf16.mxu0 0
      %5210 = vmatmul.mubr.bf16.gmra.mrb[0].mxu0 %v5152
      %v5211 = vpop.f32.mrb[0].mxu0
      %v5212 = vadd.f32 %v5115, %v5211
      %v5213 = vpop.f32.mrb[0].mxu0
      %v5214 = vpop.f32.mrb[0].mxu0
      %v5215 = vadd.f32 %v5115, %v5214
      %v5216 = vpop.f32.mrb[0].mxu0
      %5217 = vmatprep.mubr.bf16.mxu0 0
      %5218 = vmatmul.mubr.bf16.gmra.mrb[0].mxu0 %v5155
      %v5219 = vpop.f32.mrb[0].mxu0
      %v5220 = vadd.f32 %v5115, %v5219
      %v5221 = vpop.f32.mrb[0].mxu0
      %v5222 = vpop.f32.mrb[0].mxu0
      %v5223 = vadd.f32 %v5115, %v5222
      %v5224 = vpop.f32.mrb[0].mxu0
      %5225 = vdwg.mxu0
      %v5226 = vmax.f32 %v5196, 0.0
      %v5227 = vmax.f32 %v5199, 0.0
      %v5228 = vmax.f32 %v5204, 0.0
      %v5229 = vmax.f32 %v5207, 0.0
      %v5230 = vmax.f32 %v5212, 0.0
      %v5231 = vmax.f32 %v5215, 0.0
      %v5232 = vmax.f32 %v5220, 0.0
      %v5233 = vmax.f32 %v5223, 0.0
      %5234 = vst.msk [vmem:[%s224] sm:$0xff] %vm226, %v5226
      %5235 = vst.msk [vmem:[%s224 + $0x8] sm:$0xff] %vm226, %v5227
      %5236 = vst.msk [vmem:[%s224 + $0x10] sm:$0xff] %vm226, %v5228
      %5237 = vst.msk [vmem:[%s224 + $0x18] sm:$0xff] %vm226, %v5229
      %5238 = vst.msk [vmem:[%s224 + $0x20] sm:$0xff] %vm226, %v5230
      %5239 = vst.msk [vmem:[%s224 + $0x28] sm:$0xff] %vm226, %v5231
      %5240 = vst.msk [vmem:[%s224 + $0x30] sm:$0xff] %vm226, %v5232
      %5241 = vst.msk [vmem:[%s224 + $0x38] sm:$0xff] %vm226, %v5233
      %p5242 = scmp.lt.s32.totalorder %s16, 1
      %s5243 = scalar_select %p5242, %s16, 1
      %s5244 = smul.addr %s5243, 8
      %s5245 = smul.addr %s5244, 8
      %s5246 = scalar_lea.vmem %s5, %s5245
      // Predicated region
      $region41: #{initial_block_forward.1} parent=39 // pred_check
        %p5247 = pneg %p144
      $region42: #{initial_block_forward.1} parent=39 // pred_check_branch
        %5249 = sbr.rel (%p5247) target = $region44
      $region43: #{initial_block_forward.1} parent=39 // pred_region
        _
      $region44: #{initial_block_forward.1} parent=39 // pred_fallthru
        _
    $region40: #{initial_block_forward.1} parent=5 // pred_fallthru
      _
    %p5250 = scmp.le.s32.totalorder 2, %s11
    // Predicated region
    $region45: #{initial_block_forward.1} parent=5 // pred_check
      %p5251 = pneg %p5250
    $region46: #{initial_block_forward.1} parent=5 // pred_check_branch
      %5253 = sbr.rel (%p5251) target = $region48
    $region47: #{initial_block_forward.1} parent=5 // pred_region
      %s5254 = ssub.s32 %s11, 2
      // Predicated region
      $region49: #{initial_block_forward.1} parent=47 // pred_check
        %p5255 = pneg %p150
      $region50: #{initial_block_forward.1} parent=47 // pred_check_branch
        %5257 = sbr.rel (%p5255) target = $region52
      $region51: #{initial_block_forward.1} parent=47 // pred_region
        %p5258 = scmp.lt.s32.totalorder %s17, 1
        %s5259 = scalar_select %p5258, %s17, 1
        %s5260 = smul.addr %s5259, 8
        %s5261 = smul.addr %s5260, 8
        %s5262 = scalar_lea.vmem %s5, %s5261
      $region52: #{initial_block_forward.1} parent=47 // pred_fallthru
        _
    $region48: #{initial_block_forward.1} parent=5 // pred_fallthru
      _
  $region6: #{initial_block_forward.1} parent=0 // loop_footer
    %s15 = sadd.s32 1, %s11
  $region7: #{initial_block_forward.1} parent=0 // loop_footer_branch
    %10 = sbr.rel target = $region3
  $region8: #{initial_block_forward.1} parent=0 // loop_exit
    _

</llo_original>
